<compile_context>
chip_gen: v7x
topology: tpu7x:2x2x1
jax: 0.10.0
libtpu: 0.0.40
codegen_flags: <defaults>
</compile_context>

<pallas_src>
import math

import jax
import jax.numpy as jnp
import numpy as np
from jax import lax
from jax.experimental import pallas as pl
from jax.experimental.pallas import tpu as pltpu

_HALO = 8     # conv halo rows on each side of the xin scratch (>= d_conv-1, sublane aligned)
_UNROLL = 8   # manual unroll factor of the selective-scan inner loop


# ----------------------------- math helpers --------------------------------------

def _sigmoid(x):                     # used by the pure-JAX reference
    return 1.0 / (1.0 + jnp.exp(-x))


def _softplus(x):                    # matches F.softplus(beta=1, threshold=20)
    return jnp.where(x > 20.0, x, jnp.log(1.0 + jnp.exp(jnp.minimum(x, 20.0))))


def _silu_fast(x):                   # kernel-side: exp + approx recip both on the EUP
    return x * pl.reciprocal(1.0 + jnp.exp(-x), approx=True)


# ----------------------------- Pallas kernel -------------------------------------

def _bimamba_kernel(x_ref, w_in_ref, w_out_ref, conv_w_ref, conv_b_ref,
                    w_xproj_ref, w_dtp_ref, dtp_b_ref, A_log_ref, D_ref,
                    out_ref,
                    xin_ref, zsig_ref, yacc_ref, dA_ref, dBx_ref):
    d = pl.program_id(1)                       # 0 = forward, 1 = reverse direction
    L = x_ref.shape[1]
    d_conv = conv_w_ref.shape[1]
    d_inner = conv_w_ref.shape[2]
    d_state = A_log_ref.shape[1]
    dt_rank = w_dtp_ref.shape[1]
    LC = dA_ref.shape[0]                       # scan chunk length
    n_chunks = L // LC

    def ssm_direction(causal):
        """One Mamba direction in un-flipped coordinates (static `causal` flag).
        Accumulates the pre-gating, pre-out_proj branch output into yacc_ref."""
        # ---- depthwise conv: static offset slices into the zero-halo'd xin ------
        cw = conv_w_ref[0]                                         # (d_conv, d_inner)
        xc = jnp.zeros((L, d_inner), jnp.float32) + conv_b_ref[0]
        for k in range(d_conv):                                    # static, d_conv = 4
            s = d_conv - 1 - k
            start = _HALO - s if causal else _HALO + s             # x[l-s] / x[l+s]
            xc = xc + cw[k:k + 1, :] * xin_ref[start:start + L, :]
        x_act = _silu_fast(xc)                                     # (L, d_inner)

        # ---- fused x_proj -> [B | C | dt_low]; low-rank dt_proj -----------------
        bcd = jnp.dot(x_act.astype(jnp.bfloat16), w_xproj_ref[0],
                      preferred_element_type=jnp.float32)          # (L, 2*ds+dtr)
        Bm = bcd[:, :d_state]
        Cm = bcd[:, d_state:2 * d_state]
        dt_low = bcd[:, 2 * d_state:]
        w_dtp = w_dtp_ref[0]                                       # (dt_rank, d_inner) f32
        if dt_rank <= 8:
            # tiny-K projection as VPU broadcast-FMAs (skip a nearly-empty MXU pass)
            dt_pre = jnp.zeros((L, d_inner), jnp.float32) + dtp_b_ref[0]
            for r in range(dt_rank):
                dt_pre = dt_pre + dt_low[:, r:r + 1] * w_dtp[r:r + 1, :]
        else:
            dt_pre = jnp.dot(dt_low, w_dtp,
                             preferred_element_type=jnp.float32) + dtp_b_ref[0]
        dt = _softplus(dt_pre)                                     # f32: feeds exp(dt*A)

        A = -jnp.exp(A_log_ref[0])                                 # (d_state, d_inner)
        dtx = dt * x_act
        xD = x_act * D_ref[0]                                      # skip-connection term

        # ---- chunked selective scan; h carried across chunks in vregs -----------
        base = 0 if causal else LC - 1
        step = 1 if causal else -1

        def scan_body(i, h):
            t0 = base + step * (i * _UNROLL)
            for j in range(_UNROLL):                               # manual unroll (ILP)
                t = t0 + step * j
                h = dA_ref[t] * h + dBx_ref[t]
                dBx_ref[t] = h                                     # hs write-back (full tiles)
            return h

        n_full = LC // _UNROLL
        rem = LC % _UNROLL
        h = jnp.zeros((d_state, d_inner), jnp.float32)
        chunk_order = range(n_chunks) if causal else range(n_chunks - 1, -1, -1)
        for ci in chunk_order:                                     # static chunk loop
            lo = ci * LC
            dA_ref[...] = jnp.exp(dt[lo:lo + LC, None, :] * A[None, :, :])
            dBx_ref[...] = dtx[lo:lo + LC, None, :] * Bm[lo:lo + LC, :, None]
            if n_full > 0:
                h = lax.fori_loop(0, n_full, scan_body, h)
            for j in range(rem):                                   # static remainder
                t = base + step * (n_full * _UNROLL + j)
                h = dA_ref[t] * h + dBx_ref[t]
                dBx_ref[t] = h
            # deferred C contraction: one broadcast-mul + sublane reduce per chunk
            y_c = jnp.sum(dBx_ref[...] * Cm[lo:lo + LC, :, None], axis=1)
            y_c = y_c + xD[lo:lo + LC, :]
            if causal:
                yacc_ref[lo:lo + LC, :] = y_c                      # first direction: init
            else:
                yacc_ref[lo:lo + LC, :] = yacc_ref[lo:lo + LC, :] + y_c

    @pl.when(d == 0)
    def _():
        # tied in_proj -> x | z : computed ONCE per batch element (shared weights)
        xz = jnp.dot(x_ref[0], w_in_ref[...],
                     preferred_element_type=jnp.float32)           # (L, 2*d_inner)
        xin_ref[0:_HALO, :] = jnp.zeros((_HALO, d_inner), jnp.float32)
        xin_ref[_HALO + L:, :] = jnp.zeros((_HALO, d_inner), jnp.float32)
        xin_ref[_HALO:_HALO + L, :] = xz[:, :d_inner]
        zsig_ref[...] = _silu_fast(xz[:, d_inner:])
        ssm_direction(causal=True)

    @pl.when(d == 1)
    def _():
        ssm_direction(causal=False)
        # tied out_proj applied ONCE to (y_fwd + y_rev) * silu(z); single write.
        y = yacc_ref[...] * zsig_ref[...]
        out_ref[0] = jnp.dot(y.astype(jnp.bfloat16), w_out_ref[...],
                             preferred_element_type=jnp.float32).astype(out_ref.dtype)


# ----------------------------- wrapper: weight prep + pallas_call ----------------

def _prep_params(shared, fwd_p, rev_p):
    """Stack per-direction params, fuse + pre-transpose projections, cast to bf16."""
    w_in_x, w_in_z, w_out = shared

    w_in = jnp.concatenate([w_in_x, w_in_z], axis=0).T.astype(jnp.bfloat16)  # (d_model, 2*d_inner)
    w_out_t = w_out.T.astype(jnp.bfloat16)                                   # (d_inner, d_model)

    def stack(i):
        return jnp.stack([fwd_p[i], rev_p[i]], axis=0)

    conv_w = stack(0)                                                 # (2, d_conv, d_inner)
    conv_b = stack(1)                                                 # (2, 1, d_inner)
    w_xproj = jnp.concatenate([stack(3), stack(4), stack(2)], axis=1) # rows [B | C | dt_low]
    w_xproj = jnp.transpose(w_xproj, (0, 2, 1)).astype(jnp.bfloat16)  # (2, d_inner, 2*ds+dtr)
    w_dtp = jnp.transpose(stack(5), (0, 2, 1))                        # (2, dt_rank, d_inner) f32
    dtp_b = stack(6)                                                  # (2, 1, d_inner)
    A_log_t = jnp.transpose(stack(7), (0, 2, 1))                      # (2, d_state, d_inner)
    Dp = stack(8)                                                     # (2, 1, d_inner)
    return w_in, w_out_t, conv_w, conv_b, w_xproj, w_dtp, dtp_b, A_log_t, Dp


def bimamba_forward(x, shared, fwd_p, rev_p, *, l_chunk=None):
    """BiMambaWrapper.forward: bidirectional Mamba1, strategy='add', weight-tied proj."""
    B, L, d_model = x.shape
    (w_in, w_out, conv_w, conv_b, w_xproj,
     w_dtp, dtp_b, A_log_t, Dp) = _prep_params(shared, fwd_p, rev_p)
    d_conv = conv_w.shape[1]
    d_inner = conv_w.shape[2]
    d_state = A_log_t.shape[1]
    assert d_conv - 1 <= _HALO

    # ---- generation-aware VMEM budget (v7x: 64 MiB physical, v5e/v6e: 128 MiB) ----
    try:
        vmem_cap = pltpu.get_tpu_info().vmem_capacity_bytes
    except Exception:
        vmem_cap = 64 * 1024 * 1024
    vmem_limit = int(max(32 * 2**20, min(vmem_cap - 8 * 2**20, 100 * 2**20)))

    # ---- pick L-chunk: two f32 (l_chunk, d_state, d_inner) scan buffers ----------
    if l_chunk is None:
        per_row = 2 * d_state * d_inner * 4
        l_chunk = max(_UNROLL, (vmem_limit // 3) // per_row)
        if l_chunk >= 256:
            l_chunk = (l_chunk // 256) * 256      # dense MXU M tiles on v6e/v7x
    l_chunk = max(1, min(int(l_chunk), L))
    while L % l_chunk != 0:                       # TODO(synk): ragged last chunk
        l_chunk -= 1

    def shared_spec(a):
        n = a.ndim
        return pl.BlockSpec(a.shape, lambda b, d, _n=n: (0,) * _n)

    def dir_spec(a):
        n = a.ndim
        return pl.BlockSpec((1,) + a.shape[1:],
                            lambda b, d, _n=n: (d,) + (0,) * (_n - 1))

    grid_spec = pltpu.PrefetchScalarGridSpec(
        num_scalar_prefetch=0,
        grid=(B, 2),                  # direction innermost: scratch carries fwd -> rev
        in_specs=[
            pl.BlockSpec((1, L, d_model), lambda b, d: (b, 0, 0)),    # hidden states
            shared_spec(w_in), shared_spec(w_out),
            dir_spec(conv_w), dir_spec(conv_b), dir_spec(w_xproj),
            dir_spec(w_dtp), dir_spec(dtp_b), dir_spec(A_log_t), dir_spec(Dp),
        ],
        out_specs=pl.BlockSpec((1, L, d_model), lambda b, d: (b, 0, 0)),
        scratch_shapes=[
            pltpu.VMEM((L + 2 * _HALO, d_inner), jnp.float32),    # xin w/ zero halo (shared)
            pltpu.VMEM((L, d_inner), jnp.float32),                # silu(z) (shared)
            pltpu.VMEM((L, d_inner), jnp.float32),                # y accumulator (pre out_proj)
            pltpu.VMEM((l_chunk, d_state, d_inner), jnp.float32), # exp(dt*A) chunk
            pltpu.VMEM((l_chunk, d_state, d_inner), jnp.float32), # dt*B*u chunk (reused as h_t)
        ],
    )
    # TODO(synk): at batch==1 on v7x, add a d_inner-chunk "parallel" grid axis to feed
    #             the second TensorCore (direction must stay "arbitrary": it carries
    #             scratch state across the two steps).
    return pl.pallas_call(
        _bimamba_kernel,
        out_shape=jax.ShapeDtypeStruct((B, L, d_model), jnp.float32),
        grid_spec=grid_spec,
        compiler_params=pltpu.CompilerParams(
            dimension_semantics=("parallel", "arbitrary"),
            vmem_limit_bytes=vmem_limit,
        ),
    )(x.astype(jnp.bfloat16), w_in, w_out, conv_w, conv_b, w_xproj, w_dtp,
      dtp_b, A_log_t, Dp)


# ----------------------------- pure-JAX reference (correctness check) ------------

def mamba_ref(x, shared, p):
    w_in_x, w_in_z, w_out = shared
    conv_w, conv_b, w_dt, w_B, w_C, dtp_w, dtp_b, A_log, Dp = p
    B, L, _ = x.shape
    d_inner = w_in_x.shape[0]
    d_state = A_log.shape[1]
    d_conv = conv_w.shape[0]

    xin = jnp.einsum('bld,ed->ble', x, w_in_x)
    z = jnp.einsum('bld,ed->ble', x, w_in_z)

    xpad = jnp.pad(xin, ((0, 0), (d_conv - 1, 0), (0, 0)))
    xc = sum(conv_w[k][None, None, :] * xpad[:, k:k + L, :] for k in range(d_conv)) + conv_b
    x_act = xc * _sigmoid(xc)

    dt_in = jnp.einsum('ble,re->blr', x_act, w_dt)
    Bm = jnp.einsum('ble,se->bls', x_act, w_B)
    Cm = jnp.einsum('ble,se->bls', x_act, w_C)
    dt = _softplus(jnp.einsum('blr,er->ble', dt_in, dtp_w) + dtp_b)

    A = -jnp.exp(A_log)
    deltaA = jnp.exp(dt[..., None] * A)                     # (B, L, d_inner, d_state)
    dBx = (dt * x_act)[..., None] * Bm[:, :, None, :]

    def step(h, inp):
        dA_l, dBx_l, c_l = inp
        h = dA_l * h + dBx_l
        return h, jnp.sum(h * c_l[None, :], axis=-1)

    def scan_one(dA_b, dBx_b, C_b):
        _, ys = lax.scan(step, jnp.zeros((d_inner, d_state), jnp.float32), (dA_b, dBx_b, C_b))
        return ys

    ys = jax.vmap(scan_one)(deltaA, dBx, Cm)
    y = ys + x_act * Dp
    y = y * (z * _sigmoid(z))
    return jnp.einsum('ble,de->bld', y, w_out)


def bimamba_ref(x, shared, fwd_p, rev_p):
    out = mamba_ref(x, shared, fwd_p)
    out_rev = jnp.flip(mamba_ref(jnp.flip(x, 1), shared, rev_p), 1)
    return out + out_rev


# ----------------------------- deterministic parameter init ----------------------

def init_params(key, d_model, d_inner, d_state, d_conv, dt_rank):
    keys = jax.random.split(key, 4)

    def nrm(k, shape, scale):
        return jax.random.normal(k, shape, jnp.float32) * scale

    in_proj_w = nrm(keys[0], (2 * d_inner, d_model), 0.05)    # shared (weight-tied)
    out_proj_w = nrm(keys[1], (d_model, d_inner), 0.05)       # shared (weight-tied)
    shared = (in_proj_w[:d_inner], in_proj_w[d_inner:], out_proj_w)

    def direction(kbase):
        ks = jax.random.split(kbase, 7)
        conv_w = nrm(ks[0], (d_conv, d_inner), 0.3)
        conv_b = nrm(ks[1], (1, d_inner), 0.1)
        w_dt = nrm(ks[2], (dt_rank, d_inner), d_inner ** -0.5)
        w_B = nrm(ks[3], (d_state, d_inner), d_inner ** -0.5)
        w_C = nrm(ks[4], (d_state, d_inner), d_inner ** -0.5)
        dtp_w = nrm(ks[5], (d_inner, dt_rank), dt_rank ** -0.5)
        dt = jnp.exp(jax.random.uniform(ks[6], (1, d_inner), jnp.float32)
                     * (math.log(0.1) - math.log(0.001)) + math.log(0.001))
        dtp_b = dt + jnp.log(-jnp.expm1(-dt))                  # inverse softplus init
        A_log = jnp.log(jnp.broadcast_to(
            jnp.arange(1, d_state + 1, dtype=jnp.float32), (d_inner, d_state)))
        Dp = jnp.ones((1, d_inner), jnp.float32)
        return (conv_w, conv_b, w_dt, w_B, w_C, dtp_w, dtp_b, A_log, Dp)

    return shared, direction(keys[2]), direction(keys[3])


# ----------------------------- main ----------------------------------------------

if __name__ == "__main__":
    # Small, tile-friendly config (lane-dense d_inner=128; L=16 with l_chunk=8 so
    # the chunked scan path and the cross-chunk h carry are both exercised).
    d_model = 64
    expand = 2
    d_inner = expand * d_model          # 128
    d_state = 16
    d_conv = 4
    dt_rank = math.ceil(d_model / 16)   # 4
    B, L = 2, 16

    key = jax.random.PRNGKey(0)
    k_x, k_p = jax.random.split(key)
    hidden_states = jax.random.normal(k_x, (B, L, d_model), jnp.float32)
    shared, fwd_p, rev_p = init_params(k_p, d_model, d_inner, d_state, d_conv, dt_rank)

    out = bimamba_forward(hidden_states, shared, fwd_p, rev_p, l_chunk=8)
    out = jax.block_until_ready(out)

    ref = bimamba_ref(hidden_states, shared, fwd_p, rev_p)
    np.testing.assert_allclose(np.asarray(out), np.asarray(ref), rtol=5e-2, atol=1e-2)

    print("KERNEL_OK")
</pallas_src>

<mosaic_0001>
module attributes {stable_mosaic.version = 11 : i64} {
  func.func @_bimamba_kernel(%arg0: i32, %arg1: i32, %arg2: memref<1x16x64xbf16, #tpu.memory_space<vmem>>, %arg3: memref<64x256xbf16, #tpu.memory_space<vmem>>, %arg4: memref<128x64xbf16, #tpu.memory_space<vmem>>, %arg5: memref<1x4x128xf32, #tpu.memory_space<vmem>>, %arg6: memref<1x1x128xf32, #tpu.memory_space<vmem>>, %arg7: memref<1x128x36xbf16, #tpu.memory_space<vmem>>, %arg8: memref<1x4x128xf32, #tpu.memory_space<vmem>>, %arg9: memref<1x1x128xf32, #tpu.memory_space<vmem>>, %arg10: memref<1x16x128xf32, #tpu.memory_space<vmem>>, %arg11: memref<1x1x128xf32, #tpu.memory_space<vmem>>, %arg12: memref<1x16x64xf32, #tpu.memory_space<vmem>>, %arg13: memref<32x128xf32, #tpu.memory_space<vmem>>, %arg14: memref<16x128xf32, #tpu.memory_space<vmem>>, %arg15: memref<16x128xf32, #tpu.memory_space<vmem>>, %arg16: memref<8x16x128xf32, #tpu.memory_space<vmem>>, %arg17: memref<8x16x128xf32, #tpu.memory_space<vmem>>) attributes {dimension_semantics = [#tpu.dimension_semantics<parallel>, #tpu.dimension_semantics<arbitrary>], iteration_bounds = array<i64: 2, 2>, scalar_prefetch = 0 : i64, scratch_operands = 5 : i64, tpu.core_type = #tpu.core_type<tc>, window_params = [{transform_indices = @transform_0, window_bounds = array<i64: 1, 16, 64>}, {pipeline_mode = #tpu.pipeline_mode<synchronous>, transform_indices = @transform_1, window_bounds = array<i64: 64, 256>}, {pipeline_mode = #tpu.pipeline_mode<synchronous>, transform_indices = @transform_2, window_bounds = array<i64: 128, 64>}, {transform_indices = @transform_3, window_bounds = array<i64: 1, 4, 128>}, {transform_indices = @transform_4, window_bounds = array<i64: 1, 1, 128>}, {transform_indices = @transform_5, window_bounds = array<i64: 1, 128, 36>}, {transform_indices = @transform_6, window_bounds = array<i64: 1, 4, 128>}, {transform_indices = @transform_7, window_bounds = array<i64: 1, 1, 128>}, {transform_indices = @transform_8, window_bounds = array<i64: 1, 16, 128>}, {transform_indices = @transform_9, window_bounds = array<i64: 1, 1, 128>}, {transform_indices = @transform_10, window_bounds = array<i64: 1, 16, 64>}]} {
    %c0_i32 = arith.constant 0 : i32
    %0 = arith.cmpi eq, %arg1, %c0_i32 : i32
    %1 = arith.extui %0 : i1 to i32
    %c0_i32_0 = arith.constant 0 : i32
    %2 = arith.cmpi ne, %1, %c0_i32_0 : i32
    scf.if %2 {
      %c0 = arith.constant 0 : index
      %c0_2 = arith.constant 0 : index
      %c0_3 = arith.constant 0 : index
      %6 = vector.load %arg2[%c0, %c0_2, %c0_3] : memref<1x16x64xbf16, #tpu.memory_space<vmem>>, vector<1x16x64xbf16>
      %7 = vector.shape_cast %6 : vector<1x16x64xbf16> to vector<16x64xbf16>
      %c0_4 = arith.constant 0 : index
      %c0_5 = arith.constant 0 : index
      %8 = vector.load %arg3[%c0_4, %c0_5] : memref<64x256xbf16, #tpu.memory_space<vmem>>, vector<64x256xbf16>
      %cst = arith.constant dense<0.000000e+00> : vector<16x256xf32>
      %9 = tpu.matmul %7, %8, %cst {dimension_numbers = #tpu.dot_dimension_numbers<[1], [0], [0], [1], [0, 0, 1, 1], [], []>} : vector<16x64xbf16>, vector<64x256xbf16>, vector<16x256xf32> -> vector<16x256xf32>
      %cst_6 = arith.constant 0.000000e+00 : f32
      %10 = vector.broadcast %cst_6 : f32 to vector<8x128xf32>
      %c0_7 = arith.constant 0 : index
      %c0_8 = arith.constant 0 : index
      %11 = vector.load %arg13[%c0_7, %c0_8] : memref<32x128xf32, #tpu.memory_space<vmem>>, vector<8x128xf32>
      tpu.vector_store %arg13[%c0_7, %c0_8], %10 {strides = array<i32>} : memref<32x128xf32, #tpu.memory_space<vmem>>, vector<8x128xf32>,
      %cst_9 = arith.constant 0.000000e+00 : f32
      %12 = vector.broadcast %cst_9 : f32 to vector<8x128xf32>
      %c24 = arith.constant 24 : index
      %c0_10 = arith.constant 0 : index
      %13 = vector.load %arg13[%c24, %c0_10] : memref<32x128xf32, #tpu.memory_space<vmem>>, vector<8x128xf32>
      tpu.vector_store %arg13[%c24, %c0_10], %12 {strides = array<i32>} : memref<32x128xf32, #tpu.memory_space<vmem>>, vector<8x128xf32>,
      %14 = vector.extract_strided_slice %9 {offsets = [0, 0], sizes = [16, 128], strides = [1, 1]} : vector<16x256xf32> to vector<16x128xf32>
      %c8 = arith.constant 8 : index
      %c0_11 = arith.constant 0 : index
      %15 = vector.load %arg13[%c8, %c0_11] : memref<32x128xf32, #tpu.memory_space<vmem>>, vector<16x128xf32>
      tpu.vector_store %arg13[%c8, %c0_11], %14 {strides = array<i32>} : memref<32x128xf32, #tpu.memory_space<vmem>>, vector<16x128xf32>,
      %16 = vector.extract_strided_slice %9 {offsets = [0, 128], sizes = [16, 128], strides = [1, 1]} : vector<16x256xf32> to vector<16x128xf32>
      %cst_12 = arith.constant 0.000000e+00 : f32
      %17 = vector.broadcast %cst_12 : f32 to vector<16x128xf32>
      %18 = arith.subf %17, %16 : vector<16x128xf32>
      %19 = math.exp %18 : vector<16x128xf32>
      %cst_13 = arith.constant 1.000000e+00 : f32
      %20 = vector.broadcast %cst_13 : f32 to vector<16x128xf32>
      %21 = arith.addf %20, %19 : vector<16x128xf32>
      %22 = tpu.reciprocal %21 {approx = true} : vector<16x128xf32> -> vector<16x128xf32>
      %23 = arith.mulf %16, %22 : vector<16x128xf32>
      %c0_14 = arith.constant 0 : index
      %c0_15 = arith.constant 0 : index
      %24 = vector.load %arg14[%c0_14, %c0_15] : memref<16x128xf32, #tpu.memory_space<vmem>>, vector<16x128xf32>
      tpu.vector_store %arg14[%c0_14, %c0_15], %23 {strides = array<i32>} : memref<16x128xf32, #tpu.memory_space<vmem>>, vector<16x128xf32>,
      %c0_16 = arith.constant 0 : index
      %c0_17 = arith.constant 0 : index
      %c0_18 = arith.constant 0 : index
      %25 = vector.load %arg5[%c0_16, %c0_17, %c0_18] : memref<1x4x128xf32, #tpu.memory_space<vmem>>, vector<1x4x128xf32>
      %26 = vector.shape_cast %25 : vector<1x4x128xf32> to vector<4x128xf32>
      %cst_19 = arith.constant 0.000000e+00 : f32
      %27 = vector.broadcast %cst_19 : f32 to vector<16x128xf32>
      %c0_20 = arith.constant 0 : index
      %c0_21 = arith.constant 0 : index
      %c0_22 = arith.constant 0 : index
      %28 = vector.load %arg6[%c0_20, %c0_21, %c0_22] : memref<1x1x128xf32, #tpu.memory_space<vmem>>, vector<1x1x128xf32>
      %29 = vector.shape_cast %28 : vector<1x1x128xf32> to vector<1x128xf32>
      %30 = vector.broadcast %29 : vector<1x128xf32> to vector<16x128xf32>
      %31 = arith.addf %27, %30 : vector<16x128xf32>
      %32 = vector.extract_strided_slice %26 {offsets = [0, 0], sizes = [1, 128], strides = [1, 1]} : vector<4x128xf32> to vector<1x128xf32>
      %c5 = arith.constant 5 : index
      %c0_23 = arith.constant 0 : index
      %33 = vector.load %arg13[%c5, %c0_23] : memref<32x128xf32, #tpu.memory_space<vmem>>, vector<16x128xf32>
      %34 = vector.broadcast %32 : vector<1x128xf32> to vector<16x128xf32>
      %35 = arith.mulf %34, %33 : vector<16x128xf32>
      %36 = arith.addf %31, %35 : vector<16x128xf32>
      %37 = vector.extract_strided_slice %26 {offsets = [1, 0], sizes = [1, 128], strides = [1, 1]} : vector<4x128xf32> to vector<1x128xf32>
      %c6 = arith.constant 6 : index
      %c0_24 = arith.constant 0 : index
      %38 = vector.load %arg13[%c6, %c0_24] : memref<32x128xf32, #tpu.memory_space<vmem>>, vector<16x128xf32>
      %39 = vector.broadcast %37 : vector<1x128xf32> to vector<16x128xf32>
      %40 = arith.mulf %39, %38 : vector<16x128xf32>
      %41 = arith.addf %36, %40 : vector<16x128xf32>
      %42 = vector.extract_strided_slice %26 {offsets = [2, 0], sizes = [1, 128], strides = [1, 1]} : vector<4x128xf32> to vector<1x128xf32>
      %c7 = arith.constant 7 : index
      %c0_25 = arith.constant 0 : index
      %43 = vector.load %arg13[%c7, %c0_25] : memref<32x128xf32, #tpu.memory_space<vmem>>, vector<16x128xf32>
      %44 = vector.broadcast %42 : vector<1x128xf32> to vector<16x128xf32>
      %45 = arith.mulf %44, %43 : vector<16x128xf32>
      %46 = arith.addf %41, %45 : vector<16x128xf32>
      %47 = vector.extract_strided_slice %26 {offsets = [3, 0], sizes = [1, 128], strides = [1, 1]} : vector<4x128xf32> to vector<1x128xf32>
      %c8_26 = arith.constant 8 : index
      %c0_27 = arith.constant 0 : index
      %48 = vector.load %arg13[%c8_26, %c0_27] : memref<32x128xf32, #tpu.memory_space<vmem>>, vector<16x128xf32>
      %49 = vector.broadcast %47 : vector<1x128xf32> to vector<16x128xf32>
      %50 = arith.mulf %49, %48 : vector<16x128xf32>
      %51 = arith.addf %46, %50 : vector<16x128xf32>
      %cst_28 = arith.constant 0.000000e+00 : f32
      %52 = vector.broadcast %cst_28 : f32 to vector<16x128xf32>
      %53 = arith.subf %52, %51 : vector<16x128xf32>
      %54 = math.exp %53 : vector<16x128xf32>
      %cst_29 = arith.constant 1.000000e+00 : f32
      %55 = vector.broadcast %cst_29 : f32 to vector<16x128xf32>
      %56 = arith.addf %55, %54 : vector<16x128xf32>
      %57 = tpu.reciprocal %56 {approx = true} : vector<16x128xf32> -> vector<16x128xf32>
      %58 = arith.mulf %51, %57 : vector<16x128xf32>
      %59 = arith.truncf %58 : vector<16x128xf32> to vector<16x128xbf16>
      %c0_30 = arith.constant 0 : index
      %c0_31 = arith.constant 0 : index
      %c0_32 = arith.constant 0 : index
      %60 = vector.load %arg7[%c0_30, %c0_31, %c0_32] : memref<1x128x36xbf16, #tpu.memory_space<vmem>>, vector<1x128x36xbf16>
      %61 = vector.shape_cast %60 : vector<1x128x36xbf16> to vector<128x36xbf16>
      %cst_33 = arith.constant dense<0.000000e+00> : vector<16x36xf32>
      %62 = tpu.matmul %59, %61, %cst_33 {dimension_numbers = #tpu.dot_dimension_numbers<[1], [0], [0], [1], [0, 0, 1, 1], [], []>} : vector<16x128xbf16>, vector<128x36xbf16>, vector<16x36xf32> -> vector<16x36xf32>
      %63 = vector.extract_strided_slice %62 {offsets = [0, 0], sizes = [16, 16], strides = [1, 1]} : vector<16x36xf32> to vector<16x16xf32>
      %64 = vector.extract_strided_slice %62 {offsets = [0, 16], sizes = [16, 16], strides = [1, 1]} : vector<16x36xf32> to vector<16x16xf32>
      %65 = vector.extract_strided_slice %62 {offsets = [0, 32], sizes = [16, 4], strides = [1, 1]} : vector<16x36xf32> to vector<16x4xf32>
      %c0_34 = arith.constant 0 : index
      %c0_35 = arith.constant 0 : index
      %c0_36 = arith.constant 0 : index
      %66 = vector.load %arg8[%c0_34, %c0_35, %c0_36] : memref<1x4x128xf32, #tpu.memory_space<vmem>>, vector<1x4x128xf32>
      %67 = vector.shape_cast %66 : vector<1x4x128xf32> to vector<4x128xf32>
      %cst_37 = arith.constant 0.000000e+00 : f32
      %68 = vector.broadcast %cst_37 : f32 to vector<16x128xf32>
      %c0_38 = arith.constant 0 : index
      %c0_39 = arith.constant 0 : index
      %c0_40 = arith.constant 0 : index
      %69 = vector.load %arg9[%c0_38, %c0_39, %c0_40] : memref<1x1x128xf32, #tpu.memory_space<vmem>>, vector<1x1x128xf32>
      %70 = vector.shape_cast %69 : vector<1x1x128xf32> to vector<1x128xf32>
      %71 = vector.broadcast %70 : vector<1x128xf32> to vector<16x128xf32>
      %72 = arith.addf %68, %71 : vector<16x128xf32>
      %73 = vector.extract_strided_slice %65 {offsets = [0, 0], sizes = [16, 1], strides = [1, 1]} : vector<16x4xf32> to vector<16x1xf32>
      %74 = vector.extract_strided_slice %67 {offsets = [0, 0], sizes = [1, 128], strides = [1, 1]} : vector<4x128xf32> to vector<1x128xf32>
      %75 = vector.broadcast %73 : vector<16x1xf32> to vector<16x128xf32>
      %76 = vector.broadcast %74 : vector<1x128xf32> to vector<16x128xf32>
      %77 = arith.mulf %75, %76 : vector<16x128xf32>
      %78 = arith.addf %72, %77 : vector<16x128xf32>
      %79 = vector.extract_strided_slice %65 {offsets = [0, 1], sizes = [16, 1], strides = [1, 1]} : vector<16x4xf32> to vector<16x1xf32>
      %80 = vector.extract_strided_slice %67 {offsets = [1, 0], sizes = [1, 128], strides = [1, 1]} : vector<4x128xf32> to vector<1x128xf32>
      %81 = vector.broadcast %79 : vector<16x1xf32> to vector<16x128xf32>
      %82 = vector.broadcast %80 : vector<1x128xf32> to vector<16x128xf32>
      %83 = arith.mulf %81, %82 : vector<16x128xf32>
      %84 = arith.addf %78, %83 : vector<16x128xf32>
      %85 = vector.extract_strided_slice %65 {offsets = [0, 2], sizes = [16, 1], strides = [1, 1]} : vector<16x4xf32> to vector<16x1xf32>
      %86 = vector.extract_strided_slice %67 {offsets = [2, 0], sizes = [1, 128], strides = [1, 1]} : vector<4x128xf32> to vector<1x128xf32>
      %87 = vector.broadcast %85 : vector<16x1xf32> to vector<16x128xf32>
      %88 = vector.broadcast %86 : vector<1x128xf32> to vector<16x128xf32>
      %89 = arith.mulf %87, %88 : vector<16x128xf32>
      %90 = arith.addf %84, %89 : vector<16x128xf32>
      %91 = vector.extract_strided_slice %65 {offsets = [0, 3], sizes = [16, 1], strides = [1, 1]} : vector<16x4xf32> to vector<16x1xf32>
      %92 = vector.extract_strided_slice %67 {offsets = [3, 0], sizes = [1, 128], strides = [1, 1]} : vector<4x128xf32> to vector<1x128xf32>
      %93 = vector.broadcast %91 : vector<16x1xf32> to vector<16x128xf32>
      %94 = vector.broadcast %92 : vector<1x128xf32> to vector<16x128xf32>
      %95 = arith.mulf %93, %94 : vector<16x128xf32>
      %96 = arith.addf %90, %95 : vector<16x128xf32>
      %cst_41 = arith.constant 2.000000e+01 : f32
      %97 = vector.broadcast %cst_41 : f32 to vector<16x128xf32>
      %98 = arith.cmpf ogt, %96, %97 : vector<16x128xf32>
      %cst_42 = arith.constant 2.000000e+01 : f32
      %99 = vector.broadcast %cst_42 : f32 to vector<16x128xf32>
      %100 = arith.minimumf %96, %99 : vector<16x128xf32>
      %101 = math.exp %100 : vector<16x128xf32>
      %cst_43 = arith.constant 1.000000e+00 : f32
      %102 = vector.broadcast %cst_43 : f32 to vector<16x128xf32>
      %103 = arith.addf %102, %101 : vector<16x128xf32>
      %104 = math.log %103 : vector<16x128xf32>
      %105 = arith.select %98, %96, %104 : vector<16x128xi1>, vector<16x128xf32>
      %c0_44 = arith.constant 0 : index
      %c0_45 = arith.constant 0 : index
      %c0_46 = arith.constant 0 : index
      %106 = vector.load %arg10[%c0_44, %c0_45, %c0_46] : memref<1x16x128xf32, #tpu.memory_space<vmem>>, vector<1x16x128xf32>
      %107 = vector.shape_cast %106 : vector<1x16x128xf32> to vector<16x128xf32>
      %108 = math.exp %107 : vector<16x128xf32>
      %cst_47 = arith.constant 0.000000e+00 : f32
      %109 = vector.broadcast %cst_47 : f32 to vector<16x128xf32>
      %110 = arith.subf %109, %108 : vector<16x128xf32>
      %111 = arith.mulf %105, %58 : vector<16x128xf32>
      %c0_48 = arith.constant 0 : index
      %c0_49 = arith.constant 0 : index
      %c0_50 = arith.constant 0 : index
      %112 = vector.load %arg11[%c0_48, %c0_49, %c0_50] : memref<1x1x128xf32, #tpu.memory_space<vmem>>, vector<1x1x128xf32>
      %113 = vector.shape_cast %112 : vector<1x1x128xf32> to vector<1x128xf32>
      %114 = vector.broadcast %113 : vector<1x128xf32> to vector<16x128xf32>
      %115 = arith.mulf %58, %114 : vector<16x128xf32>
      %cst_51 = arith.constant 0.000000e+00 : f32
      %116 = vector.broadcast %cst_51 : f32 to vector<16x128xf32>
      %117 = vector.extract_strided_slice %105 {offsets = [0, 0], sizes = [8, 128], strides = [1, 1]} : vector<16x128xf32> to vector<8x128xf32>
      %118 = vector.shape_cast %117 : vector<8x128xf32> to vector<8x1x128xf32>
      %119 = vector.shape_cast %110 : vector<16x128xf32> to vector<1x16x128xf32>
      %120 = vector.broadcast %118 : vector<8x1x128xf32> to vector<8x16x128xf32>
      %121 = vector.broadcast %119 : vector<1x16x128xf32> to vector<8x16x128xf32>
      %122 = arith.mulf %120, %121 : vector<8x16x128xf32>
      %123 = math.exp %122 : vector<8x16x128xf32>
      %c0_52 = arith.constant 0 : index
      %c0_53 = arith.constant 0 : index
      %c0_54 = arith.constant 0 : index
      %124 = vector.load %arg16[%c0_52, %c0_53, %c0_54] : memref<8x16x128xf32, #tpu.memory_space<vmem>>, vector<8x16x128xf32>
      tpu.vector_store %arg16[%c0_52, %c0_53, %c0_54], %123 {strides = array<i32>} : memref<8x16x128xf32, #tpu.memory_space<vmem>>, vector<8x16x128xf32>,
      %125 = vector.extract_strided_slice %111 {offsets = [0, 0], sizes = [8, 128], strides = [1, 1]} : vector<16x128xf32> to vector<8x128xf32>
      %126 = vector.shape_cast %125 : vector<8x128xf32> to vector<8x1x128xf32>
      %127 = vector.extract_strided_slice %63 {offsets = [0, 0], sizes = [8, 16], strides = [1, 1]} : vector<16x16xf32> to vector<8x16xf32>
      %128 = vector.shape_cast %127 : vector<8x16xf32> to vector<8x16x1xf32>
      %129 = vector.broadcast %126 : vector<8x1x128xf32> to vector<8x16x128xf32>
      %130 = vector.broadcast %128 : vector<8x16x1xf32> to vector<8x16x128xf32>
      %131 = arith.mulf %129, %130 : vector<8x16x128xf32>
      %c0_55 = arith.constant 0 : index
      %c0_56 = arith.constant 0 : index
      %c0_57 = arith.constant 0 : index
      %132 = vector.load %arg17[%c0_55, %c0_56, %c0_57] : memref<8x16x128xf32, #tpu.memory_space<vmem>>, vector<8x16x128xf32>
      tpu.vector_store %arg17[%c0_55, %c0_56, %c0_57], %131 {strides = array<i32>} : memref<8x16x128xf32, #tpu.memory_space<vmem>>, vector<8x16x128xf32>,
      %c0_i32_58 = arith.constant 0 : i32
      %c8_i32 = arith.constant 8 : i32
      %133 = arith.muli %c0_i32_58, %c8_i32 : i32
      %c1_i32_59 = arith.constant 1 : i32
      %134 = arith.muli %c1_i32_59, %133 : i32
      %c0_i32_60 = arith.constant 0 : i32
      %135 = arith.addi %c0_i32_60, %134 : i32
      %c0_i32_61 = arith.constant 0 : i32
      %136 = arith.addi %135, %c0_i32_61 : i32
      %137 = arith.index_cast %136 : i32 to index
      %c0_62 = arith.constant 0 : index
      %c0_63 = arith.constant 0 : index
      %138 = vector.load %arg16[%137, %c0_62, %c0_63] : memref<8x16x128xf32, #tpu.memory_space<vmem>>, vector<1x16x128xf32>
      %139 = vector.shape_cast %138 : vector<1x16x128xf32> to vector<16x128xf32>
      %140 = arith.mulf %139, %116 : vector<16x128xf32>
      %141 = arith.index_cast %136 : i32 to index
      %c0_64 = arith.constant 0 : index
      %c0_65 = arith.constant 0 : index
      %142 = vector.load %arg17[%141, %c0_64, %c0_65] : memref<8x16x128xf32, #tpu.memory_space<vmem>>, vector<1x16x128xf32>
      %143 = vector.shape_cast %142 : vector<1x16x128xf32> to vector<16x128xf32>
      %144 = arith.addf %140, %143 : vector<16x128xf32>
      %145 = arith.index_cast %136 : i32 to index
      %c0_66 = arith.constant 0 : index
      %c0_67 = arith.constant 0 : index
      %146 = vector.load %arg17[%145, %c0_66, %c0_67] : memref<8x16x128xf32, #tpu.memory_space<vmem>>, vector<1x16x128xf32>
      %147 = vector.shape_cast %146 : vector<1x16x128xf32> to vector<16x128xf32>
      %148 = vector.shape_cast %144 : vector<16x128xf32> to vector<1x16x128xf32>
      tpu.vector_store %arg17[%145, %c0_66, %c0_67], %148 {strides = array<i32>} : memref<8x16x128xf32, #tpu.memory_space<vmem>>, vector<1x16x128xf32>,
      %c1_i32_68 = arith.constant 1 : i32
      %149 = arith.addi %135, %c1_i32_68 : i32
      %150 = arith.index_cast %149 : i32 to index
      %c0_69 = arith.constant 0 : index
      %c0_70 = arith.constant 0 : index
      %151 = vector.load %arg16[%150, %c0_69, %c0_70] : memref<8x16x128xf32, #tpu.memory_space<vmem>>, vector<1x16x128xf32>
      %152 = vector.shape_cast %151 : vector<1x16x128xf32> to vector<16x128xf32>
      %153 = arith.mulf %152, %144 : vector<16x128xf32>
      %154 = arith.index_cast %149 : i32 to index
      %c0_71 = arith.constant 0 : index
      %c0_72 = arith.constant 0 : index
      %155 = vector.load %arg17[%154, %c0_71, %c0_72] : memref<8x16x128xf32, #tpu.memory_space<vmem>>, vector<1x16x128xf32>
      %156 = vector.shape_cast %155 : vector<1x16x128xf32> to vector<16x128xf32>
      %157 = arith.addf %153, %156 : vector<16x128xf32>
      %158 = arith.index_cast %149 : i32 to index
      %c0_73 = arith.constant 0 : index
      %c0_74 = arith.constant 0 : index
      %159 = vector.load %arg17[%158, %c0_73, %c0_74] : memref<8x16x128xf32, #tpu.memory_space<vmem>>, vector<1x16x128xf32>
      %160 = vector.shape_cast %159 : vector<1x16x128xf32> to vector<16x128xf32>
      %161 = vector.shape_cast %157 : vector<16x128xf32> to vector<1x16x128xf32>
      tpu.vector_store %arg17[%158, %c0_73, %c0_74], %161 {strides = array<i32>} : memref<8x16x128xf32, #tpu.memory_space<vmem>>, vector<1x16x128xf32>,
      %c2_i32 = arith.constant 2 : i32
      %162 = arith.addi %135, %c2_i32 : i32
      %163 = arith.index_cast %162 : i32 to index
      %c0_75 = arith.constant 0 : index
      %c0_76 = arith.constant 0 : index
      %164 = vector.load %arg16[%163, %c0_75, %c0_76] : memref<8x16x128xf32, #tpu.memory_space<vmem>>, vector<1x16x128xf32>
      %165 = vector.shape_cast %164 : vector<1x16x128xf32> to vector<16x128xf32>
      %166 = arith.mulf %165, %157 : vector<16x128xf32>
      %167 = arith.index_cast %162 : i32 to index
      %c0_77 = arith.constant 0 : index
      %c0_78 = arith.constant 0 : index
      %168 = vector.load %arg17[%167, %c0_77, %c0_78] : memref<8x16x128xf32, #tpu.memory_space<vmem>>, vector<1x16x128xf32>
      %169 = vector.shape_cast %168 : vector<1x16x128xf32> to vector<16x128xf32>
      %170 = arith.addf %166, %169 : vector<16x128xf32>
      %171 = arith.index_cast %162 : i32 to index
      %c0_79 = arith.constant 0 : index
      %c0_80 = arith.constant 0 : index
      %172 = vector.load %arg17[%171, %c0_79, %c0_80] : memref<8x16x128xf32, #tpu.memory_space<vmem>>, vector<1x16x128xf32>
      %173 = vector.shape_cast %172 : vector<1x16x128xf32> to vector<16x128xf32>
      %174 = vector.shape_cast %170 : vector<16x128xf32> to vector<1x16x128xf32>
      tpu.vector_store %arg17[%171, %c0_79, %c0_80], %174 {strides = array<i32>} : memref<8x16x128xf32, #tpu.memory_space<vmem>>, vector<1x16x128xf32>,
      %c3_i32 = arith.constant 3 : i32
      %175 = arith.addi %135, %c3_i32 : i32
      %176 = arith.index_cast %175 : i32 to index
      %c0_81 = arith.constant 0 : index
      %c0_82 = arith.constant 0 : index
      %177 = vector.load %arg16[%176, %c0_81, %c0_82] : memref<8x16x128xf32, #tpu.memory_space<vmem>>, vector<1x16x128xf32>
      %178 = vector.shape_cast %177 : vector<1x16x128xf32> to vector<16x128xf32>
      %179 = arith.mulf %178, %170 : vector<16x128xf32>
      %180 = arith.index_cast %175 : i32 to index
      %c0_83 = arith.constant 0 : index
      %c0_84 = arith.constant 0 : index
      %181 = vector.load %arg17[%180, %c0_83, %c0_84] : memref<8x16x128xf32, #tpu.memory_space<vmem>>, vector<1x16x128xf32>
      %182 = vector.shape_cast %181 : vector<1x16x128xf32> to vector<16x128xf32>
      %183 = arith.addf %179, %182 : vector<16x128xf32>
      %184 = arith.index_cast %175 : i32 to index
      %c0_85 = arith.constant 0 : index
      %c0_86 = arith.constant 0 : index
      %185 = vector.load %arg17[%184, %c0_85, %c0_86] : memref<8x16x128xf32, #tpu.memory_space<vmem>>, vector<1x16x128xf32>
      %186 = vector.shape_cast %185 : vector<1x16x128xf32> to vector<16x128xf32>
      %187 = vector.shape_cast %183 : vector<16x128xf32> to vector<1x16x128xf32>
      tpu.vector_store %arg17[%184, %c0_85, %c0_86], %187 {strides = array<i32>} : memref<8x16x128xf32, #tpu.memory_space<vmem>>, vector<1x16x128xf32>,
      %c4_i32 = arith.constant 4 : i32
      %188 = arith.addi %135, %c4_i32 : i32
      %189 = arith.index_cast %188 : i32 to index
      %c0_87 = arith.constant 0 : index
      %c0_88 = arith.constant 0 : index
      %190 = vector.load %arg16[%189, %c0_87, %c0_88] : memref<8x16x128xf32, #tpu.memory_space<vmem>>, vector<1x16x128xf32>
      %191 = vector.shape_cast %190 : vector<1x16x128xf32> to vector<16x128xf32>
      %192 = arith.mulf %191, %183 : vector<16x128xf32>
      %193 = arith.index_cast %188 : i32 to index
      %c0_89 = arith.constant 0 : index
      %c0_90 = arith.constant 0 : index
      %194 = vector.load %arg17[%193, %c0_89, %c0_90] : memref<8x16x128xf32, #tpu.memory_space<vmem>>, vector<1x16x128xf32>
      %195 = vector.shape_cast %194 : vector<1x16x128xf32> to vector<16x128xf32>
      %196 = arith.addf %192, %195 : vector<16x128xf32>
      %197 = arith.index_cast %188 : i32 to index
      %c0_91 = arith.constant 0 : index
      %c0_92 = arith.constant 0 : index
      %198 = vector.load %arg17[%197, %c0_91, %c0_92] : memref<8x16x128xf32, #tpu.memory_space<vmem>>, vector<1x16x128xf32>
      %199 = vector.shape_cast %198 : vector<1x16x128xf32> to vector<16x128xf32>
      %200 = vector.shape_cast %196 : vector<16x128xf32> to vector<1x16x128xf32>
      tpu.vector_store %arg17[%197, %c0_91, %c0_92], %200 {strides = array<i32>} : memref<8x16x128xf32, #tpu.memory_space<vmem>>, vector<1x16x128xf32>,
      %c5_i32 = arith.constant 5 : i32
      %201 = arith.addi %135, %c5_i32 : i32
      %202 = arith.index_cast %201 : i32 to index
      %c0_93 = arith.constant 0 : index
      %c0_94 = arith.constant 0 : index
      %203 = vector.load %arg16[%202, %c0_93, %c0_94] : memref<8x16x128xf32, #tpu.memory_space<vmem>>, vector<1x16x128xf32>
      %204 = vector.shape_cast %203 : vector<1x16x128xf32> to vector<16x128xf32>
      %205 = arith.mulf %204, %196 : vector<16x128xf32>
      %206 = arith.index_cast %201 : i32 to index
      %c0_95 = arith.constant 0 : index
      %c0_96 = arith.constant 0 : index
      %207 = vector.load %arg17[%206, %c0_95, %c0_96] : memref<8x16x128xf32, #tpu.memory_space<vmem>>, vector<1x16x128xf32>
      %208 = vector.shape_cast %207 : vector<1x16x128xf32> to vector<16x128xf32>
      %209 = arith.addf %205, %208 : vector<16x128xf32>
      %210 = arith.index_cast %201 : i32 to index
      %c0_97 = arith.constant 0 : index
      %c0_98 = arith.constant 0 : index
      %211 = vector.load %arg17[%210, %c0_97, %c0_98] : memref<8x16x128xf32, #tpu.memory_space<vmem>>, vector<1x16x128xf32>
      %212 = vector.shape_cast %211 : vector<1x16x128xf32> to vector<16x128xf32>
      %213 = vector.shape_cast %209 : vector<16x128xf32> to vector<1x16x128xf32>
      tpu.vector_store %arg17[%210, %c0_97, %c0_98], %213 {strides = array<i32>} : memref<8x16x128xf32, #tpu.memory_space<vmem>>, vector<1x16x128xf32>,
      %c6_i32 = arith.constant 6 : i32
      %214 = arith.addi %135, %c6_i32 : i32
      %215 = arith.index_cast %214 : i32 to index
      %c0_99 = arith.constant 0 : index
      %c0_100 = arith.constant 0 : index
      %216 = vector.load %arg16[%215, %c0_99, %c0_100] : memref<8x16x128xf32, #tpu.memory_space<vmem>>, vector<1x16x128xf32>
      %217 = vector.shape_cast %216 : vector<1x16x128xf32> to vector<16x128xf32>
      %218 = arith.mulf %217, %209 : vector<16x128xf32>
      %219 = arith.index_cast %214 : i32 to index
      %c0_101 = arith.constant 0 : index
      %c0_102 = arith.constant 0 : index
      %220 = vector.load %arg17[%219, %c0_101, %c0_102] : memref<8x16x128xf32, #tpu.memory_space<vmem>>, vector<1x16x128xf32>
      %221 = vector.shape_cast %220 : vector<1x16x128xf32> to vector<16x128xf32>
      %222 = arith.addf %218, %221 : vector<16x128xf32>
      %223 = arith.index_cast %214 : i32 to index
      %c0_103 = arith.constant 0 : index
      %c0_104 = arith.constant 0 : index
      %224 = vector.load %arg17[%223, %c0_103, %c0_104] : memref<8x16x128xf32, #tpu.memory_space<vmem>>, vector<1x16x128xf32>
      %225 = vector.shape_cast %224 : vector<1x16x128xf32> to vector<16x128xf32>
      %226 = vector.shape_cast %222 : vector<16x128xf32> to vector<1x16x128xf32>
      tpu.vector_store %arg17[%223, %c0_103, %c0_104], %226 {strides = array<i32>} : memref<8x16x128xf32, #tpu.memory_space<vmem>>, vector<1x16x128xf32>,
      %c7_i32 = arith.constant 7 : i32
      %227 = arith.addi %135, %c7_i32 : i32
      %228 = arith.index_cast %227 : i32 to index
      %c0_105 = arith.constant 0 : index
      %c0_106 = arith.constant 0 : index
      %229 = vector.load %arg16[%228, %c0_105, %c0_106] : memref<8x16x128xf32, #tpu.memory_space<vmem>>, vector<1x16x128xf32>
      %230 = vector.shape_cast %229 : vector<1x16x128xf32> to vector<16x128xf32>
      %231 = arith.mulf %230, %222 : vector<16x128xf32>
      %232 = arith.index_cast %227 : i32 to index
      %c0_107 = arith.constant 0 : index
      %c0_108 = arith.constant 0 : index
      %233 = vector.load %arg17[%232, %c0_107, %c0_108] : memref<8x16x128xf32, #tpu.memory_space<vmem>>, vector<1x16x128xf32>
      %234 = vector.shape_cast %233 : vector<1x16x128xf32> to vector<16x128xf32>
      %235 = arith.addf %231, %234 : vector<16x128xf32>
      %236 = arith.index_cast %227 : i32 to index
      %c0_109 = arith.constant 0 : index
      %c0_110 = arith.constant 0 : index
      %237 = vector.load %arg17[%236, %c0_109, %c0_110] : memref<8x16x128xf32, #tpu.memory_space<vmem>>, vector<1x16x128xf32>
      %238 = vector.shape_cast %237 : vector<1x16x128xf32> to vector<16x128xf32>
      %239 = vector.shape_cast %235 : vector<16x128xf32> to vector<1x16x128xf32>
      tpu.vector_store %arg17[%236, %c0_109, %c0_110], %239 {strides = array<i32>} : memref<8x16x128xf32, #tpu.memory_space<vmem>>, vector<1x16x128xf32>,
      %c1_i32_111 = arith.constant 1 : i32
      %c0_112 = arith.constant 0 : index
      %c0_113 = arith.constant 0 : index
      %c0_114 = arith.constant 0 : index
      %240 = vector.load %arg17[%c0_112, %c0_113, %c0_114] : memref<8x16x128xf32, #tpu.memory_space<vmem>>, vector<8x16x128xf32>
      %241 = vector.extract_strided_slice %64 {offsets = [0, 0], sizes = [8, 16], strides = [1, 1]} : vector<16x16xf32> to vector<8x16xf32>
      %242 = vector.shape_cast %241 : vector<8x16xf32> to vector<8x16x1xf32>
      %243 = vector.broadcast %242 : vector<8x16x1xf32> to vector<8x16x128xf32>
      %244 = arith.mulf %240, %243 : vector<8x16x128xf32>
      %cst_115 = arith.constant dense<0.000000e+00> : vector<8x128xf32>
      %245 = vector.multi_reduction <add>, %244, %cst_115 [1] : vector<8x16x128xf32> to vector<8x128xf32>
      %246 = vector.extract_strided_slice %115 {offsets = [0, 0], sizes = [8, 128], strides = [1, 1]} : vector<16x128xf32> to vector<8x128xf32>
      %247 = arith.addf %245, %246 : vector<8x128xf32>
      %c0_116 = arith.constant 0 : index
      %c0_117 = arith.constant 0 : index
      %248 = vector.load %arg15[%c0_116, %c0_117] : memref<16x128xf32, #tpu.memory_space<vmem>>, vector<8x128xf32>
      tpu.vector_store %arg15[%c0_116, %c0_117], %247 {strides = array<i32>} : memref<16x128xf32, #tpu.memory_space<vmem>>, vector<8x128xf32>,
      %249 = vector.extract_strided_slice %105 {offsets = [8, 0], sizes = [8, 128], strides = [1, 1]} : vector<16x128xf32> to vector<8x128xf32>
      %250 = vector.shape_cast %249 : vector<8x128xf32> to vector<8x1x128xf32>
      %251 = vector.shape_cast %110 : vector<16x128xf32> to vector<1x16x128xf32>
      %252 = vector.broadcast %250 : vector<8x1x128xf32> to vector<8x16x128xf32>
      %253 = vector.broadcast %251 : vector<1x16x128xf32> to vector<8x16x128xf32>
      %254 = arith.mulf %252, %253 : vector<8x16x128xf32>
      %255 = math.exp %254 : vector<8x16x128xf32>
      %c0_118 = arith.constant 0 : index
      %c0_119 = arith.constant 0 : index
      %c0_120 = arith.constant 0 : index
      %256 = vector.load %arg16[%c0_118, %c0_119, %c0_120] : memref<8x16x128xf32, #tpu.memory_space<vmem>>, vector<8x16x128xf32>
      tpu.vector_store %arg16[%c0_118, %c0_119, %c0_120], %255 {strides = array<i32>} : memref<8x16x128xf32, #tpu.memory_space<vmem>>, vector<8x16x128xf32>,
      %257 = vector.extract_strided_slice %111 {offsets = [8, 0], sizes = [8, 128], strides = [1, 1]} : vector<16x128xf32> to vector<8x128xf32>
      %258 = vector.shape_cast %257 : vector<8x128xf32> to vector<8x1x128xf32>
      %259 = vector.extract_strided_slice %63 {offsets = [8, 0], sizes = [8, 16], strides = [1, 1]} : vector<16x16xf32> to vector<8x16xf32>
      %260 = vector.shape_cast %259 : vector<8x16xf32> to vector<8x16x1xf32>
      %261 = vector.broadcast %258 : vector<8x1x128xf32> to vector<8x16x128xf32>
      %262 = vector.broadcast %260 : vector<8x16x1xf32> to vector<8x16x128xf32>
      %263 = arith.mulf %261, %262 : vector<8x16x128xf32>
      %c0_121 = arith.constant 0 : index
      %c0_122 = arith.constant 0 : index
      %c0_123 = arith.constant 0 : index
      %264 = vector.load %arg17[%c0_121, %c0_122, %c0_123] : memref<8x16x128xf32, #tpu.memory_space<vmem>>, vector<8x16x128xf32>
      tpu.vector_store %arg17[%c0_121, %c0_122, %c0_123], %263 {strides = array<i32>} : memref<8x16x128xf32, #tpu.memory_space<vmem>>, vector<8x16x128xf32>,
      %c0_i32_124 = arith.constant 0 : i32
      %c8_i32_125 = arith.constant 8 : i32
      %265 = arith.muli %c0_i32_124, %c8_i32_125 : i32
      %c1_i32_126 = arith.constant 1 : i32
      %266 = arith.muli %c1_i32_126, %265 : i32
      %c0_i32_127 = arith.constant 0 : i32
      %267 = arith.addi %c0_i32_127, %266 : i32
      %c0_i32_128 = arith.constant 0 : i32
      %268 = arith.addi %267, %c0_i32_128 : i32
      %269 = arith.index_cast %268 : i32 to index
      %c0_129 = arith.constant 0 : index
      %c0_130 = arith.constant 0 : index
      %270 = vector.load %arg16[%269, %c0_129, %c0_130] : memref<8x16x128xf32, #tpu.memory_space<vmem>>, vector<1x16x128xf32>
      %271 = vector.shape_cast %270 : vector<1x16x128xf32> to vector<16x128xf32>
      %272 = arith.mulf %271, %235 : vector<16x128xf32>
      %273 = arith.index_cast %268 : i32 to index
      %c0_131 = arith.constant 0 : index
      %c0_132 = arith.constant 0 : index
      %274 = vector.load %arg17[%273, %c0_131, %c0_132] : memref<8x16x128xf32, #tpu.memory_space<vmem>>, vector<1x16x128xf32>
      %275 = vector.shape_cast %274 : vector<1x16x128xf32> to vector<16x128xf32>
      %276 = arith.addf %272, %275 : vector<16x128xf32>
      %277 = arith.index_cast %268 : i32 to index
      %c0_133 = arith.constant 0 : index
      %c0_134 = arith.constant 0 : index
      %278 = vector.load %arg17[%277, %c0_133, %c0_134] : memref<8x16x128xf32, #tpu.memory_space<vmem>>, vector<1x16x128xf32>
      %279 = vector.shape_cast %278 : vector<1x16x128xf32> to vector<16x128xf32>
      %280 = vector.shape_cast %276 : vector<16x128xf32> to vector<1x16x128xf32>
      tpu.vector_store %arg17[%277, %c0_133, %c0_134], %280 {strides = array<i32>} : memref<8x16x128xf32, #tpu.memory_space<vmem>>, vector<1x16x128xf32>,
      %c1_i32_135 = arith.constant 1 : i32
      %281 = arith.addi %267, %c1_i32_135 : i32
      %282 = arith.index_cast %281 : i32 to index
      %c0_136 = arith.constant 0 : index
      %c0_137 = arith.constant 0 : index
      %283 = vector.load %arg16[%282, %c0_136, %c0_137] : memref<8x16x128xf32, #tpu.memory_space<vmem>>, vector<1x16x128xf32>
      %284 = vector.shape_cast %283 : vector<1x16x128xf32> to vector<16x128xf32>
      %285 = arith.mulf %284, %276 : vector<16x128xf32>
      %286 = arith.index_cast %281 : i32 to index
      %c0_138 = arith.constant 0 : index
      %c0_139 = arith.constant 0 : index
      %287 = vector.load %arg17[%286, %c0_138, %c0_139] : memref<8x16x128xf32, #tpu.memory_space<vmem>>, vector<1x16x128xf32>
      %288 = vector.shape_cast %287 : vector<1x16x128xf32> to vector<16x128xf32>
      %289 = arith.addf %285, %288 : vector<16x128xf32>
      %290 = arith.index_cast %281 : i32 to index
      %c0_140 = arith.constant 0 : index
      %c0_141 = arith.constant 0 : index
      %291 = vector.load %arg17[%290, %c0_140, %c0_141] : memref<8x16x128xf32, #tpu.memory_space<vmem>>, vector<1x16x128xf32>
      %292 = vector.shape_cast %291 : vector<1x16x128xf32> to vector<16x128xf32>
      %293 = vector.shape_cast %289 : vector<16x128xf32> to vector<1x16x128xf32>
      tpu.vector_store %arg17[%290, %c0_140, %c0_141], %293 {strides = array<i32>} : memref<8x16x128xf32, #tpu.memory_space<vmem>>, vector<1x16x128xf32>,
      %c2_i32_142 = arith.constant 2 : i32
      %294 = arith.addi %267, %c2_i32_142 : i32
      %295 = arith.index_cast %294 : i32 to index
      %c0_143 = arith.constant 0 : index
      %c0_144 = arith.constant 0 : index
      %296 = vector.load %arg16[%295, %c0_143, %c0_144] : memref<8x16x128xf32, #tpu.memory_space<vmem>>, vector<1x16x128xf32>
      %297 = vector.shape_cast %296 : vector<1x16x128xf32> to vector<16x128xf32>
      %298 = arith.mulf %297, %289 : vector<16x128xf32>
      %299 = arith.index_cast %294 : i32 to index
      %c0_145 = arith.constant 0 : index
      %c0_146 = arith.constant 0 : index
      %300 = vector.load %arg17[%299, %c0_145, %c0_146] : memref<8x16x128xf32, #tpu.memory_space<vmem>>, vector<1x16x128xf32>
      %301 = vector.shape_cast %300 : vector<1x16x128xf32> to vector<16x128xf32>
      %302 = arith.addf %298, %301 : vector<16x128xf32>
      %303 = arith.index_cast %294 : i32 to index
      %c0_147 = arith.constant 0 : index
      %c0_148 = arith.constant 0 : index
      %304 = vector.load %arg17[%303, %c0_147, %c0_148] : memref<8x16x128xf32, #tpu.memory_space<vmem>>, vector<1x16x128xf32>
      %305 = vector.shape_cast %304 : vector<1x16x128xf32> to vector<16x128xf32>
      %306 = vector.shape_cast %302 : vector<16x128xf32> to vector<1x16x128xf32>
      tpu.vector_store %arg17[%303, %c0_147, %c0_148], %306 {strides = array<i32>} : memref<8x16x128xf32, #tpu.memory_space<vmem>>, vector<1x16x128xf32>,
      %c3_i32_149 = arith.constant 3 : i32
      %307 = arith.addi %267, %c3_i32_149 : i32
      %308 = arith.index_cast %307 : i32 to index
      %c0_150 = arith.constant 0 : index
      %c0_151 = arith.constant 0 : index
      %309 = vector.load %arg16[%308, %c0_150, %c0_151] : memref<8x16x128xf32, #tpu.memory_space<vmem>>, vector<1x16x128xf32>
      %310 = vector.shape_cast %309 : vector<1x16x128xf32> to vector<16x128xf32>
      %311 = arith.mulf %310, %302 : vector<16x128xf32>
      %312 = arith.index_cast %307 : i32 to index
      %c0_152 = arith.constant 0 : index
      %c0_153 = arith.constant 0 : index
      %313 = vector.load %arg17[%312, %c0_152, %c0_153] : memref<8x16x128xf32, #tpu.memory_space<vmem>>, vector<1x16x128xf32>
      %314 = vector.shape_cast %313 : vector<1x16x128xf32> to vector<16x128xf32>
      %315 = arith.addf %311, %314 : vector<16x128xf32>
      %316 = arith.index_cast %307 : i32 to index
      %c0_154 = arith.constant 0 : index
      %c0_155 = arith.constant 0 : index
      %317 = vector.load %arg17[%316, %c0_154, %c0_155] : memref<8x16x128xf32, #tpu.memory_space<vmem>>, vector<1x16x128xf32>
      %318 = vector.shape_cast %317 : vector<1x16x128xf32> to vector<16x128xf32>
      %319 = vector.shape_cast %315 : vector<16x128xf32> to vector<1x16x128xf32>
      tpu.vector_store %arg17[%316, %c0_154, %c0_155], %319 {strides = array<i32>} : memref<8x16x128xf32, #tpu.memory_space<vmem>>, vector<1x16x128xf32>,
      %c4_i32_156 = arith.constant 4 : i32
      %320 = arith.addi %267, %c4_i32_156 : i32
      %321 = arith.index_cast %320 : i32 to index
      %c0_157 = arith.constant 0 : index
      %c0_158 = arith.constant 0 : index
      %322 = vector.load %arg16[%321, %c0_157, %c0_158] : memref<8x16x128xf32, #tpu.memory_space<vmem>>, vector<1x16x128xf32>
      %323 = vector.shape_cast %322 : vector<1x16x128xf32> to vector<16x128xf32>
      %324 = arith.mulf %323, %315 : vector<16x128xf32>
      %325 = arith.index_cast %320 : i32 to index
      %c0_159 = arith.constant 0 : index
      %c0_160 = arith.constant 0 : index
      %326 = vector.load %arg17[%325, %c0_159, %c0_160] : memref<8x16x128xf32, #tpu.memory_space<vmem>>, vector<1x16x128xf32>
      %327 = vector.shape_cast %326 : vector<1x16x128xf32> to vector<16x128xf32>
      %328 = arith.addf %324, %327 : vector<16x128xf32>
      %329 = arith.index_cast %320 : i32 to index
      %c0_161 = arith.constant 0 : index
      %c0_162 = arith.constant 0 : index
      %330 = vector.load %arg17[%329, %c0_161, %c0_162] : memref<8x16x128xf32, #tpu.memory_space<vmem>>, vector<1x16x128xf32>
      %331 = vector.shape_cast %330 : vector<1x16x128xf32> to vector<16x128xf32>
      %332 = vector.shape_cast %328 : vector<16x128xf32> to vector<1x16x128xf32>
      tpu.vector_store %arg17[%329, %c0_161, %c0_162], %332 {strides = array<i32>} : memref<8x16x128xf32, #tpu.memory_space<vmem>>, vector<1x16x128xf32>,
      %c5_i32_163 = arith.constant 5 : i32
      %333 = arith.addi %267, %c5_i32_163 : i32
      %334 = arith.index_cast %333 : i32 to index
      %c0_164 = arith.constant 0 : index
      %c0_165 = arith.constant 0 : index
      %335 = vector.load %arg16[%334, %c0_164, %c0_165] : memref<8x16x128xf32, #tpu.memory_space<vmem>>, vector<1x16x128xf32>
      %336 = vector.shape_cast %335 : vector<1x16x128xf32> to vector<16x128xf32>
      %337 = arith.mulf %336, %328 : vector<16x128xf32>
      %338 = arith.index_cast %333 : i32 to index
      %c0_166 = arith.constant 0 : index
      %c0_167 = arith.constant 0 : index
      %339 = vector.load %arg17[%338, %c0_166, %c0_167] : memref<8x16x128xf32, #tpu.memory_space<vmem>>, vector<1x16x128xf32>
      %340 = vector.shape_cast %339 : vector<1x16x128xf32> to vector<16x128xf32>
      %341 = arith.addf %337, %340 : vector<16x128xf32>
      %342 = arith.index_cast %333 : i32 to index
      %c0_168 = arith.constant 0 : index
      %c0_169 = arith.constant 0 : index
      %343 = vector.load %arg17[%342, %c0_168, %c0_169] : memref<8x16x128xf32, #tpu.memory_space<vmem>>, vector<1x16x128xf32>
      %344 = vector.shape_cast %343 : vector<1x16x128xf32> to vector<16x128xf32>
      %345 = vector.shape_cast %341 : vector<16x128xf32> to vector<1x16x128xf32>
      tpu.vector_store %arg17[%342, %c0_168, %c0_169], %345 {strides = array<i32>} : memref<8x16x128xf32, #tpu.memory_space<vmem>>, vector<1x16x128xf32>,
      %c6_i32_170 = arith.constant 6 : i32
      %346 = arith.addi %267, %c6_i32_170 : i32
      %347 = arith.index_cast %346 : i32 to index
      %c0_171 = arith.constant 0 : index
      %c0_172 = arith.constant 0 : index
      %348 = vector.load %arg16[%347, %c0_171, %c0_172] : memref<8x16x128xf32, #tpu.memory_space<vmem>>, vector<1x16x128xf32>
      %349 = vector.shape_cast %348 : vector<1x16x128xf32> to vector<16x128xf32>
      %350 = arith.mulf %349, %341 : vector<16x128xf32>
      %351 = arith.index_cast %346 : i32 to index
      %c0_173 = arith.constant 0 : index
      %c0_174 = arith.constant 0 : index
      %352 = vector.load %arg17[%351, %c0_173, %c0_174] : memref<8x16x128xf32, #tpu.memory_space<vmem>>, vector<1x16x128xf32>
      %353 = vector.shape_cast %352 : vector<1x16x128xf32> to vector<16x128xf32>
      %354 = arith.addf %350, %353 : vector<16x128xf32>
      %355 = arith.index_cast %346 : i32 to index
      %c0_175 = arith.constant 0 : index
      %c0_176 = arith.constant 0 : index
      %356 = vector.load %arg17[%355, %c0_175, %c0_176] : memref<8x16x128xf32, #tpu.memory_space<vmem>>, vector<1x16x128xf32>
      %357 = vector.shape_cast %356 : vector<1x16x128xf32> to vector<16x128xf32>
      %358 = vector.shape_cast %354 : vector<16x128xf32> to vector<1x16x128xf32>
      tpu.vector_store %arg17[%355, %c0_175, %c0_176], %358 {strides = array<i32>} : memref<8x16x128xf32, #tpu.memory_space<vmem>>, vector<1x16x128xf32>,
      %c7_i32_177 = arith.constant 7 : i32
      %359 = arith.addi %267, %c7_i32_177 : i32
      %360 = arith.index_cast %359 : i32 to index
      %c0_178 = arith.constant 0 : index
      %c0_179 = arith.constant 0 : index
      %361 = vector.load %arg16[%360, %c0_178, %c0_179] : memref<8x16x128xf32, #tpu.memory_space<vmem>>, vector<1x16x128xf32>
      %362 = vector.shape_cast %361 : vector<1x16x128xf32> to vector<16x128xf32>
      %363 = arith.mulf %362, %354 : vector<16x128xf32>
      %364 = arith.index_cast %359 : i32 to index
      %c0_180 = arith.constant 0 : index
      %c0_181 = arith.constant 0 : index
      %365 = vector.load %arg17[%364, %c0_180, %c0_181] : memref<8x16x128xf32, #tpu.memory_space<vmem>>, vector<1x16x128xf32>
      %366 = vector.shape_cast %365 : vector<1x16x128xf32> to vector<16x128xf32>
      %367 = arith.addf %363, %366 : vector<16x128xf32>
      %368 = arith.index_cast %359 : i32 to index
      %c0_182 = arith.constant 0 : index
      %c0_183 = arith.constant 0 : index
      %369 = vector.load %arg17[%368, %c0_182, %c0_183] : memref<8x16x128xf32, #tpu.memory_space<vmem>>, vector<1x16x128xf32>
      %370 = vector.shape_cast %369 : vector<1x16x128xf32> to vector<16x128xf32>
      %371 = vector.shape_cast %367 : vector<16x128xf32> to vector<1x16x128xf32>
      tpu.vector_store %arg17[%368, %c0_182, %c0_183], %371 {strides = array<i32>} : memref<8x16x128xf32, #tpu.memory_space<vmem>>, vector<1x16x128xf32>,
      %c1_i32_184 = arith.constant 1 : i32
      %c0_185 = arith.constant 0 : index
      %c0_186 = arith.constant 0 : index
      %c0_187 = arith.constant 0 : index
      %372 = vector.load %arg17[%c0_185, %c0_186, %c0_187] : memref<8x16x128xf32, #tpu.memory_space<vmem>>, vector<8x16x128xf32>
      %373 = vector.extract_strided_slice %64 {offsets = [8, 0], sizes = [8, 16], strides = [1, 1]} : vector<16x16xf32> to vector<8x16xf32>
      %374 = vector.shape_cast %373 : vector<8x16xf32> to vector<8x16x1xf32>
      %375 = vector.broadcast %374 : vector<8x16x1xf32> to vector<8x16x128xf32>
      %376 = arith.mulf %372, %375 : vector<8x16x128xf32>
      %cst_188 = arith.constant dense<0.000000e+00> : vector<8x128xf32>
      %377 = vector.multi_reduction <add>, %376, %cst_188 [1] : vector<8x16x128xf32> to vector<8x128xf32>
      %378 = vector.extract_strided_slice %115 {offsets = [8, 0], sizes = [8, 128], strides = [1, 1]} : vector<16x128xf32> to vector<8x128xf32>
      %379 = arith.addf %377, %378 : vector<8x128xf32>
      %c8_189 = arith.constant 8 : index
      %c0_190 = arith.constant 0 : index
      %380 = vector.load %arg15[%c8_189, %c0_190] : memref<16x128xf32, #tpu.memory_space<vmem>>, vector<8x128xf32>
      tpu.vector_store %arg15[%c8_189, %c0_190], %379 {strides = array<i32>} : memref<16x128xf32, #tpu.memory_space<vmem>>, vector<8x128xf32>,
    } else {
    }
    %c1_i32 = arith.constant 1 : i32
    %3 = arith.cmpi eq, %arg1, %c1_i32 : i32
    %4 = arith.extui %3 : i1 to i32
    %c0_i32_1 = arith.constant 0 : i32
    %5 = arith.cmpi ne, %4, %c0_i32_1 : i32
    scf.if %5 {
      %c0 = arith.constant 0 : index
      %c0_2 = arith.constant 0 : index
      %c0_3 = arith.constant 0 : index
      %6 = vector.load %arg5[%c0, %c0_2, %c0_3] : memref<1x4x128xf32, #tpu.memory_space<vmem>>, vector<1x4x128xf32>
      %7 = vector.shape_cast %6 : vector<1x4x128xf32> to vector<4x128xf32>
      %cst = arith.constant 0.000000e+00 : f32
      %8 = vector.broadcast %cst : f32 to vector<16x128xf32>
      %c0_4 = arith.constant 0 : index
      %c0_5 = arith.constant 0 : index
      %c0_6 = arith.constant 0 : index
      %9 = vector.load %arg6[%c0_4, %c0_5, %c0_6] : memref<1x1x128xf32, #tpu.memory_space<vmem>>, vector<1x1x128xf32>
      %10 = vector.shape_cast %9 : vector<1x1x128xf32> to vector<1x128xf32>
      %11 = vector.broadcast %10 : vector<1x128xf32> to vector<16x128xf32>
      %12 = arith.addf %8, %11 : vector<16x128xf32>
      %13 = vector.extract_strided_slice %7 {offsets = [0, 0], sizes = [1, 128], strides = [1, 1]} : vector<4x128xf32> to vector<1x128xf32>
      %c11 = arith.constant 11 : index
      %c0_7 = arith.constant 0 : index
      %14 = vector.load %arg13[%c11, %c0_7] : memref<32x128xf32, #tpu.memory_space<vmem>>, vector<16x128xf32>
      %15 = vector.broadcast %13 : vector<1x128xf32> to vector<16x128xf32>
      %16 = arith.mulf %15, %14 : vector<16x128xf32>
      %17 = arith.addf %12, %16 : vector<16x128xf32>
      %18 = vector.extract_strided_slice %7 {offsets = [1, 0], sizes = [1, 128], strides = [1, 1]} : vector<4x128xf32> to vector<1x128xf32>
      %c10 = arith.constant 10 : index
      %c0_8 = arith.constant 0 : index
      %19 = vector.load %arg13[%c10, %c0_8] : memref<32x128xf32, #tpu.memory_space<vmem>>, vector<16x128xf32>
      %20 = vector.broadcast %18 : vector<1x128xf32> to vector<16x128xf32>
      %21 = arith.mulf %20, %19 : vector<16x128xf32>
      %22 = arith.addf %17, %21 : vector<16x128xf32>
      %23 = vector.extract_strided_slice %7 {offsets = [2, 0], sizes = [1, 128], strides = [1, 1]} : vector<4x128xf32> to vector<1x128xf32>
      %c9 = arith.constant 9 : index
      %c0_9 = arith.constant 0 : index
      %24 = vector.load %arg13[%c9, %c0_9] : memref<32x128xf32, #tpu.memory_space<vmem>>, vector<16x128xf32>
      %25 = vector.broadcast %23 : vector<1x128xf32> to vector<16x128xf32>
      %26 = arith.mulf %25, %24 : vector<16x128xf32>
      %27 = arith.addf %22, %26 : vector<16x128xf32>
      %28 = vector.extract_strided_slice %7 {offsets = [3, 0], sizes = [1, 128], strides = [1, 1]} : vector<4x128xf32> to vector<1x128xf32>
      %c8 = arith.constant 8 : index
      %c0_10 = arith.constant 0 : index
      %29 = vector.load %arg13[%c8, %c0_10] : memref<32x128xf32, #tpu.memory_space<vmem>>, vector<16x128xf32>
      %30 = vector.broadcast %28 : vector<1x128xf32> to vector<16x128xf32>
      %31 = arith.mulf %30, %29 : vector<16x128xf32>
      %32 = arith.addf %27, %31 : vector<16x128xf32>
      %cst_11 = arith.constant 0.000000e+00 : f32
      %33 = vector.broadcast %cst_11 : f32 to vector<16x128xf32>
      %34 = arith.subf %33, %32 : vector<16x128xf32>
      %35 = math.exp %34 : vector<16x128xf32>
      %cst_12 = arith.constant 1.000000e+00 : f32
      %36 = vector.broadcast %cst_12 : f32 to vector<16x128xf32>
      %37 = arith.addf %36, %35 : vector<16x128xf32>
      %38 = tpu.reciprocal %37 {approx = true} : vector<16x128xf32> -> vector<16x128xf32>
      %39 = arith.mulf %32, %38 : vector<16x128xf32>
      %40 = arith.truncf %39 : vector<16x128xf32> to vector<16x128xbf16>
      %c0_13 = arith.constant 0 : index
      %c0_14 = arith.constant 0 : index
      %c0_15 = arith.constant 0 : index
      %41 = vector.load %arg7[%c0_13, %c0_14, %c0_15] : memref<1x128x36xbf16, #tpu.memory_space<vmem>>, vector<1x128x36xbf16>
      %42 = vector.shape_cast %41 : vector<1x128x36xbf16> to vector<128x36xbf16>
      %cst_16 = arith.constant dense<0.000000e+00> : vector<16x36xf32>
      %43 = tpu.matmul %40, %42, %cst_16 {dimension_numbers = #tpu.dot_dimension_numbers<[1], [0], [0], [1], [0, 0, 1, 1], [], []>} : vector<16x128xbf16>, vector<128x36xbf16>, vector<16x36xf32> -> vector<16x36xf32>
      %44 = vector.extract_strided_slice %43 {offsets = [0, 0], sizes = [16, 16], strides = [1, 1]} : vector<16x36xf32> to vector<16x16xf32>
      %45 = vector.extract_strided_slice %43 {offsets = [0, 16], sizes = [16, 16], strides = [1, 1]} : vector<16x36xf32> to vector<16x16xf32>
      %46 = vector.extract_strided_slice %43 {offsets = [0, 32], sizes = [16, 4], strides = [1, 1]} : vector<16x36xf32> to vector<16x4xf32>
      %c0_17 = arith.constant 0 : index
      %c0_18 = arith.constant 0 : index
      %c0_19 = arith.constant 0 : index
      %47 = vector.load %arg8[%c0_17, %c0_18, %c0_19] : memref<1x4x128xf32, #tpu.memory_space<vmem>>, vector<1x4x128xf32>
      %48 = vector.shape_cast %47 : vector<1x4x128xf32> to vector<4x128xf32>
      %cst_20 = arith.constant 0.000000e+00 : f32
      %49 = vector.broadcast %cst_20 : f32 to vector<16x128xf32>
      %c0_21 = arith.constant 0 : index
      %c0_22 = arith.constant 0 : index
      %c0_23 = arith.constant 0 : index
      %50 = vector.load %arg9[%c0_21, %c0_22, %c0_23] : memref<1x1x128xf32, #tpu.memory_space<vmem>>, vector<1x1x128xf32>
      %51 = vector.shape_cast %50 : vector<1x1x128xf32> to vector<1x128xf32>
      %52 = vector.broadcast %51 : vector<1x128xf32> to vector<16x128xf32>
      %53 = arith.addf %49, %52 : vector<16x128xf32>
      %54 = vector.extract_strided_slice %46 {offsets = [0, 0], sizes = [16, 1], strides = [1, 1]} : vector<16x4xf32> to vector<16x1xf32>
      %55 = vector.extract_strided_slice %48 {offsets = [0, 0], sizes = [1, 128], strides = [1, 1]} : vector<4x128xf32> to vector<1x128xf32>
      %56 = vector.broadcast %54 : vector<16x1xf32> to vector<16x128xf32>
      %57 = vector.broadcast %55 : vector<1x128xf32> to vector<16x128xf32>
      %58 = arith.mulf %56, %57 : vector<16x128xf32>
      %59 = arith.addf %53, %58 : vector<16x128xf32>
      %60 = vector.extract_strided_slice %46 {offsets = [0, 1], sizes = [16, 1], strides = [1, 1]} : vector<16x4xf32> to vector<16x1xf32>
      %61 = vector.extract_strided_slice %48 {offsets = [1, 0], sizes = [1, 128], strides = [1, 1]} : vector<4x128xf32> to vector<1x128xf32>
      %62 = vector.broadcast %60 : vector<16x1xf32> to vector<16x128xf32>
      %63 = vector.broadcast %61 : vector<1x128xf32> to vector<16x128xf32>
      %64 = arith.mulf %62, %63 : vector<16x128xf32>
      %65 = arith.addf %59, %64 : vector<16x128xf32>
      %66 = vector.extract_strided_slice %46 {offsets = [0, 2], sizes = [16, 1], strides = [1, 1]} : vector<16x4xf32> to vector<16x1xf32>
      %67 = vector.extract_strided_slice %48 {offsets = [2, 0], sizes = [1, 128], strides = [1, 1]} : vector<4x128xf32> to vector<1x128xf32>
      %68 = vector.broadcast %66 : vector<16x1xf32> to vector<16x128xf32>
      %69 = vector.broadcast %67 : vector<1x128xf32> to vector<16x128xf32>
      %70 = arith.mulf %68, %69 : vector<16x128xf32>
      %71 = arith.addf %65, %70 : vector<16x128xf32>
      %72 = vector.extract_strided_slice %46 {offsets = [0, 3], sizes = [16, 1], strides = [1, 1]} : vector<16x4xf32> to vector<16x1xf32>
      %73 = vector.extract_strided_slice %48 {offsets = [3, 0], sizes = [1, 128], strides = [1, 1]} : vector<4x128xf32> to vector<1x128xf32>
      %74 = vector.broadcast %72 : vector<16x1xf32> to vector<16x128xf32>
      %75 = vector.broadcast %73 : vector<1x128xf32> to vector<16x128xf32>
      %76 = arith.mulf %74, %75 : vector<16x128xf32>
      %77 = arith.addf %71, %76 : vector<16x128xf32>
      %cst_24 = arith.constant 2.000000e+01 : f32
      %78 = vector.broadcast %cst_24 : f32 to vector<16x128xf32>
      %79 = arith.cmpf ogt, %77, %78 : vector<16x128xf32>
      %cst_25 = arith.constant 2.000000e+01 : f32
      %80 = vector.broadcast %cst_25 : f32 to vector<16x128xf32>
      %81 = arith.minimumf %77, %80 : vector<16x128xf32>
      %82 = math.exp %81 : vector<16x128xf32>
      %cst_26 = arith.constant 1.000000e+00 : f32
      %83 = vector.broadcast %cst_26 : f32 to vector<16x128xf32>
      %84 = arith.addf %83, %82 : vector<16x128xf32>
      %85 = math.log %84 : vector<16x128xf32>
      %86 = arith.select %79, %77, %85 : vector<16x128xi1>, vector<16x128xf32>
      %c0_27 = arith.constant 0 : index
      %c0_28 = arith.constant 0 : index
      %c0_29 = arith.constant 0 : index
      %87 = vector.load %arg10[%c0_27, %c0_28, %c0_29] : memref<1x16x128xf32, #tpu.memory_space<vmem>>, vector<1x16x128xf32>
      %88 = vector.shape_cast %87 : vector<1x16x128xf32> to vector<16x128xf32>
      %89 = math.exp %88 : vector<16x128xf32>
      %cst_30 = arith.constant 0.000000e+00 : f32
      %90 = vector.broadcast %cst_30 : f32 to vector<16x128xf32>
      %91 = arith.subf %90, %89 : vector<16x128xf32>
      %92 = arith.mulf %86, %39 : vector<16x128xf32>
      %c0_31 = arith.constant 0 : index
      %c0_32 = arith.constant 0 : index
      %c0_33 = arith.constant 0 : index
      %93 = vector.load %arg11[%c0_31, %c0_32, %c0_33] : memref<1x1x128xf32, #tpu.memory_space<vmem>>, vector<1x1x128xf32>
      %94 = vector.shape_cast %93 : vector<1x1x128xf32> to vector<1x128xf32>
      %95 = vector.broadcast %94 : vector<1x128xf32> to vector<16x128xf32>
      %96 = arith.mulf %39, %95 : vector<16x128xf32>
      %cst_34 = arith.constant 0.000000e+00 : f32
      %97 = vector.broadcast %cst_34 : f32 to vector<16x128xf32>
      %98 = vector.extract_strided_slice %86 {offsets = [8, 0], sizes = [8, 128], strides = [1, 1]} : vector<16x128xf32> to vector<8x128xf32>
      %99 = vector.shape_cast %98 : vector<8x128xf32> to vector<8x1x128xf32>
      %100 = vector.shape_cast %91 : vector<16x128xf32> to vector<1x16x128xf32>
      %101 = vector.broadcast %99 : vector<8x1x128xf32> to vector<8x16x128xf32>
      %102 = vector.broadcast %100 : vector<1x16x128xf32> to vector<8x16x128xf32>
      %103 = arith.mulf %101, %102 : vector<8x16x128xf32>
      %104 = math.exp %103 : vector<8x16x128xf32>
      %c0_35 = arith.constant 0 : index
      %c0_36 = arith.constant 0 : index
      %c0_37 = arith.constant 0 : index
      %105 = vector.load %arg16[%c0_35, %c0_36, %c0_37] : memref<8x16x128xf32, #tpu.memory_space<vmem>>, vector<8x16x128xf32>
      tpu.vector_store %arg16[%c0_35, %c0_36, %c0_37], %104 {strides = array<i32>} : memref<8x16x128xf32, #tpu.memory_space<vmem>>, vector<8x16x128xf32>,
      %106 = vector.extract_strided_slice %92 {offsets = [8, 0], sizes = [8, 128], strides = [1, 1]} : vector<16x128xf32> to vector<8x128xf32>
      %107 = vector.shape_cast %106 : vector<8x128xf32> to vector<8x1x128xf32>
      %108 = vector.extract_strided_slice %44 {offsets = [8, 0], sizes = [8, 16], strides = [1, 1]} : vector<16x16xf32> to vector<8x16xf32>
      %109 = vector.shape_cast %108 : vector<8x16xf32> to vector<8x16x1xf32>
      %110 = vector.broadcast %107 : vector<8x1x128xf32> to vector<8x16x128xf32>
      %111 = vector.broadcast %109 : vector<8x16x1xf32> to vector<8x16x128xf32>
      %112 = arith.mulf %110, %111 : vector<8x16x128xf32>
      %c0_38 = arith.constant 0 : index
      %c0_39 = arith.constant 0 : index
      %c0_40 = arith.constant 0 : index
      %113 = vector.load %arg17[%c0_38, %c0_39, %c0_40] : memref<8x16x128xf32, #tpu.memory_space<vmem>>, vector<8x16x128xf32>
      tpu.vector_store %arg17[%c0_38, %c0_39, %c0_40], %112 {strides = array<i32>} : memref<8x16x128xf32, #tpu.memory_space<vmem>>, vector<8x16x128xf32>,
      %c0_i32_41 = arith.constant 0 : i32
      %c8_i32 = arith.constant 8 : i32
      %114 = arith.muli %c0_i32_41, %c8_i32 : i32
      %c-1_i32 = arith.constant -1 : i32
      %115 = arith.muli %c-1_i32, %114 : i32
      %c7_i32 = arith.constant 7 : i32
      %116 = arith.addi %c7_i32, %115 : i32
      %c0_i32_42 = arith.constant 0 : i32
      %117 = arith.addi %116, %c0_i32_42 : i32
      %118 = arith.index_cast %117 : i32 to index
      %c0_43 = arith.constant 0 : index
      %c0_44 = arith.constant 0 : index
      %119 = vector.load %arg16[%118, %c0_43, %c0_44] : memref<8x16x128xf32, #tpu.memory_space<vmem>>, vector<1x16x128xf32>
      %120 = vector.shape_cast %119 : vector<1x16x128xf32> to vector<16x128xf32>
      %121 = arith.mulf %120, %97 : vector<16x128xf32>
      %122 = arith.index_cast %117 : i32 to index
      %c0_45 = arith.constant 0 : index
      %c0_46 = arith.constant 0 : index
      %123 = vector.load %arg17[%122, %c0_45, %c0_46] : memref<8x16x128xf32, #tpu.memory_space<vmem>>, vector<1x16x128xf32>
      %124 = vector.shape_cast %123 : vector<1x16x128xf32> to vector<16x128xf32>
      %125 = arith.addf %121, %124 : vector<16x128xf32>
      %126 = arith.index_cast %117 : i32 to index
      %c0_47 = arith.constant 0 : index
      %c0_48 = arith.constant 0 : index
      %127 = vector.load %arg17[%126, %c0_47, %c0_48] : memref<8x16x128xf32, #tpu.memory_space<vmem>>, vector<1x16x128xf32>
      %128 = vector.shape_cast %127 : vector<1x16x128xf32> to vector<16x128xf32>
      %129 = vector.shape_cast %125 : vector<16x128xf32> to vector<1x16x128xf32>
      tpu.vector_store %arg17[%126, %c0_47, %c0_48], %129 {strides = array<i32>} : memref<8x16x128xf32, #tpu.memory_space<vmem>>, vector<1x16x128xf32>,
      %c-1_i32_49 = arith.constant -1 : i32
      %130 = arith.addi %116, %c-1_i32_49 : i32
      %131 = arith.index_cast %130 : i32 to index
      %c0_50 = arith.constant 0 : index
      %c0_51 = arith.constant 0 : index
      %132 = vector.load %arg16[%131, %c0_50, %c0_51] : memref<8x16x128xf32, #tpu.memory_space<vmem>>, vector<1x16x128xf32>
      %133 = vector.shape_cast %132 : vector<1x16x128xf32> to vector<16x128xf32>
      %134 = arith.mulf %133, %125 : vector<16x128xf32>
      %135 = arith.index_cast %130 : i32 to index
      %c0_52 = arith.constant 0 : index
      %c0_53 = arith.constant 0 : index
      %136 = vector.load %arg17[%135, %c0_52, %c0_53] : memref<8x16x128xf32, #tpu.memory_space<vmem>>, vector<1x16x128xf32>
      %137 = vector.shape_cast %136 : vector<1x16x128xf32> to vector<16x128xf32>
      %138 = arith.addf %134, %137 : vector<16x128xf32>
      %139 = arith.index_cast %130 : i32 to index
      %c0_54 = arith.constant 0 : index
      %c0_55 = arith.constant 0 : index
      %140 = vector.load %arg17[%139, %c0_54, %c0_55] : memref<8x16x128xf32, #tpu.memory_space<vmem>>, vector<1x16x128xf32>
      %141 = vector.shape_cast %140 : vector<1x16x128xf32> to vector<16x128xf32>
      %142 = vector.shape_cast %138 : vector<16x128xf32> to vector<1x16x128xf32>
      tpu.vector_store %arg17[%139, %c0_54, %c0_55], %142 {strides = array<i32>} : memref<8x16x128xf32, #tpu.memory_space<vmem>>, vector<1x16x128xf32>,
      %c-2_i32 = arith.constant -2 : i32
      %143 = arith.addi %116, %c-2_i32 : i32
      %144 = arith.index_cast %143 : i32 to index
      %c0_56 = arith.constant 0 : index
      %c0_57 = arith.constant 0 : index
      %145 = vector.load %arg16[%144, %c0_56, %c0_57] : memref<8x16x128xf32, #tpu.memory_space<vmem>>, vector<1x16x128xf32>
      %146 = vector.shape_cast %145 : vector<1x16x128xf32> to vector<16x128xf32>
      %147 = arith.mulf %146, %138 : vector<16x128xf32>
      %148 = arith.index_cast %143 : i32 to index
      %c0_58 = arith.constant 0 : index
      %c0_59 = arith.constant 0 : index
      %149 = vector.load %arg17[%148, %c0_58, %c0_59] : memref<8x16x128xf32, #tpu.memory_space<vmem>>, vector<1x16x128xf32>
      %150 = vector.shape_cast %149 : vector<1x16x128xf32> to vector<16x128xf32>
      %151 = arith.addf %147, %150 : vector<16x128xf32>
      %152 = arith.index_cast %143 : i32 to index
      %c0_60 = arith.constant 0 : index
      %c0_61 = arith.constant 0 : index
      %153 = vector.load %arg17[%152, %c0_60, %c0_61] : memref<8x16x128xf32, #tpu.memory_space<vmem>>, vector<1x16x128xf32>
      %154 = vector.shape_cast %153 : vector<1x16x128xf32> to vector<16x128xf32>
      %155 = vector.shape_cast %151 : vector<16x128xf32> to vector<1x16x128xf32>
      tpu.vector_store %arg17[%152, %c0_60, %c0_61], %155 {strides = array<i32>} : memref<8x16x128xf32, #tpu.memory_space<vmem>>, vector<1x16x128xf32>,
      %c-3_i32 = arith.constant -3 : i32
      %156 = arith.addi %116, %c-3_i32 : i32
      %157 = arith.index_cast %156 : i32 to index
      %c0_62 = arith.constant 0 : index
      %c0_63 = arith.constant 0 : index
      %158 = vector.load %arg16[%157, %c0_62, %c0_63] : memref<8x16x128xf32, #tpu.memory_space<vmem>>, vector<1x16x128xf32>
      %159 = vector.shape_cast %158 : vector<1x16x128xf32> to vector<16x128xf32>
      %160 = arith.mulf %159, %151 : vector<16x128xf32>
      %161 = arith.index_cast %156 : i32 to index
      %c0_64 = arith.constant 0 : index
      %c0_65 = arith.constant 0 : index
      %162 = vector.load %arg17[%161, %c0_64, %c0_65] : memref<8x16x128xf32, #tpu.memory_space<vmem>>, vector<1x16x128xf32>
      %163 = vector.shape_cast %162 : vector<1x16x128xf32> to vector<16x128xf32>
      %164 = arith.addf %160, %163 : vector<16x128xf32>
      %165 = arith.index_cast %156 : i32 to index
      %c0_66 = arith.constant 0 : index
      %c0_67 = arith.constant 0 : index
      %166 = vector.load %arg17[%165, %c0_66, %c0_67] : memref<8x16x128xf32, #tpu.memory_space<vmem>>, vector<1x16x128xf32>
      %167 = vector.shape_cast %166 : vector<1x16x128xf32> to vector<16x128xf32>
      %168 = vector.shape_cast %164 : vector<16x128xf32> to vector<1x16x128xf32>
      tpu.vector_store %arg17[%165, %c0_66, %c0_67], %168 {strides = array<i32>} : memref<8x16x128xf32, #tpu.memory_space<vmem>>, vector<1x16x128xf32>,
      %c-4_i32 = arith.constant -4 : i32
      %169 = arith.addi %116, %c-4_i32 : i32
      %170 = arith.index_cast %169 : i32 to index
      %c0_68 = arith.constant 0 : index
      %c0_69 = arith.constant 0 : index
      %171 = vector.load %arg16[%170, %c0_68, %c0_69] : memref<8x16x128xf32, #tpu.memory_space<vmem>>, vector<1x16x128xf32>
      %172 = vector.shape_cast %171 : vector<1x16x128xf32> to vector<16x128xf32>
      %173 = arith.mulf %172, %164 : vector<16x128xf32>
      %174 = arith.index_cast %169 : i32 to index
      %c0_70 = arith.constant 0 : index
      %c0_71 = arith.constant 0 : index
      %175 = vector.load %arg17[%174, %c0_70, %c0_71] : memref<8x16x128xf32, #tpu.memory_space<vmem>>, vector<1x16x128xf32>
      %176 = vector.shape_cast %175 : vector<1x16x128xf32> to vector<16x128xf32>
      %177 = arith.addf %173, %176 : vector<16x128xf32>
      %178 = arith.index_cast %169 : i32 to index
      %c0_72 = arith.constant 0 : index
      %c0_73 = arith.constant 0 : index
      %179 = vector.load %arg17[%178, %c0_72, %c0_73] : memref<8x16x128xf32, #tpu.memory_space<vmem>>, vector<1x16x128xf32>
      %180 = vector.shape_cast %179 : vector<1x16x128xf32> to vector<16x128xf32>
      %181 = vector.shape_cast %177 : vector<16x128xf32> to vector<1x16x128xf32>
      tpu.vector_store %arg17[%178, %c0_72, %c0_73], %181 {strides = array<i32>} : memref<8x16x128xf32, #tpu.memory_space<vmem>>, vector<1x16x128xf32>,
      %c-5_i32 = arith.constant -5 : i32
      %182 = arith.addi %116, %c-5_i32 : i32
      %183 = arith.index_cast %182 : i32 to index
      %c0_74 = arith.constant 0 : index
      %c0_75 = arith.constant 0 : index
      %184 = vector.load %arg16[%183, %c0_74, %c0_75] : memref<8x16x128xf32, #tpu.memory_space<vmem>>, vector<1x16x128xf32>
      %185 = vector.shape_cast %184 : vector<1x16x128xf32> to vector<16x128xf32>
      %186 = arith.mulf %185, %177 : vector<16x128xf32>
      %187 = arith.index_cast %182 : i32 to index
      %c0_76 = arith.constant 0 : index
      %c0_77 = arith.constant 0 : index
      %188 = vector.load %arg17[%187, %c0_76, %c0_77] : memref<8x16x128xf32, #tpu.memory_space<vmem>>, vector<1x16x128xf32>
      %189 = vector.shape_cast %188 : vector<1x16x128xf32> to vector<16x128xf32>
      %190 = arith.addf %186, %189 : vector<16x128xf32>
      %191 = arith.index_cast %182 : i32 to index
      %c0_78 = arith.constant 0 : index
      %c0_79 = arith.constant 0 : index
      %192 = vector.load %arg17[%191, %c0_78, %c0_79] : memref<8x16x128xf32, #tpu.memory_space<vmem>>, vector<1x16x128xf32>
      %193 = vector.shape_cast %192 : vector<1x16x128xf32> to vector<16x128xf32>
      %194 = vector.shape_cast %190 : vector<16x128xf32> to vector<1x16x128xf32>
      tpu.vector_store %arg17[%191, %c0_78, %c0_79], %194 {strides = array<i32>} : memref<8x16x128xf32, #tpu.memory_space<vmem>>, vector<1x16x128xf32>,
      %c-6_i32 = arith.constant -6 : i32
      %195 = arith.addi %116, %c-6_i32 : i32
      %196 = arith.index_cast %195 : i32 to index
      %c0_80 = arith.constant 0 : index
      %c0_81 = arith.constant 0 : index
      %197 = vector.load %arg16[%196, %c0_80, %c0_81] : memref<8x16x128xf32, #tpu.memory_space<vmem>>, vector<1x16x128xf32>
      %198 = vector.shape_cast %197 : vector<1x16x128xf32> to vector<16x128xf32>
      %199 = arith.mulf %198, %190 : vector<16x128xf32>
      %200 = arith.index_cast %195 : i32 to index
      %c0_82 = arith.constant 0 : index
      %c0_83 = arith.constant 0 : index
      %201 = vector.load %arg17[%200, %c0_82, %c0_83] : memref<8x16x128xf32, #tpu.memory_space<vmem>>, vector<1x16x128xf32>
      %202 = vector.shape_cast %201 : vector<1x16x128xf32> to vector<16x128xf32>
      %203 = arith.addf %199, %202 : vector<16x128xf32>
      %204 = arith.index_cast %195 : i32 to index
      %c0_84 = arith.constant 0 : index
      %c0_85 = arith.constant 0 : index
      %205 = vector.load %arg17[%204, %c0_84, %c0_85] : memref<8x16x128xf32, #tpu.memory_space<vmem>>, vector<1x16x128xf32>
      %206 = vector.shape_cast %205 : vector<1x16x128xf32> to vector<16x128xf32>
      %207 = vector.shape_cast %203 : vector<16x128xf32> to vector<1x16x128xf32>
      tpu.vector_store %arg17[%204, %c0_84, %c0_85], %207 {strides = array<i32>} : memref<8x16x128xf32, #tpu.memory_space<vmem>>, vector<1x16x128xf32>,
      %c-7_i32 = arith.constant -7 : i32
      %208 = arith.addi %116, %c-7_i32 : i32
      %209 = arith.index_cast %208 : i32 to index
      %c0_86 = arith.constant 0 : index
      %c0_87 = arith.constant 0 : index
      %210 = vector.load %arg16[%209, %c0_86, %c0_87] : memref<8x16x128xf32, #tpu.memory_space<vmem>>, vector<1x16x128xf32>
      %211 = vector.shape_cast %210 : vector<1x16x128xf32> to vector<16x128xf32>
      %212 = arith.mulf %211, %203 : vector<16x128xf32>
      %213 = arith.index_cast %208 : i32 to index
      %c0_88 = arith.constant 0 : index
      %c0_89 = arith.constant 0 : index
      %214 = vector.load %arg17[%213, %c0_88, %c0_89] : memref<8x16x128xf32, #tpu.memory_space<vmem>>, vector<1x16x128xf32>
      %215 = vector.shape_cast %214 : vector<1x16x128xf32> to vector<16x128xf32>
      %216 = arith.addf %212, %215 : vector<16x128xf32>
      %217 = arith.index_cast %208 : i32 to index
      %c0_90 = arith.constant 0 : index
      %c0_91 = arith.constant 0 : index
      %218 = vector.load %arg17[%217, %c0_90, %c0_91] : memref<8x16x128xf32, #tpu.memory_space<vmem>>, vector<1x16x128xf32>
      %219 = vector.shape_cast %218 : vector<1x16x128xf32> to vector<16x128xf32>
      %220 = vector.shape_cast %216 : vector<16x128xf32> to vector<1x16x128xf32>
      tpu.vector_store %arg17[%217, %c0_90, %c0_91], %220 {strides = array<i32>} : memref<8x16x128xf32, #tpu.memory_space<vmem>>, vector<1x16x128xf32>,
      %c1_i32_92 = arith.constant 1 : i32
      %c0_93 = arith.constant 0 : index
      %c0_94 = arith.constant 0 : index
      %c0_95 = arith.constant 0 : index
      %221 = vector.load %arg17[%c0_93, %c0_94, %c0_95] : memref<8x16x128xf32, #tpu.memory_space<vmem>>, vector<8x16x128xf32>
      %222 = vector.extract_strided_slice %45 {offsets = [8, 0], sizes = [8, 16], strides = [1, 1]} : vector<16x16xf32> to vector<8x16xf32>
      %223 = vector.shape_cast %222 : vector<8x16xf32> to vector<8x16x1xf32>
      %224 = vector.broadcast %223 : vector<8x16x1xf32> to vector<8x16x128xf32>
      %225 = arith.mulf %221, %224 : vector<8x16x128xf32>
      %cst_96 = arith.constant dense<0.000000e+00> : vector<8x128xf32>
      %226 = vector.multi_reduction <add>, %225, %cst_96 [1] : vector<8x16x128xf32> to vector<8x128xf32>
      %227 = vector.extract_strided_slice %96 {offsets = [8, 0], sizes = [8, 128], strides = [1, 1]} : vector<16x128xf32> to vector<8x128xf32>
      %228 = arith.addf %226, %227 : vector<8x128xf32>
      %c8_97 = arith.constant 8 : index
      %c0_98 = arith.constant 0 : index
      %229 = vector.load %arg15[%c8_97, %c0_98] : memref<16x128xf32, #tpu.memory_space<vmem>>, vector<8x128xf32>
      %230 = arith.addf %229, %228 : vector<8x128xf32>
      %c8_99 = arith.constant 8 : index
      %c0_100 = arith.constant 0 : index
      %231 = vector.load %arg15[%c8_99, %c0_100] : memref<16x128xf32, #tpu.memory_space<vmem>>, vector<8x128xf32>
      tpu.vector_store %arg15[%c8_99, %c0_100], %230 {strides = array<i32>} : memref<16x128xf32, #tpu.memory_space<vmem>>, vector<8x128xf32>,
      %232 = vector.extract_strided_slice %86 {offsets = [0, 0], sizes = [8, 128], strides = [1, 1]} : vector<16x128xf32> to vector<8x128xf32>
      %233 = vector.shape_cast %232 : vector<8x128xf32> to vector<8x1x128xf32>
      %234 = vector.shape_cast %91 : vector<16x128xf32> to vector<1x16x128xf32>
      %235 = vector.broadcast %233 : vector<8x1x128xf32> to vector<8x16x128xf32>
      %236 = vector.broadcast %234 : vector<1x16x128xf32> to vector<8x16x128xf32>
      %237 = arith.mulf %235, %236 : vector<8x16x128xf32>
      %238 = math.exp %237 : vector<8x16x128xf32>
      %c0_101 = arith.constant 0 : index
      %c0_102 = arith.constant 0 : index
      %c0_103 = arith.constant 0 : index
      %239 = vector.load %arg16[%c0_101, %c0_102, %c0_103] : memref<8x16x128xf32, #tpu.memory_space<vmem>>, vector<8x16x128xf32>
      tpu.vector_store %arg16[%c0_101, %c0_102, %c0_103], %238 {strides = array<i32>} : memref<8x16x128xf32, #tpu.memory_space<vmem>>, vector<8x16x128xf32>,
      %240 = vector.extract_strided_slice %92 {offsets = [0, 0], sizes = [8, 128], strides = [1, 1]} : vector<16x128xf32> to vector<8x128xf32>
      %241 = vector.shape_cast %240 : vector<8x128xf32> to vector<8x1x128xf32>
      %242 = vector.extract_strided_slice %44 {offsets = [0, 0], sizes = [8, 16], strides = [1, 1]} : vector<16x16xf32> to vector<8x16xf32>
      %243 = vector.shape_cast %242 : vector<8x16xf32> to vector<8x16x1xf32>
      %244 = vector.broadcast %241 : vector<8x1x128xf32> to vector<8x16x128xf32>
      %245 = vector.broadcast %243 : vector<8x16x1xf32> to vector<8x16x128xf32>
      %246 = arith.mulf %244, %245 : vector<8x16x128xf32>
      %c0_104 = arith.constant 0 : index
      %c0_105 = arith.constant 0 : index
      %c0_106 = arith.constant 0 : index
      %247 = vector.load %arg17[%c0_104, %c0_105, %c0_106] : memref<8x16x128xf32, #tpu.memory_space<vmem>>, vector<8x16x128xf32>
      tpu.vector_store %arg17[%c0_104, %c0_105, %c0_106], %246 {strides = array<i32>} : memref<8x16x128xf32, #tpu.memory_space<vmem>>, vector<8x16x128xf32>,
      %c0_i32_107 = arith.constant 0 : i32
      %c8_i32_108 = arith.constant 8 : i32
      %248 = arith.muli %c0_i32_107, %c8_i32_108 : i32
      %c-1_i32_109 = arith.constant -1 : i32
      %249 = arith.muli %c-1_i32_109, %248 : i32
      %c7_i32_110 = arith.constant 7 : i32
      %250 = arith.addi %c7_i32_110, %249 : i32
      %c0_i32_111 = arith.constant 0 : i32
      %251 = arith.addi %250, %c0_i32_111 : i32
      %252 = arith.index_cast %251 : i32 to index
      %c0_112 = arith.constant 0 : index
      %c0_113 = arith.constant 0 : index
      %253 = vector.load %arg16[%252, %c0_112, %c0_113] : memref<8x16x128xf32, #tpu.memory_space<vmem>>, vector<1x16x128xf32>
      %254 = vector.shape_cast %253 : vector<1x16x128xf32> to vector<16x128xf32>
      %255 = arith.mulf %254, %216 : vector<16x128xf32>
      %256 = arith.index_cast %251 : i32 to index
      %c0_114 = arith.constant 0 : index
      %c0_115 = arith.constant 0 : index
      %257 = vector.load %arg17[%256, %c0_114, %c0_115] : memref<8x16x128xf32, #tpu.memory_space<vmem>>, vector<1x16x128xf32>
      %258 = vector.shape_cast %257 : vector<1x16x128xf32> to vector<16x128xf32>
      %259 = arith.addf %255, %258 : vector<16x128xf32>
      %260 = arith.index_cast %251 : i32 to index
      %c0_116 = arith.constant 0 : index
      %c0_117 = arith.constant 0 : index
      %261 = vector.load %arg17[%260, %c0_116, %c0_117] : memref<8x16x128xf32, #tpu.memory_space<vmem>>, vector<1x16x128xf32>
      %262 = vector.shape_cast %261 : vector<1x16x128xf32> to vector<16x128xf32>
      %263 = vector.shape_cast %259 : vector<16x128xf32> to vector<1x16x128xf32>
      tpu.vector_store %arg17[%260, %c0_116, %c0_117], %263 {strides = array<i32>} : memref<8x16x128xf32, #tpu.memory_space<vmem>>, vector<1x16x128xf32>,
      %c-1_i32_118 = arith.constant -1 : i32
      %264 = arith.addi %250, %c-1_i32_118 : i32
      %265 = arith.index_cast %264 : i32 to index
      %c0_119 = arith.constant 0 : index
      %c0_120 = arith.constant 0 : index
      %266 = vector.load %arg16[%265, %c0_119, %c0_120] : memref<8x16x128xf32, #tpu.memory_space<vmem>>, vector<1x16x128xf32>
      %267 = vector.shape_cast %266 : vector<1x16x128xf32> to vector<16x128xf32>
      %268 = arith.mulf %267, %259 : vector<16x128xf32>
      %269 = arith.index_cast %264 : i32 to index
      %c0_121 = arith.constant 0 : index
      %c0_122 = arith.constant 0 : index
      %270 = vector.load %arg17[%269, %c0_121, %c0_122] : memref<8x16x128xf32, #tpu.memory_space<vmem>>, vector<1x16x128xf32>
      %271 = vector.shape_cast %270 : vector<1x16x128xf32> to vector<16x128xf32>
      %272 = arith.addf %268, %271 : vector<16x128xf32>
      %273 = arith.index_cast %264 : i32 to index
      %c0_123 = arith.constant 0 : index
      %c0_124 = arith.constant 0 : index
      %274 = vector.load %arg17[%273, %c0_123, %c0_124] : memref<8x16x128xf32, #tpu.memory_space<vmem>>, vector<1x16x128xf32>
      %275 = vector.shape_cast %274 : vector<1x16x128xf32> to vector<16x128xf32>
      %276 = vector.shape_cast %272 : vector<16x128xf32> to vector<1x16x128xf32>
      tpu.vector_store %arg17[%273, %c0_123, %c0_124], %276 {strides = array<i32>} : memref<8x16x128xf32, #tpu.memory_space<vmem>>, vector<1x16x128xf32>,
      %c-2_i32_125 = arith.constant -2 : i32
      %277 = arith.addi %250, %c-2_i32_125 : i32
      %278 = arith.index_cast %277 : i32 to index
      %c0_126 = arith.constant 0 : index
      %c0_127 = arith.constant 0 : index
      %279 = vector.load %arg16[%278, %c0_126, %c0_127] : memref<8x16x128xf32, #tpu.memory_space<vmem>>, vector<1x16x128xf32>
      %280 = vector.shape_cast %279 : vector<1x16x128xf32> to vector<16x128xf32>
      %281 = arith.mulf %280, %272 : vector<16x128xf32>
      %282 = arith.index_cast %277 : i32 to index
      %c0_128 = arith.constant 0 : index
      %c0_129 = arith.constant 0 : index
      %283 = vector.load %arg17[%282, %c0_128, %c0_129] : memref<8x16x128xf32, #tpu.memory_space<vmem>>, vector<1x16x128xf32>
      %284 = vector.shape_cast %283 : vector<1x16x128xf32> to vector<16x128xf32>
      %285 = arith.addf %281, %284 : vector<16x128xf32>
      %286 = arith.index_cast %277 : i32 to index
      %c0_130 = arith.constant 0 : index
      %c0_131 = arith.constant 0 : index
      %287 = vector.load %arg17[%286, %c0_130, %c0_131] : memref<8x16x128xf32, #tpu.memory_space<vmem>>, vector<1x16x128xf32>
      %288 = vector.shape_cast %287 : vector<1x16x128xf32> to vector<16x128xf32>
      %289 = vector.shape_cast %285 : vector<16x128xf32> to vector<1x16x128xf32>
      tpu.vector_store %arg17[%286, %c0_130, %c0_131], %289 {strides = array<i32>} : memref<8x16x128xf32, #tpu.memory_space<vmem>>, vector<1x16x128xf32>,
      %c-3_i32_132 = arith.constant -3 : i32
      %290 = arith.addi %250, %c-3_i32_132 : i32
      %291 = arith.index_cast %290 : i32 to index
      %c0_133 = arith.constant 0 : index
      %c0_134 = arith.constant 0 : index
      %292 = vector.load %arg16[%291, %c0_133, %c0_134] : memref<8x16x128xf32, #tpu.memory_space<vmem>>, vector<1x16x128xf32>
      %293 = vector.shape_cast %292 : vector<1x16x128xf32> to vector<16x128xf32>
      %294 = arith.mulf %293, %285 : vector<16x128xf32>
      %295 = arith.index_cast %290 : i32 to index
      %c0_135 = arith.constant 0 : index
      %c0_136 = arith.constant 0 : index
      %296 = vector.load %arg17[%295, %c0_135, %c0_136] : memref<8x16x128xf32, #tpu.memory_space<vmem>>, vector<1x16x128xf32>
      %297 = vector.shape_cast %296 : vector<1x16x128xf32> to vector<16x128xf32>
      %298 = arith.addf %294, %297 : vector<16x128xf32>
      %299 = arith.index_cast %290 : i32 to index
      %c0_137 = arith.constant 0 : index
      %c0_138 = arith.constant 0 : index
      %300 = vector.load %arg17[%299, %c0_137, %c0_138] : memref<8x16x128xf32, #tpu.memory_space<vmem>>, vector<1x16x128xf32>
      %301 = vector.shape_cast %300 : vector<1x16x128xf32> to vector<16x128xf32>
      %302 = vector.shape_cast %298 : vector<16x128xf32> to vector<1x16x128xf32>
      tpu.vector_store %arg17[%299, %c0_137, %c0_138], %302 {strides = array<i32>} : memref<8x16x128xf32, #tpu.memory_space<vmem>>, vector<1x16x128xf32>,
      %c-4_i32_139 = arith.constant -4 : i32
      %303 = arith.addi %250, %c-4_i32_139 : i32
      %304 = arith.index_cast %303 : i32 to index
      %c0_140 = arith.constant 0 : index
      %c0_141 = arith.constant 0 : index
      %305 = vector.load %arg16[%304, %c0_140, %c0_141] : memref<8x16x128xf32, #tpu.memory_space<vmem>>, vector<1x16x128xf32>
      %306 = vector.shape_cast %305 : vector<1x16x128xf32> to vector<16x128xf32>
      %307 = arith.mulf %306, %298 : vector<16x128xf32>
      %308 = arith.index_cast %303 : i32 to index
      %c0_142 = arith.constant 0 : index
      %c0_143 = arith.constant 0 : index
      %309 = vector.load %arg17[%308, %c0_142, %c0_143] : memref<8x16x128xf32, #tpu.memory_space<vmem>>, vector<1x16x128xf32>
      %310 = vector.shape_cast %309 : vector<1x16x128xf32> to vector<16x128xf32>
      %311 = arith.addf %307, %310 : vector<16x128xf32>
      %312 = arith.index_cast %303 : i32 to index
      %c0_144 = arith.constant 0 : index
      %c0_145 = arith.constant 0 : index
      %313 = vector.load %arg17[%312, %c0_144, %c0_145] : memref<8x16x128xf32, #tpu.memory_space<vmem>>, vector<1x16x128xf32>
      %314 = vector.shape_cast %313 : vector<1x16x128xf32> to vector<16x128xf32>
      %315 = vector.shape_cast %311 : vector<16x128xf32> to vector<1x16x128xf32>
      tpu.vector_store %arg17[%312, %c0_144, %c0_145], %315 {strides = array<i32>} : memref<8x16x128xf32, #tpu.memory_space<vmem>>, vector<1x16x128xf32>,
      %c-5_i32_146 = arith.constant -5 : i32
      %316 = arith.addi %250, %c-5_i32_146 : i32
      %317 = arith.index_cast %316 : i32 to index
      %c0_147 = arith.constant 0 : index
      %c0_148 = arith.constant 0 : index
      %318 = vector.load %arg16[%317, %c0_147, %c0_148] : memref<8x16x128xf32, #tpu.memory_space<vmem>>, vector<1x16x128xf32>
      %319 = vector.shape_cast %318 : vector<1x16x128xf32> to vector<16x128xf32>
      %320 = arith.mulf %319, %311 : vector<16x128xf32>
      %321 = arith.index_cast %316 : i32 to index
      %c0_149 = arith.constant 0 : index
      %c0_150 = arith.constant 0 : index
      %322 = vector.load %arg17[%321, %c0_149, %c0_150] : memref<8x16x128xf32, #tpu.memory_space<vmem>>, vector<1x16x128xf32>
      %323 = vector.shape_cast %322 : vector<1x16x128xf32> to vector<16x128xf32>
      %324 = arith.addf %320, %323 : vector<16x128xf32>
      %325 = arith.index_cast %316 : i32 to index
      %c0_151 = arith.constant 0 : index
      %c0_152 = arith.constant 0 : index
      %326 = vector.load %arg17[%325, %c0_151, %c0_152] : memref<8x16x128xf32, #tpu.memory_space<vmem>>, vector<1x16x128xf32>
      %327 = vector.shape_cast %326 : vector<1x16x128xf32> to vector<16x128xf32>
      %328 = vector.shape_cast %324 : vector<16x128xf32> to vector<1x16x128xf32>
      tpu.vector_store %arg17[%325, %c0_151, %c0_152], %328 {strides = array<i32>} : memref<8x16x128xf32, #tpu.memory_space<vmem>>, vector<1x16x128xf32>,
      %c-6_i32_153 = arith.constant -6 : i32
      %329 = arith.addi %250, %c-6_i32_153 : i32
      %330 = arith.index_cast %329 : i32 to index
      %c0_154 = arith.constant 0 : index
      %c0_155 = arith.constant 0 : index
      %331 = vector.load %arg16[%330, %c0_154, %c0_155] : memref<8x16x128xf32, #tpu.memory_space<vmem>>, vector<1x16x128xf32>
      %332 = vector.shape_cast %331 : vector<1x16x128xf32> to vector<16x128xf32>
      %333 = arith.mulf %332, %324 : vector<16x128xf32>
      %334 = arith.index_cast %329 : i32 to index
      %c0_156 = arith.constant 0 : index
      %c0_157 = arith.constant 0 : index
      %335 = vector.load %arg17[%334, %c0_156, %c0_157] : memref<8x16x128xf32, #tpu.memory_space<vmem>>, vector<1x16x128xf32>
      %336 = vector.shape_cast %335 : vector<1x16x128xf32> to vector<16x128xf32>
      %337 = arith.addf %333, %336 : vector<16x128xf32>
      %338 = arith.index_cast %329 : i32 to index
      %c0_158 = arith.constant 0 : index
      %c0_159 = arith.constant 0 : index
      %339 = vector.load %arg17[%338, %c0_158, %c0_159] : memref<8x16x128xf32, #tpu.memory_space<vmem>>, vector<1x16x128xf32>
      %340 = vector.shape_cast %339 : vector<1x16x128xf32> to vector<16x128xf32>
      %341 = vector.shape_cast %337 : vector<16x128xf32> to vector<1x16x128xf32>
      tpu.vector_store %arg17[%338, %c0_158, %c0_159], %341 {strides = array<i32>} : memref<8x16x128xf32, #tpu.memory_space<vmem>>, vector<1x16x128xf32>,
      %c-7_i32_160 = arith.constant -7 : i32
      %342 = arith.addi %250, %c-7_i32_160 : i32
      %343 = arith.index_cast %342 : i32 to index
      %c0_161 = arith.constant 0 : index
      %c0_162 = arith.constant 0 : index
      %344 = vector.load %arg16[%343, %c0_161, %c0_162] : memref<8x16x128xf32, #tpu.memory_space<vmem>>, vector<1x16x128xf32>
      %345 = vector.shape_cast %344 : vector<1x16x128xf32> to vector<16x128xf32>
      %346 = arith.mulf %345, %337 : vector<16x128xf32>
      %347 = arith.index_cast %342 : i32 to index
      %c0_163 = arith.constant 0 : index
      %c0_164 = arith.constant 0 : index
      %348 = vector.load %arg17[%347, %c0_163, %c0_164] : memref<8x16x128xf32, #tpu.memory_space<vmem>>, vector<1x16x128xf32>
      %349 = vector.shape_cast %348 : vector<1x16x128xf32> to vector<16x128xf32>
      %350 = arith.addf %346, %349 : vector<16x128xf32>
      %351 = arith.index_cast %342 : i32 to index
      %c0_165 = arith.constant 0 : index
      %c0_166 = arith.constant 0 : index
      %352 = vector.load %arg17[%351, %c0_165, %c0_166] : memref<8x16x128xf32, #tpu.memory_space<vmem>>, vector<1x16x128xf32>
      %353 = vector.shape_cast %352 : vector<1x16x128xf32> to vector<16x128xf32>
      %354 = vector.shape_cast %350 : vector<16x128xf32> to vector<1x16x128xf32>
      tpu.vector_store %arg17[%351, %c0_165, %c0_166], %354 {strides = array<i32>} : memref<8x16x128xf32, #tpu.memory_space<vmem>>, vector<1x16x128xf32>,
      %c1_i32_167 = arith.constant 1 : i32
      %c0_168 = arith.constant 0 : index
      %c0_169 = arith.constant 0 : index
      %c0_170 = arith.constant 0 : index
      %355 = vector.load %arg17[%c0_168, %c0_169, %c0_170] : memref<8x16x128xf32, #tpu.memory_space<vmem>>, vector<8x16x128xf32>
      %356 = vector.extract_strided_slice %45 {offsets = [0, 0], sizes = [8, 16], strides = [1, 1]} : vector<16x16xf32> to vector<8x16xf32>
      %357 = vector.shape_cast %356 : vector<8x16xf32> to vector<8x16x1xf32>
      %358 = vector.broadcast %357 : vector<8x16x1xf32> to vector<8x16x128xf32>
      %359 = arith.mulf %355, %358 : vector<8x16x128xf32>
      %cst_171 = arith.constant dense<0.000000e+00> : vector<8x128xf32>
      %360 = vector.multi_reduction <add>, %359, %cst_171 [1] : vector<8x16x128xf32> to vector<8x128xf32>
      %361 = vector.extract_strided_slice %96 {offsets = [0, 0], sizes = [8, 128], strides = [1, 1]} : vector<16x128xf32> to vector<8x128xf32>
      %362 = arith.addf %360, %361 : vector<8x128xf32>
      %c0_172 = arith.constant 0 : index
      %c0_173 = arith.constant 0 : index
      %363 = vector.load %arg15[%c0_172, %c0_173] : memref<16x128xf32, #tpu.memory_space<vmem>>, vector<8x128xf32>
      %364 = arith.addf %363, %362 : vector<8x128xf32>
      %c0_174 = arith.constant 0 : index
      %c0_175 = arith.constant 0 : index
      %365 = vector.load %arg15[%c0_174, %c0_175] : memref<16x128xf32, #tpu.memory_space<vmem>>, vector<8x128xf32>
      tpu.vector_store %arg15[%c0_174, %c0_175], %364 {strides = array<i32>} : memref<16x128xf32, #tpu.memory_space<vmem>>, vector<8x128xf32>,
      %c0_176 = arith.constant 0 : index
      %c0_177 = arith.constant 0 : index
      %366 = vector.load %arg15[%c0_176, %c0_177] : memref<16x128xf32, #tpu.memory_space<vmem>>, vector<16x128xf32>
      %c0_178 = arith.constant 0 : index
      %c0_179 = arith.constant 0 : index
      %367 = vector.load %arg14[%c0_178, %c0_179] : memref<16x128xf32, #tpu.memory_space<vmem>>, vector<16x128xf32>
      %368 = arith.mulf %366, %367 : vector<16x128xf32>
      %369 = arith.truncf %368 : vector<16x128xf32> to vector<16x128xbf16>
      %c0_180 = arith.constant 0 : index
      %c0_181 = arith.constant 0 : index
      %370 = vector.load %arg4[%c0_180, %c0_181] : memref<128x64xbf16, #tpu.memory_space<vmem>>, vector<128x64xbf16>
      %cst_182 = arith.constant dense<0.000000e+00> : vector<16x64xf32>
      %371 = tpu.matmul %369, %370, %cst_182 {dimension_numbers = #tpu.dot_dimension_numbers<[1], [0], [0], [1], [0, 0, 1, 1], [], []>} : vector<16x128xbf16>, vector<128x64xbf16>, vector<16x64xf32> -> vector<16x64xf32>
      %c0_183 = arith.constant 0 : index
      %c0_184 = arith.constant 0 : index
      %c0_185 = arith.constant 0 : index
      %372 = vector.load %arg12[%c0_183, %c0_184, %c0_185] : memref<1x16x64xf32, #tpu.memory_space<vmem>>, vector<1x16x64xf32>
      %373 = vector.shape_cast %372 : vector<1x16x64xf32> to vector<16x64xf32>
      %374 = vector.shape_cast %371 : vector<16x64xf32> to vector<1x16x64xf32>
      tpu.vector_store %arg12[%c0_183, %c0_184, %c0_185], %374 {strides = array<i32>} : memref<1x16x64xf32, #tpu.memory_space<vmem>>, vector<1x16x64xf32>,
    } else {
    }
    return
  }
  func.func @transform_0(%arg0: i32, %arg1: i32) -> (i32, i32, i32) {
    %c0_i32 = arith.constant 0 : i32
    %c0_i32_0 = arith.constant 0 : i32
    %c0_i32_1 = arith.constant 0 : i32
    return %arg0, %c0_i32, %c0_i32_0 : i32, i32, i32
  }
  func.func @transform_1(%arg0: i32, %arg1: i32) -> (i32, i32) {
    %c0_i32 = arith.constant 0 : i32
    %c0_i32_0 = arith.constant 0 : i32
    %c0_i32_1 = arith.constant 0 : i32
    return %c0_i32, %c0_i32_0 : i32, i32
  }
  func.func @transform_2(%arg0: i32, %arg1: i32) -> (i32, i32) {
    %c0_i32 = arith.constant 0 : i32
    %c0_i32_0 = arith.constant 0 : i32
    %c0_i32_1 = arith.constant 0 : i32
    return %c0_i32, %c0_i32_0 : i32, i32
  }
  func.func @transform_3(%arg0: i32, %arg1: i32) -> (i32, i32, i32) {
    %c0_i32 = arith.constant 0 : i32
    %c0_i32_0 = arith.constant 0 : i32
    %c0_i32_1 = arith.constant 0 : i32
    return %arg1, %c0_i32, %c0_i32_0 : i32, i32, i32
  }
  func.func @transform_4(%arg0: i32, %arg1: i32) -> (i32, i32, i32) {
    %c0_i32 = arith.constant 0 : i32
    %c0_i32_0 = arith.constant 0 : i32
    %c0_i32_1 = arith.constant 0 : i32
    return %arg1, %c0_i32, %c0_i32_0 : i32, i32, i32
  }
  func.func @transform_5(%arg0: i32, %arg1: i32) -> (i32, i32, i32) {
    %c0_i32 = arith.constant 0 : i32
    %c0_i32_0 = arith.constant 0 : i32
    %c0_i32_1 = arith.constant 0 : i32
    return %arg1, %c0_i32, %c0_i32_0 : i32, i32, i32
  }
  func.func @transform_6(%arg0: i32, %arg1: i32) -> (i32, i32, i32) {
    %c0_i32 = arith.constant 0 : i32
    %c0_i32_0 = arith.constant 0 : i32
    %c0_i32_1 = arith.constant 0 : i32
    return %arg1, %c0_i32, %c0_i32_0 : i32, i32, i32
  }
  func.func @transform_7(%arg0: i32, %arg1: i32) -> (i32, i32, i32) {
    %c0_i32 = arith.constant 0 : i32
    %c0_i32_0 = arith.constant 0 : i32
    %c0_i32_1 = arith.constant 0 : i32
    return %arg1, %c0_i32, %c0_i32_0 : i32, i32, i32
  }
  func.func @transform_8(%arg0: i32, %arg1: i32) -> (i32, i32, i32) {
    %c0_i32 = arith.constant 0 : i32
    %c0_i32_0 = arith.constant 0 : i32
    %c0_i32_1 = arith.constant 0 : i32
    return %arg1, %c0_i32, %c0_i32_0 : i32, i32, i32
  }
  func.func @transform_9(%arg0: i32, %arg1: i32) -> (i32, i32, i32) {
    %c0_i32 = arith.constant 0 : i32
    %c0_i32_0 = arith.constant 0 : i32
    %c0_i32_1 = arith.constant 0 : i32
    return %arg1, %c0_i32, %c0_i32_0 : i32, i32, i32
  }
  func.func @transform_10(%arg0: i32, %arg1: i32) -> (i32, i32, i32) {
    %c0_i32 = arith.constant 0 : i32
    %c0_i32_0 = arith.constant 0 : i32
    %c0_i32_1 = arith.constant 0 : i32
    return %arg0, %c0_i32, %c0_i32_0 : i32, i32, i32
  }
}

</mosaic_0001>

<llo_original>
// kernel: tpu_custom_call.1
$region0: #{tpu_custom_call.1}
  #allocation0 [shape = 'u32[]', space=smem, size = 0x4, offset = 0x4, fixed_abs, tag = 'smem constant byte address 0x4 - core index']
  #allocation1 [shape = 'u32[144,128]{1,0:T(1,128)}', space=vmem, size = 0x12000, scoped, tag = 'internal scratch']
  #allocation2 [shape = 'f32[32,128]{1,0:T(8,128)}', space=vmem, size = 0x4000, scoped, tag = 'scratch operand']
  #allocation3 [shape = 'f32[16,128]{1,0:T(8,128)}', space=vmem, size = 0x2000, scoped, tag = 'scratch operand']
  #allocation4 [shape = 'f32[16,128]{1,0:T(8,128)}', space=vmem, size = 0x2000, scoped, tag = 'scratch operand']
  #allocation5 [shape = 'f32[8,16,128]{2,1,0:T(8,128)}', space=vmem, size = 0x10000, scoped, tag = 'scratch operand']
  #allocation6 [shape = 'f32[8,16,128]{2,1,0:T(8,128)}', space=vmem, size = 0x10000, scoped, tag = 'scratch operand']
  %s0 = inlined_call_operand.vmem [shape: bf16[2,16,64], index: 0, kind: input, shape index: {}]
  %s1 = inlined_call_operand.vmem [shape: bf16[64,256], index: 1, kind: input, shape index: {}]
  %s2 = inlined_call_operand.vmem [shape: bf16[128,64], index: 2, kind: input, shape index: {}]
  %s3 = inlined_call_operand.vmem [shape: f32[2,4,128], index: 3, kind: input, shape index: {}]
  %s4 = inlined_call_operand.vmem [shape: f32[2,1,128], index: 4, kind: input, shape index: {}]
  %s5 = inlined_call_operand.vmem [shape: bf16[2,128,36], index: 5, kind: input, shape index: {}]
  %s6 = inlined_call_operand.vmem [shape: f32[2,4,128], index: 6, kind: input, shape index: {}]
  %s7 = inlined_call_operand.vmem [shape: f32[2,1,128], index: 7, kind: input, shape index: {}]
  %s8 = inlined_call_operand.vmem [shape: f32[2,16,128], index: 8, kind: input, shape index: {}]
  %s9 = inlined_call_operand.vmem [shape: f32[2,1,128], index: 9, kind: input, shape index: {}]
  %s10 = inlined_call_operand.hbm [shape: f32[2,16,64], index: 10, kind: output, shape index: {}]
  %s11 = sld [smem:[#allocation0]]
  $region81: #{tpu_custom_call.1} parent=0
    _
  %s13 = ssub.s32 1, %s11
  %s14 = scalar_select 0, %s13, %s11
  $region1: #{tpu_custom_call.1} parent=0
    #allocation7 [shape = 'u8[16384]{0}', space=vmem, size = 0x4000, scoped, tag = 'output window, operand 0']
    #allocation8 [shape = 's32[2]{0}', space=sflag, size = 0x8, scoped, tag = 'scoped memory for tpu_custom_call.1']
    %15 = vsyncpa [#allocation8], 0
    %s16 = scalar_lea.sflag [#allocation8], 1
    %17 = vsyncpa %s16, 0
    loop: start=0, step=1, limit=6
    $region2: #{tpu_custom_call.1} parent=1 // loop_pre_header
      _
    $region3: #{tpu_custom_call.1} parent=1 // loop_header
      %s19 = sphi 0, %s23
      %p20 = scmp.ge.s32.totalorder %s19, 6
      %s26 = sphi 0, %s38
      %s27 = sphi 0, %s34
      %s28 = sphi 0, %s26
      %s29 = sphi 0, %s27
      %s30 = sphi 0, %s28
      %s31 = sphi 0, %s29
      %s41 = sphi 0, %s43
      %s44 = sphi 0, %s41
      %s45 = sphi 0, %s44
      %s61 = sphi 0, %s45
      %s65 = sphi 0, %s65
      %s67 = sphi 0, %s65
      %s68 = sphi 0, %s67
      %s82 = sphi 0, %s68
      %s86 = sphi 0, %s86
      %s88 = sphi 0, %s86
      %s89 = sphi 0, %s88
      %s103 = sphi 0, %s89
      %s109 = sphi 0, %s111
      %s112 = sphi 0, %s109
      %s113 = sphi 0, %s112
      %s129 = sphi 0, %s113
      %s135 = sphi 0, %s137
      %s138 = sphi 0, %s135
      %s139 = sphi 0, %s138
      %s155 = sphi 0, %s139
      %s161 = sphi 0, %s163
      %s164 = sphi 0, %s161
      %s165 = sphi 0, %s164
      %s181 = sphi 0, %s165
      %s187 = sphi 0, %s189
      %s190 = sphi 0, %s187
      %s191 = sphi 0, %s190
      %s207 = sphi 0, %s191
      %s213 = sphi 0, %s215
      %s216 = sphi 0, %s213
      %s217 = sphi 0, %s216
      %s233 = sphi 0, %s217
      %s239 = sphi 0, %s241
      %s242 = sphi 0, %s239
      %s243 = sphi 0, %s242
      %s259 = sphi 0, %s243
      %s265 = sphi 0, %s267
      %s268 = sphi 0, %s265
      %s269 = sphi 0, %s268
      %s285 = sphi 0, %s269
      %s291 = sphi 0, %s293
      %s294 = sphi 0, %s291
      %s295 = sphi 0, %s294
      %s311 = sphi 0, %s295
    $region4: #{tpu_custom_call.1} parent=1 // loop_header_branch
      %22 = sbr.rel (%p20) target = $region8
    $region5: #{tpu_custom_call.1} parent=1 // loop_body
      %s24 = ssub.s32 %s19, 1
      %s25 = ssub.s32 %s19, 2
      %s32 = sadd.s32 1, %s27
      %p33 = scmp.ge.s32.totalorder %s32, 2
      %s34 = scalar_select %p33, 0, %s32
      %s35 = sadd.s32 1, %s26
      %s36 = scalar_select %p33, %s35, %s26
      %p37 = scmp.ge.s32.totalorder %s36, 2
      %s38 = scalar_select %p37, 0, %s36
      %s39 = ssub.s32 %s26, %s38
      %p40 = scmp.eq.s32.totalorder %s39, 0
      %s42 = sadd.s32 %s41, 1
      %s43 = scalar_select %p40, %s41, %s42
      %p46 = pneg %p40
      %p47 = scmp.eq.s32.totalorder %s19, 3
      %p48 = por %p46, %p47
      %p49 = scmp.ne.s32.totalorder %s41, %s44
      %p50 = scmp.eq.s32.totalorder %s19, 0
      %p51 = por %p49, %p50
      %p52 = scmp.ne.s32.totalorder %s41, %s44
      %p53 = scmp.eq.s32.totalorder %s24, 3
      %p54 = por %p52, %p53
      %p55 = scmp.ne.s32.totalorder %s44, %s45
      %p56 = scmp.eq.s32.totalorder %s24, 0
      %p57 = por %p55, %p56
      %p58 = scmp.ne.s32.totalorder %s44, %s45
      %p59 = scmp.eq.s32.totalorder %s25, 3
      %p60 = por %p58, %p59
      %p62 = scmp.ne.s32.totalorder %s45, %s61
      %p63 = scmp.eq.s32.totalorder %s25, 0
      %p64 = por %p62, %p63
      %s66 = sadd.s32 %s65, 1
      %p69 = scmp.eq.s32.totalorder %s19, 3
      %p70 = scmp.ne.s32.totalorder %s65, %s67
      %p71 = scmp.eq.s32.totalorder %s19, 0
      %p72 = por %p70, %p71
      %p73 = scmp.ne.s32.totalorder %s65, %s67
      %p74 = scmp.eq.s32.totalorder %s24, 3
      %p75 = por %p73, %p74
      %p76 = scmp.ne.s32.totalorder %s67, %s68
      %p77 = scmp.eq.s32.totalorder %s24, 0
      %p78 = por %p76, %p77
      %p79 = scmp.ne.s32.totalorder %s67, %s68
      %p80 = scmp.eq.s32.totalorder %s25, 3
      %p81 = por %p79, %p80
      %p83 = scmp.ne.s32.totalorder %s68, %s82
      %p84 = scmp.eq.s32.totalorder %s25, 0
      %p85 = por %p83, %p84
      %s87 = sadd.s32 %s86, 1
      %p90 = scmp.eq.s32.totalorder %s19, 3
      %p91 = scmp.ne.s32.totalorder %s86, %s88
      %p92 = scmp.eq.s32.totalorder %s19, 0
      %p93 = por %p91, %p92
      %p94 = scmp.ne.s32.totalorder %s86, %s88
      %p95 = scmp.eq.s32.totalorder %s24, 3
      %p96 = por %p94, %p95
      %p97 = scmp.ne.s32.totalorder %s88, %s89
      %p98 = scmp.eq.s32.totalorder %s24, 0
      %p99 = por %p97, %p98
      %p100 = scmp.ne.s32.totalorder %s88, %s89
      %p101 = scmp.eq.s32.totalorder %s25, 3
      %p102 = por %p100, %p101
      %p104 = scmp.ne.s32.totalorder %s89, %s103
      %p105 = scmp.eq.s32.totalorder %s25, 0
      %p106 = por %p104, %p105
      %s107 = ssub.s32 %s27, %s34
      %p108 = scmp.eq.s32.totalorder %s107, 0
      %s110 = sadd.s32 %s109, 1
      %s111 = scalar_select %p108, %s109, %s110
      %p114 = pneg %p108
      %p115 = scmp.eq.s32.totalorder %s19, 3
      %p116 = por %p114, %p115
      %p117 = scmp.ne.s32.totalorder %s109, %s112
      %p118 = scmp.eq.s32.totalorder %s19, 0
      %p119 = por %p117, %p118
      %p120 = scmp.ne.s32.totalorder %s109, %s112
      %p121 = scmp.eq.s32.totalorder %s24, 3
      %p122 = por %p120, %p121
      %p123 = scmp.ne.s32.totalorder %s112, %s113
      %p124 = scmp.eq.s32.totalorder %s24, 0
      %p125 = por %p123, %p124
      %p126 = scmp.ne.s32.totalorder %s112, %s113
      %p127 = scmp.eq.s32.totalorder %s25, 3
      %p128 = por %p126, %p127
      %p130 = scmp.ne.s32.totalorder %s113, %s129
      %p131 = scmp.eq.s32.totalorder %s25, 0
      %p132 = por %p130, %p131
      %s133 = ssub.s32 %s27, %s34
      %p134 = scmp.eq.s32.totalorder %s133, 0
      %s136 = sadd.s32 %s135, 1
      %s137 = scalar_select %p134, %s135, %s136
      %p140 = pneg %p134
      %p141 = scmp.eq.s32.totalorder %s19, 3
      %p142 = por %p140, %p141
      %p143 = scmp.ne.s32.totalorder %s135, %s138
      %p144 = scmp.eq.s32.totalorder %s19, 0
      %p145 = por %p143, %p144
      %p146 = scmp.ne.s32.totalorder %s135, %s138
      %p147 = scmp.eq.s32.totalorder %s24, 3
      %p148 = por %p146, %p147
      %p149 = scmp.ne.s32.totalorder %s138, %s139
      %p150 = scmp.eq.s32.totalorder %s24, 0
      %p151 = por %p149, %p150
      %p152 = scmp.ne.s32.totalorder %s138, %s139
      %p153 = scmp.eq.s32.totalorder %s25, 3
      %p154 = por %p152, %p153
      %p156 = scmp.ne.s32.totalorder %s139, %s155
      %p157 = scmp.eq.s32.totalorder %s25, 0
      %p158 = por %p156, %p157
      %s159 = ssub.s32 %s27, %s34
      %p160 = scmp.eq.s32.totalorder %s159, 0
      %s162 = sadd.s32 %s161, 1
      %s163 = scalar_select %p160, %s161, %s162
      %p166 = pneg %p160
      %p167 = scmp.eq.s32.totalorder %s19, 3
      %p168 = por %p166, %p167
      %p169 = scmp.ne.s32.totalorder %s161, %s164
      %p170 = scmp.eq.s32.totalorder %s19, 0
      %p171 = por %p169, %p170
      %p172 = scmp.ne.s32.totalorder %s161, %s164
      %p173 = scmp.eq.s32.totalorder %s24, 3
      %p174 = por %p172, %p173
      %p175 = scmp.ne.s32.totalorder %s164, %s165
      %p176 = scmp.eq.s32.totalorder %s24, 0
      %p177 = por %p175, %p176
      %p178 = scmp.ne.s32.totalorder %s164, %s165
      %p179 = scmp.eq.s32.totalorder %s25, 3
      %p180 = por %p178, %p179
      %p182 = scmp.ne.s32.totalorder %s165, %s181
      %p183 = scmp.eq.s32.totalorder %s25, 0
      %p184 = por %p182, %p183
      %s185 = ssub.s32 %s27, %s34
      %p186 = scmp.eq.s32.totalorder %s185, 0
      %s188 = sadd.s32 %s187, 1
      %s189 = scalar_select %p186, %s187, %s188
      %p192 = pneg %p186
      %p193 = scmp.eq.s32.totalorder %s19, 3
      %p194 = por %p192, %p193
      %p195 = scmp.ne.s32.totalorder %s187, %s190
      %p196 = scmp.eq.s32.totalorder %s19, 0
      %p197 = por %p195, %p196
      %p198 = scmp.ne.s32.totalorder %s187, %s190
      %p199 = scmp.eq.s32.totalorder %s24, 3
      %p200 = por %p198, %p199
      %p201 = scmp.ne.s32.totalorder %s190, %s191
      %p202 = scmp.eq.s32.totalorder %s24, 0
      %p203 = por %p201, %p202
      %p204 = scmp.ne.s32.totalorder %s190, %s191
      %p205 = scmp.eq.s32.totalorder %s25, 3
      %p206 = por %p204, %p205
      %p208 = scmp.ne.s32.totalorder %s191, %s207
      %p209 = scmp.eq.s32.totalorder %s25, 0
      %p210 = por %p208, %p209
      %s211 = ssub.s32 %s27, %s34
      %p212 = scmp.eq.s32.totalorder %s211, 0
      %s214 = sadd.s32 %s213, 1
      %s215 = scalar_select %p212, %s213, %s214
      %p218 = pneg %p212
      %p219 = scmp.eq.s32.totalorder %s19, 3
      %p220 = por %p218, %p219
      %p221 = scmp.ne.s32.totalorder %s213, %s216
      %p222 = scmp.eq.s32.totalorder %s19, 0
      %p223 = por %p221, %p222
      %p224 = scmp.ne.s32.totalorder %s213, %s216
      %p225 = scmp.eq.s32.totalorder %s24, 3
      %p226 = por %p224, %p225
      %p227 = scmp.ne.s32.totalorder %s216, %s217
      %p228 = scmp.eq.s32.totalorder %s24, 0
      %p229 = por %p227, %p228
      %p230 = scmp.ne.s32.totalorder %s216, %s217
      %p231 = scmp.eq.s32.totalorder %s25, 3
      %p232 = por %p230, %p231
      %p234 = scmp.ne.s32.totalorder %s217, %s233
      %p235 = scmp.eq.s32.totalorder %s25, 0
      %p236 = por %p234, %p235
      %s237 = ssub.s32 %s27, %s34
      %p238 = scmp.eq.s32.totalorder %s237, 0
      %s240 = sadd.s32 %s239, 1
      %s241 = scalar_select %p238, %s239, %s240
      %p244 = pneg %p238
      %p245 = scmp.eq.s32.totalorder %s19, 3
      %p246 = por %p244, %p245
      %p247 = scmp.ne.s32.totalorder %s239, %s242
      %p248 = scmp.eq.s32.totalorder %s19, 0
      %p249 = por %p247, %p248
      %p250 = scmp.ne.s32.totalorder %s239, %s242
      %p251 = scmp.eq.s32.totalorder %s24, 3
      %p252 = por %p250, %p251
      %p253 = scmp.ne.s32.totalorder %s242, %s243
      %p254 = scmp.eq.s32.totalorder %s24, 0
      %p255 = por %p253, %p254
      %p256 = scmp.ne.s32.totalorder %s242, %s243
      %p257 = scmp.eq.s32.totalorder %s25, 3
      %p258 = por %p256, %p257
      %p260 = scmp.ne.s32.totalorder %s243, %s259
      %p261 = scmp.eq.s32.totalorder %s25, 0
      %p262 = por %p260, %p261
      %s263 = ssub.s32 %s27, %s34
      %p264 = scmp.eq.s32.totalorder %s263, 0
      %s266 = sadd.s32 %s265, 1
      %s267 = scalar_select %p264, %s265, %s266
      %p270 = pneg %p264
      %p271 = scmp.eq.s32.totalorder %s19, 3
      %p272 = por %p270, %p271
      %p273 = scmp.ne.s32.totalorder %s265, %s268
      %p274 = scmp.eq.s32.totalorder %s19, 0
      %p275 = por %p273, %p274
      %p276 = scmp.ne.s32.totalorder %s265, %s268
      %p277 = scmp.eq.s32.totalorder %s24, 3
      %p278 = por %p276, %p277
      %p279 = scmp.ne.s32.totalorder %s268, %s269
      %p280 = scmp.eq.s32.totalorder %s24, 0
      %p281 = por %p279, %p280
      %p282 = scmp.ne.s32.totalorder %s268, %s269
      %p283 = scmp.eq.s32.totalorder %s25, 3
      %p284 = por %p282, %p283
      %p286 = scmp.ne.s32.totalorder %s269, %s285
      %p287 = scmp.eq.s32.totalorder %s25, 0
      %p288 = por %p286, %p287
      %s289 = ssub.s32 %s26, %s38
      %p290 = scmp.eq.s32.totalorder %s289, 0
      %s292 = sadd.s32 %s291, 1
      %s293 = scalar_select %p290, %s291, %s292
      %p296 = pneg %p290
      %p297 = scmp.eq.s32.totalorder %s19, 3
      %p298 = por %p296, %p297
      %p299 = scmp.ne.s32.totalorder %s291, %s294
      %p300 = scmp.eq.s32.totalorder %s19, 0
      %p301 = por %p299, %p300
      %p302 = scmp.ne.s32.totalorder %s291, %s294
      %p303 = scmp.eq.s32.totalorder %s24, 3
      %p304 = por %p302, %p303
      %p305 = scmp.ne.s32.totalorder %s294, %s295
      %p306 = scmp.eq.s32.totalorder %s24, 0
      %p307 = por %p305, %p306
      %p308 = scmp.ne.s32.totalorder %s294, %s295
      %p309 = scmp.eq.s32.totalorder %s25, 3
      %p310 = por %p308, %p309
      %p312 = scmp.ne.s32.totalorder %s295, %s311
      %p313 = scmp.eq.s32.totalorder %s25, 0
      %p314 = por %p312, %p313
      %p315 = scmp.le.s32.totalorder 1, %s19
      %p316 = scmp.lt.s32.totalorder %s19, 5
      %p317 = pnand %p315, %p316
      %p318 = pneg %p317
      // Predicated region
      $region9: #{tpu_custom_call.1} parent=5 // pred_check
        _
      $region10: #{tpu_custom_call.1} parent=5 // pred_check_branch
        %320 = sbr.rel (%p317) target = $region12
      $region11: #{tpu_custom_call.1} parent=5 // pred_region
        %s321 = ssub.s32 %s19, 1
        // Predicated region
        $region13: #{tpu_custom_call.1} parent=11 // pred_check
          %p322 = pneg %p78
        $region14: #{tpu_custom_call.1} parent=11 // pred_check_branch
          %324 = sbr.rel (%p322) target = $region16
        $region15: #{tpu_custom_call.1} parent=11 // pred_region
          _
        $region16: #{tpu_custom_call.1} parent=11 // pred_fallthru
          _
        // Predicated region
        $region17: #{tpu_custom_call.1} parent=11 // pred_check
          %p325 = pneg %p99
        $region18: #{tpu_custom_call.1} parent=11 // pred_check_branch
          %327 = sbr.rel (%p325) target = $region20
        $region19: #{tpu_custom_call.1} parent=11 // pred_region
          _
        $region20: #{tpu_custom_call.1} parent=11 // pred_fallthru
          _
      $region12: #{tpu_custom_call.1} parent=5 // pred_fallthru
        _
      %p328 = scmp.lt.s32.totalorder %s19, 4
      // Predicated region
      $region21: #{tpu_custom_call.1} parent=5 // pred_check
        %p329 = pneg %p328
      $region22: #{tpu_custom_call.1} parent=5 // pred_check_branch
        %331 = sbr.rel (%p329) target = $region24
      $region23: #{tpu_custom_call.1} parent=5 // pred_region
        // Predicated region
        $region25: #{tpu_custom_call.1} parent=23 // pred_check
          %p332 = pneg %p51
        $region26: #{tpu_custom_call.1} parent=23 // pred_check_branch
          %334 = sbr.rel (%p332) target = $region28
        $region27: #{tpu_custom_call.1} parent=23 // pred_region
          %p335 = scmp.lt.s32.totalorder %s26, 1
          %s336 = scalar_select %p335, %s26, 1
          %s337 = smul.addr %s336, 2
          %s338 = smul.addr %s337, 4
          %s339 = scalar_lea.vmem %s0, %s338
        $region28: #{tpu_custom_call.1} parent=23 // pred_fallthru
          _
        // Predicated region
        $region29: #{tpu_custom_call.1} parent=23 // pred_check
          %p340 = pneg %p119
        $region30: #{tpu_custom_call.1} parent=23 // pred_check_branch
          %342 = sbr.rel (%p340) target = $region32
        $region31: #{tpu_custom_call.1} parent=23 // pred_region
          %p343 = scmp.lt.s32.totalorder %s27, 1
          %s344 = scalar_select %p343, %s27, 1
          %s345 = smul.addr %s344, 4
          %s346 = scalar_lea.vmem %s3, %s345
        $region32: #{tpu_custom_call.1} parent=23 // pred_fallthru
          _
        // Predicated region
        $region33: #{tpu_custom_call.1} parent=23 // pred_check
          %p347 = pneg %p145
        $region34: #{tpu_custom_call.1} parent=23 // pred_check_branch
          %349 = sbr.rel (%p347) target = $region36
        $region35: #{tpu_custom_call.1} parent=23 // pred_region
          %p350 = scmp.lt.s32.totalorder %s27, 1
          %s351 = scalar_select %p350, %s27, 1
          %s352 = scalar_lea.vmem %s4, %s351
        $region36: #{tpu_custom_call.1} parent=23 // pred_fallthru
          _
        // Predicated region
        $region37: #{tpu_custom_call.1} parent=23 // pred_check
          %p353 = pneg %p171
        $region38: #{tpu_custom_call.1} parent=23 // pred_check_branch
          %355 = sbr.rel (%p353) target = $region40
        $region39: #{tpu_custom_call.1} parent=23 // pred_region
          %p356 = scmp.lt.s32.totalorder %s27, 1
          %s357 = scalar_select %p356, %s27, 1
          %s358 = smul.addr %s357, 16
          %s359 = smul.addr %s358, 4
          %s360 = scalar_lea.vmem %s5, %s359
        $region40: #{tpu_custom_call.1} parent=23 // pred_fallthru
          _
        // Predicated region
        $region41: #{tpu_custom_call.1} parent=23 // pred_check
          %p361 = pneg %p197
        $region42: #{tpu_custom_call.1} parent=23 // pred_check_branch
          %363 = sbr.rel (%p361) target = $region44
        $region43: #{tpu_custom_call.1} parent=23 // pred_region
          %p364 = scmp.lt.s32.totalorder %s27, 1
          %s365 = scalar_select %p364, %s27, 1
          %s366 = smul.addr %s365, 4
          %s367 = scalar_lea.vmem %s6, %s366
        $region44: #{tpu_custom_call.1} parent=23 // pred_fallthru
          _
        // Predicated region
        $region45: #{tpu_custom_call.1} parent=23 // pred_check
          %p368 = pneg %p223
        $region46: #{tpu_custom_call.1} parent=23 // pred_check_branch
          %370 = sbr.rel (%p368) target = $region48
        $region47: #{tpu_custom_call.1} parent=23 // pred_region
          %p371 = scmp.lt.s32.totalorder %s27, 1
          %s372 = scalar_select %p371, %s27, 1
          %s373 = scalar_lea.vmem %s7, %s372
        $region48: #{tpu_custom_call.1} parent=23 // pred_fallthru
          _
        // Predicated region
        $region49: #{tpu_custom_call.1} parent=23 // pred_check
          %p374 = pneg %p249
        $region50: #{tpu_custom_call.1} parent=23 // pred_check_branch
          %376 = sbr.rel (%p374) target = $region52
        $region51: #{tpu_custom_call.1} parent=23 // pred_region
          %p377 = scmp.lt.s32.totalorder %s27, 1
          %s378 = scalar_select %p377, %s27, 1
          %s379 = smul.addr %s378, 2
          %s380 = smul.addr %s379, 8
          %s381 = scalar_lea.vmem %s8, %s380
        $region52: #{tpu_custom_call.1} parent=23 // pred_fallthru
          _
        // Predicated region
        $region53: #{tpu_custom_call.1} parent=23 // pred_check
          %p382 = pneg %p275
        $region54: #{tpu_custom_call.1} parent=23 // pred_check_branch
          %384 = sbr.rel (%p382) target = $region56
        $region55: #{tpu_custom_call.1} parent=23 // pred_region
          %p385 = scmp.lt.s32.totalorder %s27, 1
          %s386 = scalar_select %p385, %s27, 1
          %s387 = scalar_lea.vmem %s9, %s386
        $region56: #{tpu_custom_call.1} parent=23 // pred_fallthru
          _
      $region24: #{tpu_custom_call.1} parent=5 // pred_fallthru
        _
      %p388 = scmp.le.s32.totalorder 1, %s19
      %p389 = scmp.lt.s32.totalorder %s19, 5
      %p390 = pnand %p388, %p389
      %p391 = pneg %p390
      // Predicated region
      $region57: #{tpu_custom_call.1} parent=5 // pred_check
        _
      $region58: #{tpu_custom_call.1} parent=5 // pred_check_branch
        %393 = sbr.rel (%p390) target = $region60
      $region59: #{tpu_custom_call.1} parent=5 // pred_region
        %s394 = ssub.s32 %s19, 1
        %p395 = scmp.lt.s32.totalorder %s28, 1
        %s396 = scalar_select %p395, %s28, 1
        %s397 = smul.addr %s396, 2
        %s398 = smul.addr %s397, 4
        %s399 = scalar_lea.vmem %s0, %s398
        %p400 = pneg %p57
        %p401 = pneg %p54
        %p402 = pneg %p78
        %p403 = pneg %p75
        %p404 = pneg %p99
        %p405 = pneg %p96
        %p406 = scmp.lt.s32.totalorder %s29, 1
        %s407 = scalar_select %p406, %s29, 1
        %s408 = smul.addr %s407, 4
        %s409 = scalar_lea.vmem %s3, %s408
        %p410 = pneg %p125
        %p411 = pneg %p122
        %p412 = scmp.lt.s32.totalorder %s29, 1
        %s413 = scalar_select %p412, %s29, 1
        %s414 = scalar_lea.vmem %s4, %s413
        %p415 = pneg %p151
        %p416 = pneg %p148
        %p417 = scmp.lt.s32.totalorder %s29, 1
        %s418 = scalar_select %p417, %s29, 1
        %s419 = smul.addr %s418, 16
        %s420 = smul.addr %s419, 4
        %s421 = scalar_lea.vmem %s5, %s420
        %p422 = pneg %p177
        %p423 = pneg %p174
        %p424 = scmp.lt.s32.totalorder %s29, 1
        %s425 = scalar_select %p424, %s29, 1
        %s426 = smul.addr %s425, 4
        %s427 = scalar_lea.vmem %s6, %s426
        %p428 = pneg %p203
        %p429 = pneg %p200
        %p430 = scmp.lt.s32.totalorder %s29, 1
        %s431 = scalar_select %p430, %s29, 1
        %s432 = scalar_lea.vmem %s7, %s431
        %p433 = pneg %p229
        %p434 = pneg %p226
        %p435 = scmp.lt.s32.totalorder %s29, 1
        %s436 = scalar_select %p435, %s29, 1
        %s437 = smul.addr %s436, 2
        %s438 = smul.addr %s437, 8
        %s439 = scalar_lea.vmem %s8, %s438
        %p440 = pneg %p255
        %p441 = pneg %p252
        %p442 = scmp.lt.s32.totalorder %s29, 1
        %s443 = scalar_select %p442, %s29, 1
        %s444 = scalar_lea.vmem %s9, %s443
        %p445 = pneg %p281
        %p446 = pneg %p278
        %p447 = pneg %p307
        %p448 = pneg %p304
        %s449 = sand.u32 %s294, 1
        %s450 = scalar_lea.sflag [#allocation8], %s449
        %s451 = sand.u32 %s294, 1
        %s452 = smul.addr %s451, 16
        %s453 = scalar_lea.vmem [#allocation7], %s452
        %p454 = scmp.lt.s32.totalorder %s28, 1
        %s455 = scalar_select %p454, %s28, 1
        %s456 = smul.addr %s455, 2
        %s457 = smul.addr %s456, 4
        %s458 = scalar_lea.vmem %s0, %s457
        %p459 = scmp.lt.s32.totalorder %s29, 1
        %s460 = scalar_select %p459, %s29, 1
        %s461 = smul.addr %s460, 4
        %s462 = scalar_lea.vmem %s3, %s461
        %p463 = scmp.lt.s32.totalorder %s29, 1
        %s464 = scalar_select %p463, %s29, 1
        %s465 = scalar_lea.vmem %s4, %s464
        %p466 = scmp.lt.s32.totalorder %s29, 1
        %s467 = scalar_select %p466, %s29, 1
        %s468 = smul.addr %s467, 16
        %s469 = smul.addr %s468, 4
        %s470 = scalar_lea.vmem %s5, %s469
        %p471 = scmp.lt.s32.totalorder %s29, 1
        %s472 = scalar_select %p471, %s29, 1
        %s473 = smul.addr %s472, 4
        %s474 = scalar_lea.vmem %s6, %s473
        %p475 = scmp.lt.s32.totalorder %s29, 1
        %s476 = scalar_select %p475, %s29, 1
        %s477 = scalar_lea.vmem %s7, %s476
        %p478 = scmp.lt.s32.totalorder %s29, 1
        %s479 = scalar_select %p478, %s29, 1
        %s480 = smul.addr %s479, 2
        %s481 = smul.addr %s480, 8
        %s482 = scalar_lea.vmem %s8, %s481
        %p483 = scmp.lt.s32.totalorder %s29, 1
        %s484 = scalar_select %p483, %s29, 1
        %s485 = scalar_lea.vmem %s9, %s484
        %p487 = scmp.eq.s32.totalorder %s29, 0
        // Predicated region
        $region61: #{tpu_custom_call.1} parent=59 // pred_check
          %p488 = pneg %p487
        $region62: #{tpu_custom_call.1} parent=59 // pred_check_branch
          %490 = sbr.rel (%p488) target = $region64
        $region63: #{tpu_custom_call.1} parent=59 // pred_region
          %v491 = vld [vmem:[%s458] sm:$0xf]
          %v492 = vld [vmem:[%s458 + $0x4] sm:$0xf]
          %v493 = vld [vmem:[%s1] sm:$0xff]
          %v494 = vld [vmem:[%s1 + $0x8] sm:$0xff]
          %v495 = vld [vmem:[%s1 + $0x10] sm:$0xff]
          %v496 = vld [vmem:[%s1 + $0x18] sm:$0xff]
          %v497 = vld [vmem:[%s1 + $0x20] sm:$0xff]
          %v498 = vld [vmem:[%s1 + $0x28] sm:$0xff]
          %v499 = vld [vmem:[%s1 + $0x30] sm:$0xff]
          %v500 = vld [vmem:[%s1 + $0x38] sm:$0xff]
          %v503 = vunpack.c.l.b16 %v491
          %v504 = vunpack.c.l.b16 %v492
          %v505 = vpack.c.b16 %v504, %v503
          %v514 = vunpack.c.l.b16 %v493
          %v515 = vunpack.c.h.b16 %v493
          %v516 = vunpack.c.l.b16 %v494
          %v517 = vunpack.c.h.b16 %v494
          %v518 = vunpack.c.l.b16 %v495
          %v519 = vunpack.c.h.b16 %v495
          %v520 = vunpack.c.l.b16 %v496
          %v521 = vunpack.c.h.b16 %v496
          %v522 = vunpack.c.l.b16 %v497
          %v523 = vunpack.c.h.b16 %v497
          %v524 = vunpack.c.l.b16 %v498
          %v525 = vunpack.c.h.b16 %v498
          %v526 = vunpack.c.l.b16 %v499
          %v527 = vunpack.c.h.b16 %v499
          %v528 = vunpack.c.l.b16 %v500
          %v529 = vunpack.c.h.b16 %v500
          %v530 = vpack.c.b16 %v516, %v514
          %v531 = vpack.c.b16 %v517, %v515
          %v532 = vpack.c.b16 %v520, %v518
          %v533 = vpack.c.b16 %v521, %v519
          %v534 = vpack.c.b16 %v524, %v522
          %v535 = vpack.c.b16 %v525, %v523
          %v536 = vpack.c.b16 %v528, %v526
          %v537 = vpack.c.b16 %v529, %v527
          %vm546 = vcmask 523264
          %v548 = vsel %vm546, %v505, 0
          %550 = vmatprep.subr.bf16.mxu0 %v531
          %551 = vmatpush1.bf16.msra.mxu0 %v530
          %552 = vmatprep.subr.bf16.mxu0 %v533
          %553 = vmatpush1.bf16.msra.mxu0 %v532
          %554 = vmatprep.subr.bf16.mxu0 %v535
          %555 = vmatpush1.bf16.msra.mxu0 %v534
          %556 = vmatprep.subr.bf16.mxu0 %v537
          %557 = vmatpush1.bf16.msra.mxu0 %v536
          %558 = vmatprep.subr.bf16.mxu0 0
          %559 = vmatpush1.bf16.msra.mxu0 0
          %560 = vmatprep.subr.bf16.mxu0 0
          %561 = vmatpush1.bf16.msra.mxu0 0
          %562 = vmatprep.subr.bf16.mxu0 0
          %563 = vmatpush1.bf16.msra.mxu0 0
          %564 = vmatprep.subr.bf16.mxu0 0
          %565 = vmatpush1.bf16.msra.mxu0 0
          %566 = vmatprep.subr.bf16.mxu0 0
          %567 = vmatpush1.bf16.msra.mxu0 0
          %568 = vmatprep.subr.bf16.mxu0 0
          %569 = vmatpush1.bf16.msra.mxu0 0
          %570 = vmatprep.subr.bf16.mxu0 0
          %571 = vmatpush1.bf16.msra.mxu0 0
          %572 = vmatprep.subr.bf16.mxu0 0
          %573 = vmatpush1.bf16.msra.mxu0 0
          %574 = vmatprep.subr.bf16.mxu0 0
          %575 = vmatpush1.bf16.msra.mxu0 0
          %576 = vmatprep.subr.bf16.mxu0 0
          %577 = vmatpush1.bf16.msra.mxu0 0
          %578 = vmatprep.subr.bf16.mxu0 0
          %579 = vmatpush1.bf16.msra.mxu0 0
          %580 = vmatprep.subr.bf16.mxu0 0
          %581 = vmatpush1.bf16.msra.mxu0 0
          %582 = vmatprep.mubr.bf16.mxu0 0
          %583 = vmatmul.mubr.bf16.gmra.mrb[0].mxu0 %v548
          %v584 = vpop.f32.mrb[0].mxu0
          %v585 = vadd.f32 0.0, %v584
          %v586 = vpop.f32.mrb[0].mxu0
          %v587 = vadd.f32 0.0, %v586
          %v588 = vpop.f32.mrb[0].mxu0
          %v589 = vadd.f32 0.0, %v588
          %v590 = vpop.f32.mrb[0].mxu0
          %v591 = vadd.f32 0.0, %v590
          %592 = vdwg.mxu0
          %593 = vst [vmem:[#allocation2] sm:$0xff] 0.0
          %594 = vst [vmem:[#allocation2 + $0x18] sm:$0xff] 0.0
          %595 = vst [vmem:[#allocation2 + $0x8] sm:$0xff] %v585
          %596 = vst [vmem:[#allocation2 + $0x10] sm:$0xff] %v589
          %v597 = vsub.f32 0.0, %v587
          %v598 = vsub.f32 0.0, %v591
          %v599 = vmul.f32 %v597, 1.442695
          %v600 = vpow.pop %v599
          %v601 = vmul.f32 %v598, 1.442695
          %v602 = vpow.pop %v601
          %v603 = vadd.f32 %v600, 1.0
          %v604 = vadd.f32 %v602, 1.0
          %v605 = vrcp.pop %v603
          %v606 = vrcp.pop %v604
          %v607 = vmul.f32 %v587, %v605
          %v608 = vmul.f32 %v591, %v606
          %609 = vst [vmem:[#allocation3] sm:$0xff] %v607
          %610 = vst [vmem:[#allocation3 + $0x8] sm:$0xff] %v608
          %v611 = vld [vmem:[%s462] sm:$0xf]
          %v612 = vld [vmem:[%s465] sm:$0x1]
          %v614 = vlaneseq
          %v615 = vshrl.u32 %v614, 7
          %v616 = vsub.s32 0, %v615
          %v617 = vrot.slane %v612, %v616
          %v619 = vadd.f32 %v617, 0.0
          %v620 = vld [vmem:[#allocation2 + $0x5] sm:$0xff]
          %v621 = vld [vmem:[#allocation2 + $0xd] sm:$0xff]
          %v622 = vlaneseq
          %v623 = vshrl.u32 %v622, 7
          %v624 = vsub.s32 0, %v623
          %v625 = vrot.slane %v611, %v624
          %v626 = vmul.f32 %v625, %v620
          %v627 = vmul.f32 %v625, %v621
          %v628 = vadd.f32 %v619, %v626
          %v629 = vadd.f32 %v619, %v627
          %v630 = vld [vmem:[#allocation2 + $0x6] sm:$0xff]
          %v631 = vld [vmem:[#allocation2 + $0xe] sm:$0xff]
          %v632 = vlaneseq
          %v633 = vshrl.u32 %v632, 7
          %v634 = vsub.s32 1, %v633
          %v635 = vrot.slane %v611, %v634
          %v636 = vmul.f32 %v635, %v630
          %v637 = vmul.f32 %v635, %v631
          %v638 = vadd.f32 %v628, %v636
          %v639 = vadd.f32 %v629, %v637
          %v640 = vld [vmem:[#allocation2 + $0x7] sm:$0xff]
          %v641 = vld [vmem:[#allocation2 + $0xf] sm:$0xff]
          %v642 = vlaneseq
          %v643 = vshrl.u32 %v642, 7
          %v644 = vsub.s32 2, %v643
          %v645 = vrot.slane %v611, %v644
          %v646 = vmul.f32 %v645, %v640
          %v647 = vmul.f32 %v645, %v641
          %v648 = vadd.f32 %v638, %v646
          %v649 = vadd.f32 %v639, %v647
          %v650 = vld [vmem:[#allocation2 + $0x8] sm:$0xff]
          %v651 = vld [vmem:[#allocation2 + $0x10] sm:$0xff]
          %v652 = vlaneseq
          %v653 = vshrl.u32 %v652, 7
          %v654 = vsub.s32 3, %v653
          %v655 = vrot.slane %v611, %v654
          %v656 = vmul.f32 %v655, %v650
          %v657 = vmul.f32 %v655, %v651
          %v658 = vadd.f32 %v648, %v656
          %v659 = vadd.f32 %v649, %v657
          %v660 = vsub.f32 0.0, %v658
          %v661 = vsub.f32 0.0, %v659
          %v662 = vmul.f32 %v660, 1.442695
          %v663 = vpow.pop %v662
          %v664 = vmul.f32 %v661, 1.442695
          %v665 = vpow.pop %v664
          %v666 = vadd.f32 %v663, 1.0
          %v667 = vadd.f32 %v665, 1.0
          %v668 = vrcp.pop %v666
          %v669 = vrcp.pop %v667
          %v670 = vmul.f32 %v658, %v668
          %v671 = vmul.f32 %v659, %v669
          %v672 = vpack.c.bf16 %v671, %v670
          %v673 = vld [vmem:[%s470] sm:$0xf]
          %v674 = vld [vmem:[%s470 + $0x4] sm:$0xf]
          %v675 = vld [vmem:[%s470 + $0x8] sm:$0xf]
          %v676 = vld [vmem:[%s470 + $0xc] sm:$0xf]
          %v677 = vld [vmem:[%s470 + $0x10] sm:$0xf]
          %v678 = vld [vmem:[%s470 + $0x14] sm:$0xf]
          %v679 = vld [vmem:[%s470 + $0x18] sm:$0xf]
          %v680 = vld [vmem:[%s470 + $0x1c] sm:$0xf]
          %v681 = vld [vmem:[%s470 + $0x20] sm:$0xf]
          %v682 = vld [vmem:[%s470 + $0x24] sm:$0xf]
          %v683 = vld [vmem:[%s470 + $0x28] sm:$0xf]
          %v684 = vld [vmem:[%s470 + $0x2c] sm:$0xf]
          %v685 = vld [vmem:[%s470 + $0x30] sm:$0xf]
          %v686 = vld [vmem:[%s470 + $0x34] sm:$0xf]
          %v687 = vld [vmem:[%s470 + $0x38] sm:$0xf]
          %v688 = vld [vmem:[%s470 + $0x3c] sm:$0xf]
          %v705 = vunpack.c.l.b16 %v673
          %v706 = vunpack.c.l.b16 %v674
          %v707 = vunpack.c.l.b16 %v675
          %v708 = vunpack.c.l.b16 %v676
          %v709 = vunpack.c.l.b16 %v677
          %v710 = vunpack.c.l.b16 %v678
          %v711 = vunpack.c.l.b16 %v679
          %v712 = vunpack.c.l.b16 %v680
          %v713 = vunpack.c.l.b16 %v681
          %v714 = vunpack.c.l.b16 %v682
          %v715 = vunpack.c.l.b16 %v683
          %v716 = vunpack.c.l.b16 %v684
          %v717 = vunpack.c.l.b16 %v685
          %v718 = vunpack.c.l.b16 %v686
          %v719 = vunpack.c.l.b16 %v687
          %v720 = vunpack.c.l.b16 %v688
          %v721 = vpack.c.b16 %v706, %v705
          %v722 = vpack.c.b16 %v708, %v707
          %v723 = vpack.c.b16 %v710, %v709
          %v724 = vpack.c.b16 %v712, %v711
          %v725 = vpack.c.b16 %v714, %v713
          %v726 = vpack.c.b16 %v716, %v715
          %v727 = vpack.c.b16 %v718, %v717
          %v728 = vpack.c.b16 %v720, %v719
          %737 = vmatprep.subr.bf16.mxu0 0
          %738 = vmatpush1.bf16.msra.mxu0 %v721
          %739 = vmatprep.subr.bf16.mxu0 0
          %740 = vmatpush1.bf16.msra.mxu0 %v722
          %741 = vmatprep.subr.bf16.mxu0 0
          %742 = vmatpush1.bf16.msra.mxu0 %v723
          %743 = vmatprep.subr.bf16.mxu0 0
          %744 = vmatpush1.bf16.msra.mxu0 %v724
          %745 = vmatprep.subr.bf16.mxu0 0
          %746 = vmatpush1.bf16.msra.mxu0 %v725
          %747 = vmatprep.subr.bf16.mxu0 0
          %748 = vmatpush1.bf16.msra.mxu0 %v726
          %749 = vmatprep.subr.bf16.mxu0 0
          %750 = vmatpush1.bf16.msra.mxu0 %v727
          %751 = vmatprep.subr.bf16.mxu0 0
          %752 = vmatpush1.bf16.msra.mxu0 %v728
          %753 = vmatprep.subr.bf16.mxu0 0
          %754 = vmatpush1.bf16.msra.mxu0 0
          %755 = vmatprep.subr.bf16.mxu0 0
          %756 = vmatpush1.bf16.msra.mxu0 0
          %757 = vmatprep.subr.bf16.mxu0 0
          %758 = vmatpush1.bf16.msra.mxu0 0
          %759 = vmatprep.subr.bf16.mxu0 0
          %760 = vmatpush1.bf16.msra.mxu0 0
          %761 = vmatprep.subr.bf16.mxu0 0
          %762 = vmatpush1.bf16.msra.mxu0 0
          %763 = vmatprep.subr.bf16.mxu0 0
          %764 = vmatpush1.bf16.msra.mxu0 0
          %765 = vmatprep.subr.bf16.mxu0 0
          %766 = vmatpush1.bf16.msra.mxu0 0
          %767 = vmatprep.subr.bf16.mxu0 0
          %768 = vmatpush1.bf16.msra.mxu0 0
          %769 = vmatprep.mubr.bf16.mxu0 0
          %770 = vmatmul.mubr.bf16.gmra.mrb[0].mxu0 %v672
          %v771 = vpop.f32.mrb[0].mxu0
          %v772 = vadd.f32 0.0, %v771
          %v773 = vpop.f32.mrb[0].mxu0
          %v774 = vpop.f32.mrb[0].mxu0
          %v775 = vadd.f32 0.0, %v774
          %v776 = vpop.f32.mrb[0].mxu0
          %777 = vdwg.mxu0
          %v778 = vld [vmem:[%s474] sm:$0xf]
          %v779 = vld [vmem:[%s477] sm:$0x1]
          %v781 = vlaneseq
          %v782 = vshrl.u32 %v781, 7
          %v783 = vsub.s32 0, %v782
          %v784 = vrot.slane %v779, %v783
          %v786 = vadd.f32 %v784, 0.0
          %788 = vset.pattern.permute.xlu0 32
          %789 = vperm.xlu0 %788, %v772
          %v790 = vpop.permute.xlu0 %789
          %793 = vset.pattern.permute.xlu0 32
          %794 = vperm.xlu0 %793, %v775
          %v795 = vpop.permute.xlu0 %794
          %v797 = vlaneseq
          %v798 = vshrl.u32 %v797, 7
          %v799 = vsub.s32 0, %v798
          %v800 = vrot.slane %v778, %v799
          %v801 = vmul.f32 %v790, %v800
          %v802 = vmul.f32 %v795, %v800
          %v803 = vadd.f32 %v786, %v801
          %v804 = vadd.f32 %v786, %v802
          %805 = vset.pattern.permute.xlu0 33
          %806 = vperm.xlu0 %805, %v772
          %v807 = vpop.permute.xlu0 %806
          %809 = vset.pattern.permute.xlu0 33
          %810 = vperm.xlu0 %809, %v775
          %v811 = vpop.permute.xlu0 %810
          %v813 = vlaneseq
          %v814 = vshrl.u32 %v813, 7
          %v815 = vsub.s32 1, %v814
          %v816 = vrot.slane %v778, %v815
          %v817 = vmul.f32 %v807, %v816
          %v818 = vmul.f32 %v811, %v816
          %v819 = vadd.f32 %v803, %v817
          %v820 = vadd.f32 %v804, %v818
          %821 = vset.pattern.permute.xlu0 34
          %822 = vperm.xlu0 %821, %v772
          %v823 = vpop.permute.xlu0 %822
          %825 = vset.pattern.permute.xlu0 34
          %826 = vperm.xlu0 %825, %v775
          %v827 = vpop.permute.xlu0 %826
          %v829 = vlaneseq
          %v830 = vshrl.u32 %v829, 7
          %v831 = vsub.s32 2, %v830
          %v832 = vrot.slane %v778, %v831
          %v833 = vmul.f32 %v823, %v832
          %v834 = vmul.f32 %v827, %v832
          %v835 = vadd.f32 %v819, %v833
          %v836 = vadd.f32 %v820, %v834
          %837 = vset.pattern.permute.xlu0 35
          %838 = vperm.xlu0 %837, %v772
          %v839 = vpop.permute.xlu0 %838
          %841 = vset.pattern.permute.xlu0 35
          %842 = vperm.xlu0 %841, %v775
          %v843 = vpop.permute.xlu0 %842
          %v845 = vlaneseq
          %v846 = vshrl.u32 %v845, 7
          %v847 = vsub.s32 3, %v846
          %v848 = vrot.slane %v778, %v847
          %v849 = vmul.f32 %v839, %v848
          %v850 = vmul.f32 %v843, %v848
          %v851 = vadd.f32 %v835, %v849
          %v852 = vadd.f32 %v836, %v850
          %vm853 = vcmp.gt.f32.partialorder %v851, 20.0
          %vm854 = vcmp.gt.f32.partialorder %v852, 20.0
          %v855 = vmin.f32 %v851, 20.0
          %v856 = vmin.f32 %v852, 20.0
          %v857 = vmul.f32 %v855, 1.442695
          %v858 = vpow.pop %v857
          %v859 = vmul.f32 %v856, 1.442695
          %v860 = vpow.pop %v859
          %v861 = vadd.f32 %v858, 1.0
          %v862 = vadd.f32 %v860, 1.0
          %v863 = vlog2.pop %v861
          %v864 = vmul.f32 %v863, 0.6931472
          %v865 = vlog2.pop %v862
          %v866 = vmul.f32 %v865, 0.6931472
          %v867 = vsel %vm853, %v851, %v864
          %v868 = vsel %vm854, %v852, %v866
          %v869 = vld [vmem:[%s482] sm:$0xff]
          %v870 = vld [vmem:[%s482 + $0x8] sm:$0xff]
          %v871 = vmul.f32 %v869, 1.442695
          %v872 = vpow.pop %v871
          %v873 = vmul.f32 %v870, 1.442695
          %v874 = vpow.pop %v873
          %v875 = vsub.f32 0.0, %v872
          %v876 = vsub.f32 0.0, %v874
          %v877 = vmul.f32 %v867, %v670
          %v878 = vmul.f32 %v868, %v671
          %v879 = vld [vmem:[%s485] sm:$0x1]
          %v881 = vlaneseq
          %v882 = vshrl.u32 %v881, 7
          %v883 = vsub.s32 0, %v882
          %v884 = vrot.slane %v879, %v883
          %v886 = vmul.f32 %v670, %v884
          %v887 = vmul.f32 %v671, %v884
          %v889 = vcombine.high %v867, %v867
          %v891 = vunpack.c.l.s4 1966171168
          %v892 = vunpack.c.0.s8 %v891
          %v893 = vlaneseq
          %v894 = vshrl.u32 %v893, 7
          %v895 = vsub.s32 %v892, %v894
          %v896 = vrot.slane %v867, %v895
          %v898 = vunpack.c.l.s4 1966171168
          %v899 = vunpack.c.0.s8 %v898
          %v900 = vlaneseq
          %v901 = vshrl.u32 %v900, 7
          %v902 = vsub.s32 %v899, %v901
          %v903 = vrot.slane %v889, %v902
          %v904 = vcombine.high %v896, %v896
          %v905 = vcombine.high %v903, %v903
          %v907 = vunpack.c.l.s4 1966171168
          %v908 = vunpack.c.0.s8 %v907
          %v909 = vlaneseq
          %v910 = vshrl.u32 %v909, 7
          %v911 = vsub.s32 %v908, %v910
          %v912 = vrot.slane %v896, %v911
          %v914 = vunpack.c.l.s4 1966171168
          %v915 = vunpack.c.0.s8 %v914
          %v916 = vlaneseq
          %v917 = vshrl.u32 %v916, 7
          %v918 = vsub.s32 %v915, %v917
          %v919 = vrot.slane %v903, %v918
          %v921 = vunpack.c.l.s4 1966171168
          %v922 = vunpack.c.0.s8 %v921
          %v923 = vlaneseq
          %v924 = vshrl.u32 %v923, 7
          %v925 = vsub.s32 %v922, %v924
          %v926 = vrot.slane %v904, %v925
          %v928 = vunpack.c.l.s4 1966171168
          %v929 = vunpack.c.0.s8 %v928
          %v930 = vlaneseq
          %v931 = vshrl.u32 %v930, 7
          %v932 = vsub.s32 %v929, %v931
          %v933 = vrot.slane %v905, %v932
          %v934 = vcombine.high %v912, %v912
          %v935 = vcombine.high %v919, %v919
          %v936 = vcombine.high %v926, %v926
          %v937 = vcombine.high %v933, %v933
          %v938 = vlaneseq
          %v939 = vshrl.u32 %v938, 7
          %v940 = vsub.s32 0, %v939
          %v941 = vrot.slane %v912, %v940
          %v942 = vlaneseq
          %v943 = vshrl.u32 %v942, 7
          %v944 = vsub.s32 0, %v943
          %v945 = vrot.slane %v926, %v944
          %v946 = vlaneseq
          %v947 = vshrl.u32 %v946, 7
          %v948 = vsub.s32 0, %v947
          %v949 = vrot.slane %v934, %v948
          %v950 = vlaneseq
          %v951 = vshrl.u32 %v950, 7
          %v952 = vsub.s32 0, %v951
          %v953 = vrot.slane %v936, %v952
          %v954 = vlaneseq
          %v955 = vshrl.u32 %v954, 7
          %v956 = vsub.s32 0, %v955
          %v957 = vrot.slane %v919, %v956
          %v958 = vlaneseq
          %v959 = vshrl.u32 %v958, 7
          %v960 = vsub.s32 0, %v959
          %v961 = vrot.slane %v933, %v960
          %v962 = vlaneseq
          %v963 = vshrl.u32 %v962, 7
          %v964 = vsub.s32 0, %v963
          %v965 = vrot.slane %v935, %v964
          %v966 = vlaneseq
          %v967 = vshrl.u32 %v966, 7
          %v968 = vsub.s32 0, %v967
          %v969 = vrot.slane %v937, %v968
          %v978 = vmul.f32 %v941, %v875
          %v979 = vmul.f32 %v941, %v876
          %v980 = vmul.f32 %v945, %v875
          %v981 = vmul.f32 %v945, %v876
          %v982 = vmul.f32 %v949, %v875
          %v983 = vmul.f32 %v949, %v876
          %v984 = vmul.f32 %v953, %v875
          %v985 = vmul.f32 %v953, %v876
          %v986 = vmul.f32 %v957, %v875
          %v987 = vmul.f32 %v957, %v876
          %v988 = vmul.f32 %v961, %v875
          %v989 = vmul.f32 %v961, %v876
          %v990 = vmul.f32 %v965, %v875
          %v991 = vmul.f32 %v965, %v876
          %v992 = vmul.f32 %v969, %v875
          %v993 = vmul.f32 %v969, %v876
          %v994 = vmul.f32 %v978, 1.442695
          %v995 = vpow.pop %v994
          %v996 = vmul.f32 %v979, 1.442695
          %v997 = vpow.pop %v996
          %v998 = vmul.f32 %v980, 1.442695
          %v999 = vpow.pop %v998
          %v1000 = vmul.f32 %v981, 1.442695
          %v1001 = vpow.pop %v1000
          %v1002 = vmul.f32 %v982, 1.442695
          %v1003 = vpow.pop %v1002
          %v1004 = vmul.f32 %v983, 1.442695
          %v1005 = vpow.pop %v1004
          %v1006 = vmul.f32 %v984, 1.442695
          %v1007 = vpow.pop %v1006
          %v1008 = vmul.f32 %v985, 1.442695
          %v1009 = vpow.pop %v1008
          %v1010 = vmul.f32 %v986, 1.442695
          %v1011 = vpow.pop %v1010
          %v1012 = vmul.f32 %v987, 1.442695
          %v1013 = vpow.pop %v1012
          %v1014 = vmul.f32 %v988, 1.442695
          %v1015 = vpow.pop %v1014
          %v1016 = vmul.f32 %v989, 1.442695
          %v1017 = vpow.pop %v1016
          %v1018 = vmul.f32 %v990, 1.442695
          %v1019 = vpow.pop %v1018
          %v1020 = vmul.f32 %v991, 1.442695
          %v1021 = vpow.pop %v1020
          %v1022 = vmul.f32 %v992, 1.442695
          %v1023 = vpow.pop %v1022
          %v1024 = vmul.f32 %v993, 1.442695
          %v1025 = vpow.pop %v1024
          %1026 = vst [vmem:[#allocation5] sm:$0xff] %v995
          %1027 = vst [vmem:[#allocation5 + $0x8] sm:$0xff] %v997
          %1028 = vst [vmem:[#allocation5 + $0x10] sm:$0xff] %v999
          %1029 = vst [vmem:[#allocation5 + $0x18] sm:$0xff] %v1001
          %1030 = vst [vmem:[#allocation5 + $0x20] sm:$0xff] %v1003
          %1031 = vst [vmem:[#allocation5 + $0x28] sm:$0xff] %v1005
          %1032 = vst [vmem:[#allocation5 + $0x30] sm:$0xff] %v1007
          %1033 = vst [vmem:[#allocation5 + $0x38] sm:$0xff] %v1009
          %1034 = vst [vmem:[#allocation5 + $0x40] sm:$0xff] %v1011
          %1035 = vst [vmem:[#allocation5 + $0x48] sm:$0xff] %v1013
          %1036 = vst [vmem:[#allocation5 + $0x50] sm:$0xff] %v1015
          %1037 = vst [vmem:[#allocation5 + $0x58] sm:$0xff] %v1017
          %1038 = vst [vmem:[#allocation5 + $0x60] sm:$0xff] %v1019
          %1039 = vst [vmem:[#allocation5 + $0x68] sm:$0xff] %v1021
          %1040 = vst [vmem:[#allocation5 + $0x70] sm:$0xff] %v1023
          %1041 = vst [vmem:[#allocation5 + $0x78] sm:$0xff] %v1025
          %v1043 = vcombine.high %v877, %v877
          %v1045 = vunpack.c.l.s4 1966171168
          %v1046 = vunpack.c.0.s8 %v1045
          %v1047 = vlaneseq
          %v1048 = vshrl.u32 %v1047, 7
          %v1049 = vsub.s32 %v1046, %v1048
          %v1050 = vrot.slane %v877, %v1049
          %v1052 = vunpack.c.l.s4 1966171168
          %v1053 = vunpack.c.0.s8 %v1052
          %v1054 = vlaneseq
          %v1055 = vshrl.u32 %v1054, 7
          %v1056 = vsub.s32 %v1053, %v1055
          %v1057 = vrot.slane %v1043, %v1056
          %v1058 = vcombine.high %v1050, %v1050
          %v1059 = vcombine.high %v1057, %v1057
          %v1061 = vunpack.c.l.s4 1966171168
          %v1062 = vunpack.c.0.s8 %v1061
          %v1063 = vlaneseq
          %v1064 = vshrl.u32 %v1063, 7
          %v1065 = vsub.s32 %v1062, %v1064
          %v1066 = vrot.slane %v1050, %v1065
          %v1068 = vunpack.c.l.s4 1966171168
          %v1069 = vunpack.c.0.s8 %v1068
          %v1070 = vlaneseq
          %v1071 = vshrl.u32 %v1070, 7
          %v1072 = vsub.s32 %v1069, %v1071
          %v1073 = vrot.slane %v1057, %v1072
          %v1075 = vunpack.c.l.s4 1966171168
          %v1076 = vunpack.c.0.s8 %v1075
          %v1077 = vlaneseq
          %v1078 = vshrl.u32 %v1077, 7
          %v1079 = vsub.s32 %v1076, %v1078
          %v1080 = vrot.slane %v1058, %v1079
          %v1082 = vunpack.c.l.s4 1966171168
          %v1083 = vunpack.c.0.s8 %v1082
          %v1084 = vlaneseq
          %v1085 = vshrl.u32 %v1084, 7
          %v1086 = vsub.s32 %v1083, %v1085
          %v1087 = vrot.slane %v1059, %v1086
          %v1088 = vcombine.high %v1066, %v1066
          %v1089 = vcombine.high %v1073, %v1073
          %v1090 = vcombine.high %v1080, %v1080
          %v1091 = vcombine.high %v1087, %v1087
          %v1092 = vlaneseq
          %v1093 = vshrl.u32 %v1092, 7
          %v1094 = vsub.s32 0, %v1093
          %v1095 = vrot.slane %v772, %v1094
          %1097 = vbcast.lane.b32.xlu0 %v1095, 256
          %v1098 = vpop.permute.xlu0 %1097
          %s1100 = sor.u32 256, 8
          %1101 = vbcast.lane.b32.xlu0 %v1095, %s1100
          %v1102 = vpop.permute.xlu0 %1101
          %v1103 = vlaneseq
          %v1104 = vshrl.u32 %v1103, 7
          %v1105 = vsub.s32 1, %v1104
          %v1106 = vrot.slane %v772, %v1105
          %1108 = vbcast.lane.b32.xlu0 %v1106, 256
          %v1109 = vpop.permute.xlu0 %1108
          %s1111 = sor.u32 256, 8
          %1112 = vbcast.lane.b32.xlu0 %v1106, %s1111
          %v1113 = vpop.permute.xlu0 %1112
          %v1114 = vlaneseq
          %v1115 = vshrl.u32 %v1114, 7
          %v1116 = vsub.s32 2, %v1115
          %v1117 = vrot.slane %v772, %v1116
          %1119 = vbcast.lane.b32.xlu0 %v1117, 256
          %v1120 = vpop.permute.xlu0 %1119
          %s1122 = sor.u32 256, 8
          %1123 = vbcast.lane.b32.xlu0 %v1117, %s1122
          %v1124 = vpop.permute.xlu0 %1123
          %v1125 = vlaneseq
          %v1126 = vshrl.u32 %v1125, 7
          %v1127 = vsub.s32 3, %v1126
          %v1128 = vrot.slane %v772, %v1127
          %1130 = vbcast.lane.b32.xlu0 %v1128, 256
          %v1131 = vpop.permute.xlu0 %1130
          %s1133 = sor.u32 256, 8
          %1134 = vbcast.lane.b32.xlu0 %v1128, %s1133
          %v1135 = vpop.permute.xlu0 %1134
          %v1136 = vlaneseq
          %v1137 = vshrl.u32 %v1136, 7
          %v1138 = vsub.s32 4, %v1137
          %v1139 = vrot.slane %v772, %v1138
          %1141 = vbcast.lane.b32.xlu0 %v1139, 256
          %v1142 = vpop.permute.xlu0 %1141
          %s1144 = sor.u32 256, 8
          %1145 = vbcast.lane.b32.xlu0 %v1139, %s1144
          %v1146 = vpop.permute.xlu0 %1145
          %v1147 = vlaneseq
          %v1148 = vshrl.u32 %v1147, 7
          %v1149 = vsub.s32 5, %v1148
          %v1150 = vrot.slane %v772, %v1149
          %1152 = vbcast.lane.b32.xlu0 %v1150, 256
          %v1153 = vpop.permute.xlu0 %1152
          %s1155 = sor.u32 256, 8
          %1156 = vbcast.lane.b32.xlu0 %v1150, %s1155
          %v1157 = vpop.permute.xlu0 %1156
          %v1158 = vlaneseq
          %v1159 = vshrl.u32 %v1158, 7
          %v1160 = vsub.s32 6, %v1159
          %v1161 = vrot.slane %v772, %v1160
          %1163 = vbcast.lane.b32.xlu0 %v1161, 256
          %v1164 = vpop.permute.xlu0 %1163
          %s1166 = sor.u32 256, 8
          %1167 = vbcast.lane.b32.xlu0 %v1161, %s1166
          %v1168 = vpop.permute.xlu0 %1167
          %v1169 = vlaneseq
          %v1170 = vshrl.u32 %v1169, 7
          %v1171 = vsub.s32 7, %v1170
          %v1172 = vrot.slane %v772, %v1171
          %1174 = vbcast.lane.b32.xlu0 %v1172, 256
          %v1175 = vpop.permute.xlu0 %1174
          %s1177 = sor.u32 256, 8
          %1178 = vbcast.lane.b32.xlu0 %v1172, %s1177
          %v1179 = vpop.permute.xlu0 %1178
          %v1180 = vlaneseq
          %v1181 = vshrl.u32 %v1180, 7
          %v1182 = vsub.s32 0, %v1181
          %v1183 = vrot.slane %v1066, %v1182
          %v1184 = vlaneseq
          %v1185 = vshrl.u32 %v1184, 7
          %v1186 = vsub.s32 0, %v1185
          %v1187 = vrot.slane %v1080, %v1186
          %v1188 = vlaneseq
          %v1189 = vshrl.u32 %v1188, 7
          %v1190 = vsub.s32 0, %v1189
          %v1191 = vrot.slane %v1088, %v1190
          %v1192 = vlaneseq
          %v1193 = vshrl.u32 %v1192, 7
          %v1194 = vsub.s32 0, %v1193
          %v1195 = vrot.slane %v1090, %v1194
          %v1196 = vlaneseq
          %v1197 = vshrl.u32 %v1196, 7
          %v1198 = vsub.s32 0, %v1197
          %v1199 = vrot.slane %v1073, %v1198
          %v1200 = vlaneseq
          %v1201 = vshrl.u32 %v1200, 7
          %v1202 = vsub.s32 0, %v1201
          %v1203 = vrot.slane %v1087, %v1202
          %v1204 = vlaneseq
          %v1205 = vshrl.u32 %v1204, 7
          %v1206 = vsub.s32 0, %v1205
          %v1207 = vrot.slane %v1089, %v1206
          %v1208 = vlaneseq
          %v1209 = vshrl.u32 %v1208, 7
          %v1210 = vsub.s32 0, %v1209
          %v1211 = vrot.slane %v1091, %v1210
          %v1220 = vmul.f32 %v1183, %v1098
          %v1221 = vmul.f32 %v1183, %v1102
          %v1222 = vmul.f32 %v1187, %v1109
          %v1223 = vmul.f32 %v1187, %v1113
          %v1224 = vmul.f32 %v1191, %v1120
          %v1225 = vmul.f32 %v1191, %v1124
          %v1226 = vmul.f32 %v1195, %v1131
          %v1227 = vmul.f32 %v1195, %v1135
          %v1228 = vmul.f32 %v1199, %v1142
          %v1229 = vmul.f32 %v1199, %v1146
          %v1230 = vmul.f32 %v1203, %v1153
          %v1231 = vmul.f32 %v1203, %v1157
          %v1232 = vmul.f32 %v1207, %v1164
          %v1233 = vmul.f32 %v1207, %v1168
          %v1234 = vmul.f32 %v1211, %v1175
          %v1235 = vmul.f32 %v1211, %v1179
          %1236 = vst [vmem:[#allocation6] sm:$0xff] %v1220
          %1237 = vst [vmem:[#allocation6 + $0x8] sm:$0xff] %v1221
          %1238 = vst [vmem:[#allocation6 + $0x10] sm:$0xff] %v1222
          %1239 = vst [vmem:[#allocation6 + $0x18] sm:$0xff] %v1223
          %1240 = vst [vmem:[#allocation6 + $0x20] sm:$0xff] %v1224
          %1241 = vst [vmem:[#allocation6 + $0x28] sm:$0xff] %v1225
          %1242 = vst [vmem:[#allocation6 + $0x30] sm:$0xff] %v1226
          %1243 = vst [vmem:[#allocation6 + $0x38] sm:$0xff] %v1227
          %1244 = vst [vmem:[#allocation6 + $0x40] sm:$0xff] %v1228
          %1245 = vst [vmem:[#allocation6 + $0x48] sm:$0xff] %v1229
          %1246 = vst [vmem:[#allocation6 + $0x50] sm:$0xff] %v1230
          %1247 = vst [vmem:[#allocation6 + $0x58] sm:$0xff] %v1231
          %1248 = vst [vmem:[#allocation6 + $0x60] sm:$0xff] %v1232
          %1249 = vst [vmem:[#allocation6 + $0x68] sm:$0xff] %v1233
          %1250 = vst [vmem:[#allocation6 + $0x70] sm:$0xff] %v1234
          %1251 = vst [vmem:[#allocation6 + $0x78] sm:$0xff] %v1235
          %v1252 = vld [vmem:[#allocation5] sm:$0xff]
          %v1253 = vld [vmem:[#allocation5 + $0x8] sm:$0xff]
          %v1254 = vmul.f32 %v1252, 0.0
          %v1255 = vmul.f32 %v1253, 0.0
          %v1256 = vld [vmem:[#allocation6] sm:$0xff]
          %v1257 = vld [vmem:[#allocation6 + $0x8] sm:$0xff]
          %v1258 = vadd.f32 %v1254, %v1256
          %v1259 = vadd.f32 %v1255, %v1257
          %1260 = vst [vmem:[#allocation6] sm:$0xff] %v1258
          %1261 = vst [vmem:[#allocation6 + $0x8] sm:$0xff] %v1259
          %s1262 = scalar_lea.vmem [#allocation5], 16
          %v1263 = vld [vmem:[%s1262] sm:$0xff]
          %v1264 = vld [vmem:[%s1262 + $0x8] sm:$0xff]
          %v1265 = vmul.f32 %v1263, %v1258
          %v1266 = vmul.f32 %v1264, %v1259
          %s1267 = scalar_lea.vmem [#allocation6], 16
          %v1268 = vld [vmem:[%s1267] sm:$0xff]
          %v1269 = vld [vmem:[%s1267 + $0x8] sm:$0xff]
          %v1270 = vadd.f32 %v1265, %v1268
          %v1271 = vadd.f32 %v1266, %v1269
          %1272 = vst [vmem:[%s1267] sm:$0xff] %v1270
          %1273 = vst [vmem:[%s1267 + $0x8] sm:$0xff] %v1271
          %s1274 = scalar_lea.vmem [#allocation5], 32
          %v1275 = vld [vmem:[%s1274] sm:$0xff]
          %v1276 = vld [vmem:[%s1274 + $0x8] sm:$0xff]
          %v1277 = vmul.f32 %v1275, %v1270
          %v1278 = vmul.f32 %v1276, %v1271
          %s1279 = scalar_lea.vmem [#allocation6], 32
          %v1280 = vld [vmem:[%s1279] sm:$0xff]
          %v1281 = vld [vmem:[%s1279 + $0x8] sm:$0xff]
          %v1282 = vadd.f32 %v1277, %v1280
          %v1283 = vadd.f32 %v1278, %v1281
          %1284 = vst [vmem:[%s1279] sm:$0xff] %v1282
          %1285 = vst [vmem:[%s1279 + $0x8] sm:$0xff] %v1283
          %s1286 = scalar_lea.vmem [#allocation5], 48
          %v1287 = vld [vmem:[%s1286] sm:$0xff]
          %v1288 = vld [vmem:[%s1286 + $0x8] sm:$0xff]
          %v1289 = vmul.f32 %v1287, %v1282
          %v1290 = vmul.f32 %v1288, %v1283
          %s1291 = scalar_lea.vmem [#allocation6], 48
          %v1292 = vld [vmem:[%s1291] sm:$0xff]
          %v1293 = vld [vmem:[%s1291 + $0x8] sm:$0xff]
          %v1294 = vadd.f32 %v1289, %v1292
          %v1295 = vadd.f32 %v1290, %v1293
          %1296 = vst [vmem:[%s1291] sm:$0xff] %v1294
          %1297 = vst [vmem:[%s1291 + $0x8] sm:$0xff] %v1295
          %s1298 = scalar_lea.vmem [#allocation5], 64
          %v1299 = vld [vmem:[%s1298] sm:$0xff]
          %v1300 = vld [vmem:[%s1298 + $0x8] sm:$0xff]
          %v1301 = vmul.f32 %v1299, %v1294
          %v1302 = vmul.f32 %v1300, %v1295
          %s1303 = scalar_lea.vmem [#allocation6], 64
          %v1304 = vld [vmem:[%s1303] sm:$0xff]
          %v1305 = vld [vmem:[%s1303 + $0x8] sm:$0xff]
          %v1306 = vadd.f32 %v1301, %v1304
          %v1307 = vadd.f32 %v1302, %v1305
          %1308 = vst [vmem:[%s1303] sm:$0xff] %v1306
          %1309 = vst [vmem:[%s1303 + $0x8] sm:$0xff] %v1307
          %s1310 = scalar_lea.vmem [#allocation5], 80
          %v1311 = vld [vmem:[%s1310] sm:$0xff]
          %v1312 = vld [vmem:[%s1310 + $0x8] sm:$0xff]
          %v1313 = vmul.f32 %v1311, %v1306
          %v1314 = vmul.f32 %v1312, %v1307
          %s1315 = scalar_lea.vmem [#allocation6], 80
          %v1316 = vld [vmem:[%s1315] sm:$0xff]
          %v1317 = vld [vmem:[%s1315 + $0x8] sm:$0xff]
          %v1318 = vadd.f32 %v1313, %v1316
          %v1319 = vadd.f32 %v1314, %v1317
          %1320 = vst [vmem:[%s1315] sm:$0xff] %v1318
          %1321 = vst [vmem:[%s1315 + $0x8] sm:$0xff] %v1319
          %s1322 = scalar_lea.vmem [#allocation5], 96
          %v1323 = vld [vmem:[%s1322] sm:$0xff]
          %v1324 = vld [vmem:[%s1322 + $0x8] sm:$0xff]
          %v1325 = vmul.f32 %v1323, %v1318
          %v1326 = vmul.f32 %v1324, %v1319
          %s1327 = scalar_lea.vmem [#allocation6], 96
          %v1328 = vld [vmem:[%s1327] sm:$0xff]
          %v1329 = vld [vmem:[%s1327 + $0x8] sm:$0xff]
          %v1330 = vadd.f32 %v1325, %v1328
          %v1331 = vadd.f32 %v1326, %v1329
          %1332 = vst [vmem:[%s1327] sm:$0xff] %v1330
          %1333 = vst [vmem:[%s1327 + $0x8] sm:$0xff] %v1331
          %s1334 = scalar_lea.vmem [#allocation5], 112
          %v1335 = vld [vmem:[%s1334] sm:$0xff]
          %v1336 = vld [vmem:[%s1334 + $0x8] sm:$0xff]
          %v1337 = vmul.f32 %v1335, %v1330
          %v1338 = vmul.f32 %v1336, %v1331
          %s1339 = scalar_lea.vmem [#allocation6], 112
          %v1340 = vld [vmem:[%s1339] sm:$0xff]
          %v1341 = vld [vmem:[%s1339 + $0x8] sm:$0xff]
          %v1342 = vadd.f32 %v1337, %v1340
          %v1343 = vadd.f32 %v1338, %v1341
          %1344 = vst [vmem:[%s1339] sm:$0xff] %v1342
          %1345 = vst [vmem:[%s1339 + $0x8] sm:$0xff] %v1343
          %v1346 = vld [vmem:[#allocation6] sm:$0xff]
          %v1347 = vld [vmem:[#allocation6 + $0x8] sm:$0xff]
          %v1348 = vld [vmem:[#allocation6 + $0x10] sm:$0xff]
          %v1349 = vld [vmem:[#allocation6 + $0x18] sm:$0xff]
          %v1350 = vld [vmem:[#allocation6 + $0x20] sm:$0xff]
          %v1351 = vld [vmem:[#allocation6 + $0x28] sm:$0xff]
          %v1352 = vld [vmem:[#allocation6 + $0x30] sm:$0xff]
          %v1353 = vld [vmem:[#allocation6 + $0x38] sm:$0xff]
          %v1354 = vld [vmem:[#allocation6 + $0x40] sm:$0xff]
          %v1355 = vld [vmem:[#allocation6 + $0x48] sm:$0xff]
          %v1356 = vld [vmem:[#allocation6 + $0x50] sm:$0xff]
          %v1357 = vld [vmem:[#allocation6 + $0x58] sm:$0xff]
          %v1358 = vld [vmem:[#allocation6 + $0x60] sm:$0xff]
          %v1359 = vld [vmem:[#allocation6 + $0x68] sm:$0xff]
          %v1360 = vld [vmem:[#allocation6 + $0x70] sm:$0xff]
          %v1361 = vld [vmem:[#allocation6 + $0x78] sm:$0xff]
          %s1363 = sor.u32 256, 16
          %1364 = vbcast.lane.b32.xlu0 %v1095, %s1363
          %v1365 = vpop.permute.xlu0 %1364
          %s1367 = sor.u32 256, 24
          %1368 = vbcast.lane.b32.xlu0 %v1095, %s1367
          %v1369 = vpop.permute.xlu0 %1368
          %s1371 = sor.u32 256, 16
          %1372 = vbcast.lane.b32.xlu0 %v1106, %s1371
          %v1373 = vpop.permute.xlu0 %1372
          %s1375 = sor.u32 256, 24
          %1376 = vbcast.lane.b32.xlu0 %v1106, %s1375
          %v1377 = vpop.permute.xlu0 %1376
          %s1379 = sor.u32 256, 16
          %1380 = vbcast.lane.b32.xlu0 %v1117, %s1379
          %v1381 = vpop.permute.xlu0 %1380
          %s1383 = sor.u32 256, 24
          %1384 = vbcast.lane.b32.xlu0 %v1117, %s1383
          %v1385 = vpop.permute.xlu0 %1384
          %s1387 = sor.u32 256, 16
          %1388 = vbcast.lane.b32.xlu0 %v1128, %s1387
          %v1389 = vpop.permute.xlu0 %1388
          %s1391 = sor.u32 256, 24
          %1392 = vbcast.lane.b32.xlu0 %v1128, %s1391
          %v1393 = vpop.permute.xlu0 %1392
          %s1395 = sor.u32 256, 16
          %1396 = vbcast.lane.b32.xlu0 %v1139, %s1395
          %v1397 = vpop.permute.xlu0 %1396
          %s1399 = sor.u32 256, 24
          %1400 = vbcast.lane.b32.xlu0 %v1139, %s1399
          %v1401 = vpop.permute.xlu0 %1400
          %s1403 = sor.u32 256, 16
          %1404 = vbcast.lane.b32.xlu0 %v1150, %s1403
          %v1405 = vpop.permute.xlu0 %1404
          %s1407 = sor.u32 256, 24
          %1408 = vbcast.lane.b32.xlu0 %v1150, %s1407
          %v1409 = vpop.permute.xlu0 %1408
          %s1411 = sor.u32 256, 16
          %1412 = vbcast.lane.b32.xlu0 %v1161, %s1411
          %v1413 = vpop.permute.xlu0 %1412
          %s1415 = sor.u32 256, 24
          %1416 = vbcast.lane.b32.xlu0 %v1161, %s1415
          %v1417 = vpop.permute.xlu0 %1416
          %s1419 = sor.u32 256, 16
          %1420 = vbcast.lane.b32.xlu0 %v1172, %s1419
          %v1421 = vpop.permute.xlu0 %1420
          %s1423 = sor.u32 256, 24
          %1424 = vbcast.lane.b32.xlu0 %v1172, %s1423
          %v1425 = vpop.permute.xlu0 %1424
          %v1426 = vmul.f32 %v1346, %v1365
          %v1427 = vmul.f32 %v1347, %v1369
          %v1428 = vmul.f32 %v1348, %v1373
          %v1429 = vmul.f32 %v1349, %v1377
          %v1430 = vmul.f32 %v1350, %v1381
          %v1431 = vmul.f32 %v1351, %v1385
          %v1432 = vmul.f32 %v1352, %v1389
          %v1433 = vmul.f32 %v1353, %v1393
          %v1434 = vmul.f32 %v1354, %v1397
          %v1435 = vmul.f32 %v1355, %v1401
          %v1436 = vmul.f32 %v1356, %v1405
          %v1437 = vmul.f32 %v1357, %v1409
          %v1438 = vmul.f32 %v1358, %v1413
          %v1439 = vmul.f32 %v1359, %v1417
          %v1440 = vmul.f32 %v1360, %v1421
          %v1441 = vmul.f32 %v1361, %v1425
          %v1442 = vadd.f32 %v1426, %v1427
          %v1443 = vrot.slane %v1442, 4
          %v1444 = vadd.f32 %v1442, %v1443
          %v1445 = vrot.slane %v1444, 2
          %v1446 = vadd.f32 %v1444, %v1445
          %v1447 = vrot.slane %v1446, 1
          %v1448 = vadd.f32 %v1446, %v1447
          %v1449 = vadd.f32 %v1428, %v1429
          %v1450 = vrot.slane %v1449, 4
          %v1451 = vadd.f32 %v1449, %v1450
          %v1452 = vrot.slane %v1451, 2
          %v1453 = vadd.f32 %v1451, %v1452
          %v1454 = vrot.slane %v1453, 1
          %v1455 = vadd.f32 %v1453, %v1454
          %v1456 = vadd.f32 %v1430, %v1431
          %v1457 = vrot.slane %v1456, 4
          %v1458 = vadd.f32 %v1456, %v1457
          %v1459 = vrot.slane %v1458, 2
          %v1460 = vadd.f32 %v1458, %v1459
          %v1461 = vrot.slane %v1460, 1
          %v1462 = vadd.f32 %v1460, %v1461
          %v1463 = vadd.f32 %v1432, %v1433
          %v1464 = vrot.slane %v1463, 4
          %v1465 = vadd.f32 %v1463, %v1464
          %v1466 = vrot.slane %v1465, 2
          %v1467 = vadd.f32 %v1465, %v1466
          %v1468 = vrot.slane %v1467, 1
          %v1469 = vadd.f32 %v1467, %v1468
          %v1470 = vadd.f32 %v1434, %v1435
          %v1471 = vrot.slane %v1470, 4
          %v1472 = vadd.f32 %v1470, %v1471
          %v1473 = vrot.slane %v1472, 2
          %v1474 = vadd.f32 %v1472, %v1473
          %v1475 = vrot.slane %v1474, 1
          %v1476 = vadd.f32 %v1474, %v1475
          %v1477 = vadd.f32 %v1436, %v1437
          %v1478 = vrot.slane %v1477, 4
          %v1479 = vadd.f32 %v1477, %v1478
          %v1480 = vrot.slane %v1479, 2
          %v1481 = vadd.f32 %v1479, %v1480
          %v1482 = vrot.slane %v1481, 1
          %v1483 = vadd.f32 %v1481, %v1482
          %v1484 = vadd.f32 %v1438, %v1439
          %v1485 = vrot.slane %v1484, 4
          %v1486 = vadd.f32 %v1484, %v1485
          %v1487 = vrot.slane %v1486, 2
          %v1488 = vadd.f32 %v1486, %v1487
          %v1489 = vrot.slane %v1488, 1
          %v1490 = vadd.f32 %v1488, %v1489
          %v1491 = vadd.f32 %v1440, %v1441
          %v1492 = vrot.slane %v1491, 4
          %v1493 = vadd.f32 %v1491, %v1492
          %v1494 = vrot.slane %v1493, 2
          %v1495 = vadd.f32 %v1493, %v1494
          %v1496 = vrot.slane %v1495, 1
          %v1497 = vadd.f32 %v1495, %v1496
          %v1499 = vrot.slane %v886, 1
          %v1500 = vrot.slane %v886, 2
          %v1501 = vrot.slane %v886, 3
          %v1502 = vrot.slane %v886, 4
          %v1503 = vrot.slane %v886, 5
          %v1504 = vrot.slane %v886, 6
          %v1505 = vrot.slane %v886, 7
          %v1514 = vadd.f32 %v1448, %v886
          %v1515 = vadd.f32 %v1455, %v1499
          %v1516 = vadd.f32 %v1462, %v1500
          %v1517 = vadd.f32 %v1469, %v1501
          %v1518 = vadd.f32 %v1476, %v1502
          %v1519 = vadd.f32 %v1483, %v1503
          %v1520 = vadd.f32 %v1490, %v1504
          %v1521 = vadd.f32 %v1497, %v1505
          %v1530 = vrot.slane %v1515, 7
          %vm1531 = vcmask 1041409
          %v1532 = vsel %vm1531, %v1530, %v1514
          %v1533 = vrot.slane %v1516, 6
          %vm1534 = vcmask 1042434
          %v1535 = vsel %vm1534, %v1533, %v1532
          %v1536 = vrot.slane %v1517, 5
          %vm1537 = vcmask 1043459
          %v1538 = vsel %vm1537, %v1536, %v1535
          %v1539 = vrot.slane %v1518, 4
          %vm1540 = vcmask 1044484
          %v1541 = vsel %vm1540, %v1539, %v1538
          %v1542 = vrot.slane %v1519, 3
          %vm1543 = vcmask 1045509
          %v1544 = vsel %vm1543, %v1542, %v1541
          %v1545 = vrot.slane %v1520, 2
          %vm1546 = vcmask 1046534
          %v1547 = vsel %vm1546, %v1545, %v1544
          %v1548 = vrot.slane %v1521, 1
          %vm1549 = vcmask 1047559
          %v1550 = vsel %vm1549, %v1548, %v1547
          %1552 = vst [vmem:[#allocation4] sm:$0xff] %v1550
          %v1554 = vcombine.high %v868, %v868
          %v1556 = vunpack.c.l.s4 1966171168
          %v1557 = vunpack.c.0.s8 %v1556
          %v1558 = vlaneseq
          %v1559 = vshrl.u32 %v1558, 7
          %v1560 = vsub.s32 %v1557, %v1559
          %v1561 = vrot.slane %v868, %v1560
          %v1563 = vunpack.c.l.s4 1966171168
          %v1564 = vunpack.c.0.s8 %v1563
          %v1565 = vlaneseq
          %v1566 = vshrl.u32 %v1565, 7
          %v1567 = vsub.s32 %v1564, %v1566
          %v1568 = vrot.slane %v1554, %v1567
          %v1569 = vcombine.high %v1561, %v1561
          %v1570 = vcombine.high %v1568, %v1568
          %v1572 = vunpack.c.l.s4 1966171168
          %v1573 = vunpack.c.0.s8 %v1572
          %v1574 = vlaneseq
          %v1575 = vshrl.u32 %v1574, 7
          %v1576 = vsub.s32 %v1573, %v1575
          %v1577 = vrot.slane %v1561, %v1576
          %v1579 = vunpack.c.l.s4 1966171168
          %v1580 = vunpack.c.0.s8 %v1579
          %v1581 = vlaneseq
          %v1582 = vshrl.u32 %v1581, 7
          %v1583 = vsub.s32 %v1580, %v1582
          %v1584 = vrot.slane %v1568, %v1583
          %v1586 = vunpack.c.l.s4 1966171168
          %v1587 = vunpack.c.0.s8 %v1586
          %v1588 = vlaneseq
          %v1589 = vshrl.u32 %v1588, 7
          %v1590 = vsub.s32 %v1587, %v1589
          %v1591 = vrot.slane %v1569, %v1590
          %v1593 = vunpack.c.l.s4 1966171168
          %v1594 = vunpack.c.0.s8 %v1593
          %v1595 = vlaneseq
          %v1596 = vshrl.u32 %v1595, 7
          %v1597 = vsub.s32 %v1594, %v1596
          %v1598 = vrot.slane %v1570, %v1597
          %v1599 = vcombine.high %v1577, %v1577
          %v1600 = vcombine.high %v1584, %v1584
          %v1601 = vcombine.high %v1591, %v1591
          %v1602 = vcombine.high %v1598, %v1598
          %v1603 = vlaneseq
          %v1604 = vshrl.u32 %v1603, 7
          %v1605 = vsub.s32 0, %v1604
          %v1606 = vrot.slane %v1577, %v1605
          %v1607 = vlaneseq
          %v1608 = vshrl.u32 %v1607, 7
          %v1609 = vsub.s32 0, %v1608
          %v1610 = vrot.slane %v1591, %v1609
          %v1611 = vlaneseq
          %v1612 = vshrl.u32 %v1611, 7
          %v1613 = vsub.s32 0, %v1612
          %v1614 = vrot.slane %v1599, %v1613
          %v1615 = vlaneseq
          %v1616 = vshrl.u32 %v1615, 7
          %v1617 = vsub.s32 0, %v1616
          %v1618 = vrot.slane %v1601, %v1617
          %v1619 = vlaneseq
          %v1620 = vshrl.u32 %v1619, 7
          %v1621 = vsub.s32 0, %v1620
          %v1622 = vrot.slane %v1584, %v1621
          %v1623 = vlaneseq
          %v1624 = vshrl.u32 %v1623, 7
          %v1625 = vsub.s32 0, %v1624
          %v1626 = vrot.slane %v1598, %v1625
          %v1627 = vlaneseq
          %v1628 = vshrl.u32 %v1627, 7
          %v1629 = vsub.s32 0, %v1628
          %v1630 = vrot.slane %v1600, %v1629
          %v1631 = vlaneseq
          %v1632 = vshrl.u32 %v1631, 7
          %v1633 = vsub.s32 0, %v1632
          %v1634 = vrot.slane %v1602, %v1633
          %v1643 = vmul.f32 %v1606, %v875
          %v1644 = vmul.f32 %v1606, %v876
          %v1645 = vmul.f32 %v1610, %v875
          %v1646 = vmul.f32 %v1610, %v876
          %v1647 = vmul.f32 %v1614, %v875
          %v1648 = vmul.f32 %v1614, %v876
          %v1649 = vmul.f32 %v1618, %v875
          %v1650 = vmul.f32 %v1618, %v876
          %v1651 = vmul.f32 %v1622, %v875
          %v1652 = vmul.f32 %v1622, %v876
          %v1653 = vmul.f32 %v1626, %v875
          %v1654 = vmul.f32 %v1626, %v876
          %v1655 = vmul.f32 %v1630, %v875
          %v1656 = vmul.f32 %v1630, %v876
          %v1657 = vmul.f32 %v1634, %v875
          %v1658 = vmul.f32 %v1634, %v876
          %v1659 = vmul.f32 %v1643, 1.442695
          %v1660 = vpow.pop %v1659
          %v1661 = vmul.f32 %v1644, 1.442695
          %v1662 = vpow.pop %v1661
          %v1663 = vmul.f32 %v1645, 1.442695
          %v1664 = vpow.pop %v1663
          %v1665 = vmul.f32 %v1646, 1.442695
          %v1666 = vpow.pop %v1665
          %v1667 = vmul.f32 %v1647, 1.442695
          %v1668 = vpow.pop %v1667
          %v1669 = vmul.f32 %v1648, 1.442695
          %v1670 = vpow.pop %v1669
          %v1671 = vmul.f32 %v1649, 1.442695
          %v1672 = vpow.pop %v1671
          %v1673 = vmul.f32 %v1650, 1.442695
          %v1674 = vpow.pop %v1673
          %v1675 = vmul.f32 %v1651, 1.442695
          %v1676 = vpow.pop %v1675
          %v1677 = vmul.f32 %v1652, 1.442695
          %v1678 = vpow.pop %v1677
          %v1679 = vmul.f32 %v1653, 1.442695
          %v1680 = vpow.pop %v1679
          %v1681 = vmul.f32 %v1654, 1.442695
          %v1682 = vpow.pop %v1681
          %v1683 = vmul.f32 %v1655, 1.442695
          %v1684 = vpow.pop %v1683
          %v1685 = vmul.f32 %v1656, 1.442695
          %v1686 = vpow.pop %v1685
          %v1687 = vmul.f32 %v1657, 1.442695
          %v1688 = vpow.pop %v1687
          %v1689 = vmul.f32 %v1658, 1.442695
          %v1690 = vpow.pop %v1689
          %1691 = vst [vmem:[#allocation5] sm:$0xff] %v1660
          %1692 = vst [vmem:[#allocation5 + $0x8] sm:$0xff] %v1662
          %1693 = vst [vmem:[#allocation5 + $0x10] sm:$0xff] %v1664
          %1694 = vst [vmem:[#allocation5 + $0x18] sm:$0xff] %v1666
          %1695 = vst [vmem:[#allocation5 + $0x20] sm:$0xff] %v1668
          %1696 = vst [vmem:[#allocation5 + $0x28] sm:$0xff] %v1670
          %1697 = vst [vmem:[#allocation5 + $0x30] sm:$0xff] %v1672
          %1698 = vst [vmem:[#allocation5 + $0x38] sm:$0xff] %v1674
          %1699 = vst [vmem:[#allocation5 + $0x40] sm:$0xff] %v1676
          %1700 = vst [vmem:[#allocation5 + $0x48] sm:$0xff] %v1678
          %1701 = vst [vmem:[#allocation5 + $0x50] sm:$0xff] %v1680
          %1702 = vst [vmem:[#allocation5 + $0x58] sm:$0xff] %v1682
          %1703 = vst [vmem:[#allocation5 + $0x60] sm:$0xff] %v1684
          %1704 = vst [vmem:[#allocation5 + $0x68] sm:$0xff] %v1686
          %1705 = vst [vmem:[#allocation5 + $0x70] sm:$0xff] %v1688
          %1706 = vst [vmem:[#allocation5 + $0x78] sm:$0xff] %v1690
          %v1708 = vcombine.high %v878, %v878
          %v1710 = vunpack.c.l.s4 1966171168
          %v1711 = vunpack.c.0.s8 %v1710
          %v1712 = vlaneseq
          %v1713 = vshrl.u32 %v1712, 7
          %v1714 = vsub.s32 %v1711, %v1713
          %v1715 = vrot.slane %v878, %v1714
          %v1717 = vunpack.c.l.s4 1966171168
          %v1718 = vunpack.c.0.s8 %v1717
          %v1719 = vlaneseq
          %v1720 = vshrl.u32 %v1719, 7
          %v1721 = vsub.s32 %v1718, %v1720
          %v1722 = vrot.slane %v1708, %v1721
          %v1723 = vcombine.high %v1715, %v1715
          %v1724 = vcombine.high %v1722, %v1722
          %v1726 = vunpack.c.l.s4 1966171168
          %v1727 = vunpack.c.0.s8 %v1726
          %v1728 = vlaneseq
          %v1729 = vshrl.u32 %v1728, 7
          %v1730 = vsub.s32 %v1727, %v1729
          %v1731 = vrot.slane %v1715, %v1730
          %v1733 = vunpack.c.l.s4 1966171168
          %v1734 = vunpack.c.0.s8 %v1733
          %v1735 = vlaneseq
          %v1736 = vshrl.u32 %v1735, 7
          %v1737 = vsub.s32 %v1734, %v1736
          %v1738 = vrot.slane %v1722, %v1737
          %v1740 = vunpack.c.l.s4 1966171168
          %v1741 = vunpack.c.0.s8 %v1740
          %v1742 = vlaneseq
          %v1743 = vshrl.u32 %v1742, 7
          %v1744 = vsub.s32 %v1741, %v1743
          %v1745 = vrot.slane %v1723, %v1744
          %v1747 = vunpack.c.l.s4 1966171168
          %v1748 = vunpack.c.0.s8 %v1747
          %v1749 = vlaneseq
          %v1750 = vshrl.u32 %v1749, 7
          %v1751 = vsub.s32 %v1748, %v1750
          %v1752 = vrot.slane %v1724, %v1751
          %v1753 = vcombine.high %v1731, %v1731
          %v1754 = vcombine.high %v1738, %v1738
          %v1755 = vcombine.high %v1745, %v1745
          %v1756 = vcombine.high %v1752, %v1752
          %v1757 = vlaneseq
          %v1758 = vshrl.u32 %v1757, 7
          %v1759 = vsub.s32 0, %v1758
          %v1760 = vrot.slane %v775, %v1759
          %1762 = vbcast.lane.b32.xlu0 %v1760, 256
          %v1763 = vpop.permute.xlu0 %1762
          %s1765 = sor.u32 256, 8
          %1766 = vbcast.lane.b32.xlu0 %v1760, %s1765
          %v1767 = vpop.permute.xlu0 %1766
          %v1768 = vlaneseq
          %v1769 = vshrl.u32 %v1768, 7
          %v1770 = vsub.s32 1, %v1769
          %v1771 = vrot.slane %v775, %v1770
          %1773 = vbcast.lane.b32.xlu0 %v1771, 256
          %v1774 = vpop.permute.xlu0 %1773
          %s1776 = sor.u32 256, 8
          %1777 = vbcast.lane.b32.xlu0 %v1771, %s1776
          %v1778 = vpop.permute.xlu0 %1777
          %v1779 = vlaneseq
          %v1780 = vshrl.u32 %v1779, 7
          %v1781 = vsub.s32 2, %v1780
          %v1782 = vrot.slane %v775, %v1781
          %1784 = vbcast.lane.b32.xlu0 %v1782, 256
          %v1785 = vpop.permute.xlu0 %1784
          %s1787 = sor.u32 256, 8
          %1788 = vbcast.lane.b32.xlu0 %v1782, %s1787
          %v1789 = vpop.permute.xlu0 %1788
          %v1790 = vlaneseq
          %v1791 = vshrl.u32 %v1790, 7
          %v1792 = vsub.s32 3, %v1791
          %v1793 = vrot.slane %v775, %v1792
          %1795 = vbcast.lane.b32.xlu0 %v1793, 256
          %v1796 = vpop.permute.xlu0 %1795
          %s1798 = sor.u32 256, 8
          %1799 = vbcast.lane.b32.xlu0 %v1793, %s1798
          %v1800 = vpop.permute.xlu0 %1799
          %v1801 = vlaneseq
          %v1802 = vshrl.u32 %v1801, 7
          %v1803 = vsub.s32 4, %v1802
          %v1804 = vrot.slane %v775, %v1803
          %1806 = vbcast.lane.b32.xlu0 %v1804, 256
          %v1807 = vpop.permute.xlu0 %1806
          %s1809 = sor.u32 256, 8
          %1810 = vbcast.lane.b32.xlu0 %v1804, %s1809
          %v1811 = vpop.permute.xlu0 %1810
          %v1812 = vlaneseq
          %v1813 = vshrl.u32 %v1812, 7
          %v1814 = vsub.s32 5, %v1813
          %v1815 = vrot.slane %v775, %v1814
          %1817 = vbcast.lane.b32.xlu0 %v1815, 256
          %v1818 = vpop.permute.xlu0 %1817
          %s1820 = sor.u32 256, 8
          %1821 = vbcast.lane.b32.xlu0 %v1815, %s1820
          %v1822 = vpop.permute.xlu0 %1821
          %v1823 = vlaneseq
          %v1824 = vshrl.u32 %v1823, 7
          %v1825 = vsub.s32 6, %v1824
          %v1826 = vrot.slane %v775, %v1825
          %1828 = vbcast.lane.b32.xlu0 %v1826, 256
          %v1829 = vpop.permute.xlu0 %1828
          %s1831 = sor.u32 256, 8
          %1832 = vbcast.lane.b32.xlu0 %v1826, %s1831
          %v1833 = vpop.permute.xlu0 %1832
          %v1834 = vlaneseq
          %v1835 = vshrl.u32 %v1834, 7
          %v1836 = vsub.s32 7, %v1835
          %v1837 = vrot.slane %v775, %v1836
          %1839 = vbcast.lane.b32.xlu0 %v1837, 256
          %v1840 = vpop.permute.xlu0 %1839
          %s1842 = sor.u32 256, 8
          %1843 = vbcast.lane.b32.xlu0 %v1837, %s1842
          %v1844 = vpop.permute.xlu0 %1843
          %v1845 = vlaneseq
          %v1846 = vshrl.u32 %v1845, 7
          %v1847 = vsub.s32 0, %v1846
          %v1848 = vrot.slane %v1731, %v1847
          %v1849 = vlaneseq
          %v1850 = vshrl.u32 %v1849, 7
          %v1851 = vsub.s32 0, %v1850
          %v1852 = vrot.slane %v1745, %v1851
          %v1853 = vlaneseq
          %v1854 = vshrl.u32 %v1853, 7
          %v1855 = vsub.s32 0, %v1854
          %v1856 = vrot.slane %v1753, %v1855
          %v1857 = vlaneseq
          %v1858 = vshrl.u32 %v1857, 7
          %v1859 = vsub.s32 0, %v1858
          %v1860 = vrot.slane %v1755, %v1859
          %v1861 = vlaneseq
          %v1862 = vshrl.u32 %v1861, 7
          %v1863 = vsub.s32 0, %v1862
          %v1864 = vrot.slane %v1738, %v1863
          %v1865 = vlaneseq
          %v1866 = vshrl.u32 %v1865, 7
          %v1867 = vsub.s32 0, %v1866
          %v1868 = vrot.slane %v1752, %v1867
          %v1869 = vlaneseq
          %v1870 = vshrl.u32 %v1869, 7
          %v1871 = vsub.s32 0, %v1870
          %v1872 = vrot.slane %v1754, %v1871
          %v1873 = vlaneseq
          %v1874 = vshrl.u32 %v1873, 7
          %v1875 = vsub.s32 0, %v1874
          %v1876 = vrot.slane %v1756, %v1875
          %v1885 = vmul.f32 %v1848, %v1763
          %v1886 = vmul.f32 %v1848, %v1767
          %v1887 = vmul.f32 %v1852, %v1774
          %v1888 = vmul.f32 %v1852, %v1778
          %v1889 = vmul.f32 %v1856, %v1785
          %v1890 = vmul.f32 %v1856, %v1789
          %v1891 = vmul.f32 %v1860, %v1796
          %v1892 = vmul.f32 %v1860, %v1800
          %v1893 = vmul.f32 %v1864, %v1807
          %v1894 = vmul.f32 %v1864, %v1811
          %v1895 = vmul.f32 %v1868, %v1818
          %v1896 = vmul.f32 %v1868, %v1822
          %v1897 = vmul.f32 %v1872, %v1829
          %v1898 = vmul.f32 %v1872, %v1833
          %v1899 = vmul.f32 %v1876, %v1840
          %v1900 = vmul.f32 %v1876, %v1844
          %1901 = vst [vmem:[#allocation6] sm:$0xff] %v1885
          %1902 = vst [vmem:[#allocation6 + $0x8] sm:$0xff] %v1886
          %1903 = vst [vmem:[#allocation6 + $0x10] sm:$0xff] %v1887
          %1904 = vst [vmem:[#allocation6 + $0x18] sm:$0xff] %v1888
          %1905 = vst [vmem:[#allocation6 + $0x20] sm:$0xff] %v1889
          %1906 = vst [vmem:[#allocation6 + $0x28] sm:$0xff] %v1890
          %1907 = vst [vmem:[#allocation6 + $0x30] sm:$0xff] %v1891
          %1908 = vst [vmem:[#allocation6 + $0x38] sm:$0xff] %v1892
          %1909 = vst [vmem:[#allocation6 + $0x40] sm:$0xff] %v1893
          %1910 = vst [vmem:[#allocation6 + $0x48] sm:$0xff] %v1894
          %1911 = vst [vmem:[#allocation6 + $0x50] sm:$0xff] %v1895
          %1912 = vst [vmem:[#allocation6 + $0x58] sm:$0xff] %v1896
          %1913 = vst [vmem:[#allocation6 + $0x60] sm:$0xff] %v1897
          %1914 = vst [vmem:[#allocation6 + $0x68] sm:$0xff] %v1898
          %1915 = vst [vmem:[#allocation6 + $0x70] sm:$0xff] %v1899
          %1916 = vst [vmem:[#allocation6 + $0x78] sm:$0xff] %v1900
          %v1917 = vld [vmem:[#allocation5] sm:$0xff]
          %v1918 = vld [vmem:[#allocation5 + $0x8] sm:$0xff]
          %v1919 = vmul.f32 %v1917, %v1342
          %v1920 = vmul.f32 %v1918, %v1343
          %v1921 = vld [vmem:[#allocation6] sm:$0xff]
          %v1922 = vld [vmem:[#allocation6 + $0x8] sm:$0xff]
          %v1923 = vadd.f32 %v1919, %v1921
          %v1924 = vadd.f32 %v1920, %v1922
          %1925 = vst [vmem:[#allocation6] sm:$0xff] %v1923
          %1926 = vst [vmem:[#allocation6 + $0x8] sm:$0xff] %v1924
          %v1927 = vld [vmem:[%s1262] sm:$0xff]
          %v1928 = vld [vmem:[%s1262 + $0x8] sm:$0xff]
          %v1929 = vmul.f32 %v1927, %v1923
          %v1930 = vmul.f32 %v1928, %v1924
          %v1931 = vld [vmem:[%s1267] sm:$0xff]
          %v1932 = vld [vmem:[%s1267 + $0x8] sm:$0xff]
          %v1933 = vadd.f32 %v1929, %v1931
          %v1934 = vadd.f32 %v1930, %v1932
          %1935 = vst [vmem:[%s1267] sm:$0xff] %v1933
          %1936 = vst [vmem:[%s1267 + $0x8] sm:$0xff] %v1934
          %v1937 = vld [vmem:[%s1274] sm:$0xff]
          %v1938 = vld [vmem:[%s1274 + $0x8] sm:$0xff]
          %v1939 = vmul.f32 %v1937, %v1933
          %v1940 = vmul.f32 %v1938, %v1934
          %v1941 = vld [vmem:[%s1279] sm:$0xff]
          %v1942 = vld [vmem:[%s1279 + $0x8] sm:$0xff]
          %v1943 = vadd.f32 %v1939, %v1941
          %v1944 = vadd.f32 %v1940, %v1942
          %1945 = vst [vmem:[%s1279] sm:$0xff] %v1943
          %1946 = vst [vmem:[%s1279 + $0x8] sm:$0xff] %v1944
          %v1947 = vld [vmem:[%s1286] sm:$0xff]
          %v1948 = vld [vmem:[%s1286 + $0x8] sm:$0xff]
          %v1949 = vmul.f32 %v1947, %v1943
          %v1950 = vmul.f32 %v1948, %v1944
          %v1951 = vld [vmem:[%s1291] sm:$0xff]
          %v1952 = vld [vmem:[%s1291 + $0x8] sm:$0xff]
          %v1953 = vadd.f32 %v1949, %v1951
          %v1954 = vadd.f32 %v1950, %v1952
          %1955 = vst [vmem:[%s1291] sm:$0xff] %v1953
          %1956 = vst [vmem:[%s1291 + $0x8] sm:$0xff] %v1954
          %v1957 = vld [vmem:[%s1298] sm:$0xff]
          %v1958 = vld [vmem:[%s1298 + $0x8] sm:$0xff]
          %v1959 = vmul.f32 %v1957, %v1953
          %v1960 = vmul.f32 %v1958, %v1954
          %v1961 = vld [vmem:[%s1303] sm:$0xff]
          %v1962 = vld [vmem:[%s1303 + $0x8] sm:$0xff]
          %v1963 = vadd.f32 %v1959, %v1961
          %v1964 = vadd.f32 %v1960, %v1962
          %1965 = vst [vmem:[%s1303] sm:$0xff] %v1963
          %1966 = vst [vmem:[%s1303 + $0x8] sm:$0xff] %v1964
          %v1967 = vld [vmem:[%s1310] sm:$0xff]
          %v1968 = vld [vmem:[%s1310 + $0x8] sm:$0xff]
          %v1969 = vmul.f32 %v1967, %v1963
          %v1970 = vmul.f32 %v1968, %v1964
          %v1971 = vld [vmem:[%s1315] sm:$0xff]
          %v1972 = vld [vmem:[%s1315 + $0x8] sm:$0xff]
          %v1973 = vadd.f32 %v1969, %v1971
          %v1974 = vadd.f32 %v1970, %v1972
          %1975 = vst [vmem:[%s1315] sm:$0xff] %v1973
          %1976 = vst [vmem:[%s1315 + $0x8] sm:$0xff] %v1974
          %v1977 = vld [vmem:[%s1322] sm:$0xff]
          %v1978 = vld [vmem:[%s1322 + $0x8] sm:$0xff]
          %v1979 = vmul.f32 %v1977, %v1973
          %v1980 = vmul.f32 %v1978, %v1974
          %v1981 = vld [vmem:[%s1327] sm:$0xff]
          %v1982 = vld [vmem:[%s1327 + $0x8] sm:$0xff]
          %v1983 = vadd.f32 %v1979, %v1981
          %v1984 = vadd.f32 %v1980, %v1982
          %1985 = vst [vmem:[%s1327] sm:$0xff] %v1983
          %1986 = vst [vmem:[%s1327 + $0x8] sm:$0xff] %v1984
          %v1987 = vld [vmem:[%s1334] sm:$0xff]
          %v1988 = vld [vmem:[%s1334 + $0x8] sm:$0xff]
          %v1989 = vmul.f32 %v1987, %v1983
          %v1990 = vmul.f32 %v1988, %v1984
          %v1991 = vld [vmem:[%s1339] sm:$0xff]
          %v1992 = vld [vmem:[%s1339 + $0x8] sm:$0xff]
          %v1993 = vadd.f32 %v1989, %v1991
          %v1994 = vadd.f32 %v1990, %v1992
          %1995 = vst [vmem:[%s1339] sm:$0xff] %v1993
          %1996 = vst [vmem:[%s1339 + $0x8] sm:$0xff] %v1994
          %v1997 = vld [vmem:[#allocation6] sm:$0xff]
          %v1998 = vld [vmem:[#allocation6 + $0x8] sm:$0xff]
          %v1999 = vld [vmem:[#allocation6 + $0x10] sm:$0xff]
          %v2000 = vld [vmem:[#allocation6 + $0x18] sm:$0xff]
          %v2001 = vld [vmem:[#allocation6 + $0x20] sm:$0xff]
          %v2002 = vld [vmem:[#allocation6 + $0x28] sm:$0xff]
          %v2003 = vld [vmem:[#allocation6 + $0x30] sm:$0xff]
          %v2004 = vld [vmem:[#allocation6 + $0x38] sm:$0xff]
          %v2005 = vld [vmem:[#allocation6 + $0x40] sm:$0xff]
          %v2006 = vld [vmem:[#allocation6 + $0x48] sm:$0xff]
          %v2007 = vld [vmem:[#allocation6 + $0x50] sm:$0xff]
          %v2008 = vld [vmem:[#allocation6 + $0x58] sm:$0xff]
          %v2009 = vld [vmem:[#allocation6 + $0x60] sm:$0xff]
          %v2010 = vld [vmem:[#allocation6 + $0x68] sm:$0xff]
          %v2011 = vld [vmem:[#allocation6 + $0x70] sm:$0xff]
          %v2012 = vld [vmem:[#allocation6 + $0x78] sm:$0xff]
          %s2014 = sor.u32 256, 16
          %2015 = vbcast.lane.b32.xlu0 %v1760, %s2014
          %v2016 = vpop.permute.xlu0 %2015
          %s2018 = sor.u32 256, 24
          %2019 = vbcast.lane.b32.xlu0 %v1760, %s2018
          %v2020 = vpop.permute.xlu0 %2019
          %s2022 = sor.u32 256, 16
          %2023 = vbcast.lane.b32.xlu0 %v1771, %s2022
          %v2024 = vpop.permute.xlu0 %2023
          %s2026 = sor.u32 256, 24
          %2027 = vbcast.lane.b32.xlu0 %v1771, %s2026
          %v2028 = vpop.permute.xlu0 %2027
          %s2030 = sor.u32 256, 16
          %2031 = vbcast.lane.b32.xlu0 %v1782, %s2030
          %v2032 = vpop.permute.xlu0 %2031
          %s2034 = sor.u32 256, 24
          %2035 = vbcast.lane.b32.xlu0 %v1782, %s2034
          %v2036 = vpop.permute.xlu0 %2035
          %s2038 = sor.u32 256, 16
          %2039 = vbcast.lane.b32.xlu0 %v1793, %s2038
          %v2040 = vpop.permute.xlu0 %2039
          %s2042 = sor.u32 256, 24
          %2043 = vbcast.lane.b32.xlu0 %v1793, %s2042
          %v2044 = vpop.permute.xlu0 %2043
          %s2046 = sor.u32 256, 16
          %2047 = vbcast.lane.b32.xlu0 %v1804, %s2046
          %v2048 = vpop.permute.xlu0 %2047
          %s2050 = sor.u32 256, 24
          %2051 = vbcast.lane.b32.xlu0 %v1804, %s2050
          %v2052 = vpop.permute.xlu0 %2051
          %s2054 = sor.u32 256, 16
          %2055 = vbcast.lane.b32.xlu0 %v1815, %s2054
          %v2056 = vpop.permute.xlu0 %2055
          %s2058 = sor.u32 256, 24
          %2059 = vbcast.lane.b32.xlu0 %v1815, %s2058
          %v2060 = vpop.permute.xlu0 %2059
          %s2062 = sor.u32 256, 16
          %2063 = vbcast.lane.b32.xlu0 %v1826, %s2062
          %v2064 = vpop.permute.xlu0 %2063
          %s2066 = sor.u32 256, 24
          %2067 = vbcast.lane.b32.xlu0 %v1826, %s2066
          %v2068 = vpop.permute.xlu0 %2067
          %s2070 = sor.u32 256, 16
          %2071 = vbcast.lane.b32.xlu0 %v1837, %s2070
          %v2072 = vpop.permute.xlu0 %2071
          %s2074 = sor.u32 256, 24
          %2075 = vbcast.lane.b32.xlu0 %v1837, %s2074
          %v2076 = vpop.permute.xlu0 %2075
          %v2077 = vmul.f32 %v1997, %v2016
          %v2078 = vmul.f32 %v1998, %v2020
          %v2079 = vmul.f32 %v1999, %v2024
          %v2080 = vmul.f32 %v2000, %v2028
          %v2081 = vmul.f32 %v2001, %v2032
          %v2082 = vmul.f32 %v2002, %v2036
          %v2083 = vmul.f32 %v2003, %v2040
          %v2084 = vmul.f32 %v2004, %v2044
          %v2085 = vmul.f32 %v2005, %v2048
          %v2086 = vmul.f32 %v2006, %v2052
          %v2087 = vmul.f32 %v2007, %v2056
          %v2088 = vmul.f32 %v2008, %v2060
          %v2089 = vmul.f32 %v2009, %v2064
          %v2090 = vmul.f32 %v2010, %v2068
          %v2091 = vmul.f32 %v2011, %v2072
          %v2092 = vmul.f32 %v2012, %v2076
          %v2093 = vadd.f32 %v2077, %v2078
          %v2094 = vrot.slane %v2093, 4
          %v2095 = vadd.f32 %v2093, %v2094
          %v2096 = vrot.slane %v2095, 2
          %v2097 = vadd.f32 %v2095, %v2096
          %v2098 = vrot.slane %v2097, 1
          %v2099 = vadd.f32 %v2097, %v2098
          %v2100 = vadd.f32 %v2079, %v2080
          %v2101 = vrot.slane %v2100, 4
          %v2102 = vadd.f32 %v2100, %v2101
          %v2103 = vrot.slane %v2102, 2
          %v2104 = vadd.f32 %v2102, %v2103
          %v2105 = vrot.slane %v2104, 1
          %v2106 = vadd.f32 %v2104, %v2105
          %v2107 = vadd.f32 %v2081, %v2082
          %v2108 = vrot.slane %v2107, 4
          %v2109 = vadd.f32 %v2107, %v2108
          %v2110 = vrot.slane %v2109, 2
          %v2111 = vadd.f32 %v2109, %v2110
          %v2112 = vrot.slane %v2111, 1
          %v2113 = vadd.f32 %v2111, %v2112
          %v2114 = vadd.f32 %v2083, %v2084
          %v2115 = vrot.slane %v2114, 4
          %v2116 = vadd.f32 %v2114, %v2115
          %v2117 = vrot.slane %v2116, 2
          %v2118 = vadd.f32 %v2116, %v2117
          %v2119 = vrot.slane %v2118, 1
          %v2120 = vadd.f32 %v2118, %v2119
          %v2121 = vadd.f32 %v2085, %v2086
          %v2122 = vrot.slane %v2121, 4
          %v2123 = vadd.f32 %v2121, %v2122
          %v2124 = vrot.slane %v2123, 2
          %v2125 = vadd.f32 %v2123, %v2124
          %v2126 = vrot.slane %v2125, 1
          %v2127 = vadd.f32 %v2125, %v2126
          %v2128 = vadd.f32 %v2087, %v2088
          %v2129 = vrot.slane %v2128, 4
          %v2130 = vadd.f32 %v2128, %v2129
          %v2131 = vrot.slane %v2130, 2
          %v2132 = vadd.f32 %v2130, %v2131
          %v2133 = vrot.slane %v2132, 1
          %v2134 = vadd.f32 %v2132, %v2133
          %v2135 = vadd.f32 %v2089, %v2090
          %v2136 = vrot.slane %v2135, 4
          %v2137 = vadd.f32 %v2135, %v2136
          %v2138 = vrot.slane %v2137, 2
          %v2139 = vadd.f32 %v2137, %v2138
          %v2140 = vrot.slane %v2139, 1
          %v2141 = vadd.f32 %v2139, %v2140
          %v2142 = vadd.f32 %v2091, %v2092
          %v2143 = vrot.slane %v2142, 4
          %v2144 = vadd.f32 %v2142, %v2143
          %v2145 = vrot.slane %v2144, 2
          %v2146 = vadd.f32 %v2144, %v2145
          %v2147 = vrot.slane %v2146, 1
          %v2148 = vadd.f32 %v2146, %v2147
          %v2150 = vrot.slane %v887, 1
          %v2151 = vrot.slane %v887, 2
          %v2152 = vrot.slane %v887, 3
          %v2153 = vrot.slane %v887, 4
          %v2154 = vrot.slane %v887, 5
          %v2155 = vrot.slane %v887, 6
          %v2156 = vrot.slane %v887, 7
          %v2165 = vadd.f32 %v2099, %v887
          %v2166 = vadd.f32 %v2106, %v2150
          %v2167 = vadd.f32 %v2113, %v2151
          %v2168 = vadd.f32 %v2120, %v2152
          %v2169 = vadd.f32 %v2127, %v2153
          %v2170 = vadd.f32 %v2134, %v2154
          %v2171 = vadd.f32 %v2141, %v2155
          %v2172 = vadd.f32 %v2148, %v2156
          %v2181 = vrot.slane %v2166, 7
          %v2182 = vsel %vm1531, %v2181, %v2165
          %v2183 = vrot.slane %v2167, 6
          %v2184 = vsel %vm1534, %v2183, %v2182
          %v2185 = vrot.slane %v2168, 5
          %v2186 = vsel %vm1537, %v2185, %v2184
          %v2187 = vrot.slane %v2169, 4
          %v2188 = vsel %vm1540, %v2187, %v2186
          %v2189 = vrot.slane %v2170, 3
          %v2190 = vsel %vm1543, %v2189, %v2188
          %v2191 = vrot.slane %v2171, 2
          %v2192 = vsel %vm1546, %v2191, %v2190
          %v2193 = vrot.slane %v2172, 1
          %v2194 = vsel %vm1549, %v2193, %v2192
          %2196 = vst [vmem:[#allocation4 + $0x8] sm:$0xff] %v2194
        $region64: #{tpu_custom_call.1} parent=59 // pred_fallthru
          _
        %p2197 = scmp.eq.s32.totalorder %s29, 1
        // Predicated region
        $region65: #{tpu_custom_call.1} parent=59 // pred_check
          %p2198 = pneg %p2197
        $region66: #{tpu_custom_call.1} parent=59 // pred_check_branch
          %2200 = sbr.rel (%p2198) target = $region68
        $region67: #{tpu_custom_call.1} parent=59 // pred_region
          %v2201 = vld [vmem:[%s462] sm:$0xf]
          %v2202 = vld [vmem:[%s465] sm:$0x1]
          %v2204 = vlaneseq
          %v2205 = vshrl.u32 %v2204, 7
          %v2206 = vsub.s32 0, %v2205
          %v2207 = vrot.slane %v2202, %v2206
          %v2209 = vadd.f32 %v2207, 0.0
          %v2210 = vld [vmem:[#allocation2 + $0xb] sm:$0xff]
          %v2211 = vld [vmem:[#allocation2 + $0x13] sm:$0xff]
          %v2212 = vlaneseq
          %v2213 = vshrl.u32 %v2212, 7
          %v2214 = vsub.s32 0, %v2213
          %v2215 = vrot.slane %v2201, %v2214
          %v2216 = vmul.f32 %v2215, %v2210
          %v2217 = vmul.f32 %v2215, %v2211
          %v2218 = vadd.f32 %v2209, %v2216
          %v2219 = vadd.f32 %v2209, %v2217
          %v2220 = vld [vmem:[#allocation2 + $0xa] sm:$0xff]
          %v2221 = vld [vmem:[#allocation2 + $0x12] sm:$0xff]
          %v2222 = vlaneseq
          %v2223 = vshrl.u32 %v2222, 7
          %v2224 = vsub.s32 1, %v2223
          %v2225 = vrot.slane %v2201, %v2224
          %v2226 = vmul.f32 %v2225, %v2220
          %v2227 = vmul.f32 %v2225, %v2221
          %v2228 = vadd.f32 %v2218, %v2226
          %v2229 = vadd.f32 %v2219, %v2227
          %v2230 = vld [vmem:[#allocation2 + $0x9] sm:$0xff]
          %v2231 = vld [vmem:[#allocation2 + $0x11] sm:$0xff]
          %v2232 = vlaneseq
          %v2233 = vshrl.u32 %v2232, 7
          %v2234 = vsub.s32 2, %v2233
          %v2235 = vrot.slane %v2201, %v2234
          %v2236 = vmul.f32 %v2235, %v2230
          %v2237 = vmul.f32 %v2235, %v2231
          %v2238 = vadd.f32 %v2228, %v2236
          %v2239 = vadd.f32 %v2229, %v2237
          %v2240 = vld [vmem:[#allocation2 + $0x8] sm:$0xff]
          %v2241 = vld [vmem:[#allocation2 + $0x10] sm:$0xff]
          %v2242 = vlaneseq
          %v2243 = vshrl.u32 %v2242, 7
          %v2244 = vsub.s32 3, %v2243
          %v2245 = vrot.slane %v2201, %v2244
          %v2246 = vmul.f32 %v2245, %v2240
          %v2247 = vmul.f32 %v2245, %v2241
          %v2248 = vadd.f32 %v2238, %v2246
          %v2249 = vadd.f32 %v2239, %v2247
          %v2250 = vsub.f32 0.0, %v2248
          %v2251 = vsub.f32 0.0, %v2249
          %v2252 = vmul.f32 %v2250, 1.442695
          %v2253 = vpow.pop %v2252
          %v2254 = vmul.f32 %v2251, 1.442695
          %v2255 = vpow.pop %v2254
          %v2256 = vadd.f32 %v2253, 1.0
          %v2257 = vadd.f32 %v2255, 1.0
          %v2258 = vrcp.pop %v2256
          %v2259 = vrcp.pop %v2257
          %v2260 = vmul.f32 %v2248, %v2258
          %v2261 = vmul.f32 %v2249, %v2259
          %v2262 = vpack.c.bf16 %v2261, %v2260
          %v2263 = vld [vmem:[%s470] sm:$0xf]
          %v2264 = vld [vmem:[%s470 + $0x4] sm:$0xf]
          %v2265 = vld [vmem:[%s470 + $0x8] sm:$0xf]
          %v2266 = vld [vmem:[%s470 + $0xc] sm:$0xf]
          %v2267 = vld [vmem:[%s470 + $0x10] sm:$0xf]
          %v2268 = vld [vmem:[%s470 + $0x14] sm:$0xf]
          %v2269 = vld [vmem:[%s470 + $0x18] sm:$0xf]
          %v2270 = vld [vmem:[%s470 + $0x1c] sm:$0xf]
          %v2271 = vld [vmem:[%s470 + $0x20] sm:$0xf]
          %v2272 = vld [vmem:[%s470 + $0x24] sm:$0xf]
          %v2273 = vld [vmem:[%s470 + $0x28] sm:$0xf]
          %v2274 = vld [vmem:[%s470 + $0x2c] sm:$0xf]
          %v2275 = vld [vmem:[%s470 + $0x30] sm:$0xf]
          %v2276 = vld [vmem:[%s470 + $0x34] sm:$0xf]
          %v2277 = vld [vmem:[%s470 + $0x38] sm:$0xf]
          %v2278 = vld [vmem:[%s470 + $0x3c] sm:$0xf]
          %v2295 = vunpack.c.l.b16 %v2263
          %v2296 = vunpack.c.l.b16 %v2264
          %v2297 = vunpack.c.l.b16 %v2265
          %v2298 = vunpack.c.l.b16 %v2266
          %v2299 = vunpack.c.l.b16 %v2267
          %v2300 = vunpack.c.l.b16 %v2268
          %v2301 = vunpack.c.l.b16 %v2269
          %v2302 = vunpack.c.l.b16 %v2270
          %v2303 = vunpack.c.l.b16 %v2271
          %v2304 = vunpack.c.l.b16 %v2272
          %v2305 = vunpack.c.l.b16 %v2273
          %v2306 = vunpack.c.l.b16 %v2274
          %v2307 = vunpack.c.l.b16 %v2275
          %v2308 = vunpack.c.l.b16 %v2276
          %v2309 = vunpack.c.l.b16 %v2277
          %v2310 = vunpack.c.l.b16 %v2278
          %v2311 = vpack.c.b16 %v2296, %v2295
          %v2312 = vpack.c.b16 %v2298, %v2297
          %v2313 = vpack.c.b16 %v2300, %v2299
          %v2314 = vpack.c.b16 %v2302, %v2301
          %v2315 = vpack.c.b16 %v2304, %v2303
          %v2316 = vpack.c.b16 %v2306, %v2305
          %v2317 = vpack.c.b16 %v2308, %v2307
          %v2318 = vpack.c.b16 %v2310, %v2309
          %2327 = vmatprep.subr.bf16.mxu0 0
          %2328 = vmatpush1.bf16.msra.mxu0 %v2311
          %2329 = vmatprep.subr.bf16.mxu0 0
          %2330 = vmatpush1.bf16.msra.mxu0 %v2312
          %2331 = vmatprep.subr.bf16.mxu0 0
          %2332 = vmatpush1.bf16.msra.mxu0 %v2313
          %2333 = vmatprep.subr.bf16.mxu0 0
          %2334 = vmatpush1.bf16.msra.mxu0 %v2314
          %2335 = vmatprep.subr.bf16.mxu0 0
          %2336 = vmatpush1.bf16.msra.mxu0 %v2315
          %2337 = vmatprep.subr.bf16.mxu0 0
          %2338 = vmatpush1.bf16.msra.mxu0 %v2316
          %2339 = vmatprep.subr.bf16.mxu0 0
          %2340 = vmatpush1.bf16.msra.mxu0 %v2317
          %2341 = vmatprep.subr.bf16.mxu0 0
          %2342 = vmatpush1.bf16.msra.mxu0 %v2318
          %2343 = vmatprep.subr.bf16.mxu0 0
          %2344 = vmatpush1.bf16.msra.mxu0 0
          %2345 = vmatprep.subr.bf16.mxu0 0
          %2346 = vmatpush1.bf16.msra.mxu0 0
          %2347 = vmatprep.subr.bf16.mxu0 0
          %2348 = vmatpush1.bf16.msra.mxu0 0
          %2349 = vmatprep.subr.bf16.mxu0 0
          %2350 = vmatpush1.bf16.msra.mxu0 0
          %2351 = vmatprep.subr.bf16.mxu0 0
          %2352 = vmatpush1.bf16.msra.mxu0 0
          %2353 = vmatprep.subr.bf16.mxu0 0
          %2354 = vmatpush1.bf16.msra.mxu0 0
          %2355 = vmatprep.subr.bf16.mxu0 0
          %2356 = vmatpush1.bf16.msra.mxu0 0
          %2357 = vmatprep.subr.bf16.mxu0 0
          %2358 = vmatpush1.bf16.msra.mxu0 0
          %2359 = vmatprep.mubr.bf16.mxu0 0
          %2360 = vmatmul.mubr.bf16.gmra.mrb[0].mxu0 %v2262
          %v2361 = vpop.f32.mrb[0].mxu0
          %v2362 = vadd.f32 0.0, %v2361
          %v2363 = vpop.f32.mrb[0].mxu0
          %v2364 = vpop.f32.mrb[0].mxu0
          %v2365 = vadd.f32 0.0, %v2364
          %v2366 = vpop.f32.mrb[0].mxu0
          %2367 = vdwg.mxu0
          %v2368 = vld [vmem:[%s474] sm:$0xf]
          %v2369 = vld [vmem:[%s477] sm:$0x1]
          %v2371 = vlaneseq
          %v2372 = vshrl.u32 %v2371, 7
          %v2373 = vsub.s32 0, %v2372
          %v2374 = vrot.slane %v2369, %v2373
          %v2376 = vadd.f32 %v2374, 0.0
          %2378 = vset.pattern.permute.xlu0 32
          %2379 = vperm.xlu0 %2378, %v2362
          %v2380 = vpop.permute.xlu0 %2379
          %2383 = vset.pattern.permute.xlu0 32
          %2384 = vperm.xlu0 %2383, %v2365
          %v2385 = vpop.permute.xlu0 %2384
          %v2387 = vlaneseq
          %v2388 = vshrl.u32 %v2387, 7
          %v2389 = vsub.s32 0, %v2388
          %v2390 = vrot.slane %v2368, %v2389
          %v2391 = vmul.f32 %v2380, %v2390
          %v2392 = vmul.f32 %v2385, %v2390
          %v2393 = vadd.f32 %v2376, %v2391
          %v2394 = vadd.f32 %v2376, %v2392
          %2395 = vset.pattern.permute.xlu0 33
          %2396 = vperm.xlu0 %2395, %v2362
          %v2397 = vpop.permute.xlu0 %2396
          %2399 = vset.pattern.permute.xlu0 33
          %2400 = vperm.xlu0 %2399, %v2365
          %v2401 = vpop.permute.xlu0 %2400
          %v2403 = vlaneseq
          %v2404 = vshrl.u32 %v2403, 7
          %v2405 = vsub.s32 1, %v2404
          %v2406 = vrot.slane %v2368, %v2405
          %v2407 = vmul.f32 %v2397, %v2406
          %v2408 = vmul.f32 %v2401, %v2406
          %v2409 = vadd.f32 %v2393, %v2407
          %v2410 = vadd.f32 %v2394, %v2408
          %2411 = vset.pattern.permute.xlu0 34
          %2412 = vperm.xlu0 %2411, %v2362
          %v2413 = vpop.permute.xlu0 %2412
          %2415 = vset.pattern.permute.xlu0 34
          %2416 = vperm.xlu0 %2415, %v2365
          %v2417 = vpop.permute.xlu0 %2416
          %v2419 = vlaneseq
          %v2420 = vshrl.u32 %v2419, 7
          %v2421 = vsub.s32 2, %v2420
          %v2422 = vrot.slane %v2368, %v2421
          %v2423 = vmul.f32 %v2413, %v2422
          %v2424 = vmul.f32 %v2417, %v2422
          %v2425 = vadd.f32 %v2409, %v2423
          %v2426 = vadd.f32 %v2410, %v2424
          %2427 = vset.pattern.permute.xlu0 35
          %2428 = vperm.xlu0 %2427, %v2362
          %v2429 = vpop.permute.xlu0 %2428
          %2431 = vset.pattern.permute.xlu0 35
          %2432 = vperm.xlu0 %2431, %v2365
          %v2433 = vpop.permute.xlu0 %2432
          %v2435 = vlaneseq
          %v2436 = vshrl.u32 %v2435, 7
          %v2437 = vsub.s32 3, %v2436
          %v2438 = vrot.slane %v2368, %v2437
          %v2439 = vmul.f32 %v2429, %v2438
          %v2440 = vmul.f32 %v2433, %v2438
          %v2441 = vadd.f32 %v2425, %v2439
          %v2442 = vadd.f32 %v2426, %v2440
          %vm2443 = vcmp.gt.f32.partialorder %v2441, 20.0
          %vm2444 = vcmp.gt.f32.partialorder %v2442, 20.0
          %v2445 = vmin.f32 %v2441, 20.0
          %v2446 = vmin.f32 %v2442, 20.0
          %v2447 = vmul.f32 %v2445, 1.442695
          %v2448 = vpow.pop %v2447
          %v2449 = vmul.f32 %v2446, 1.442695
          %v2450 = vpow.pop %v2449
          %v2451 = vadd.f32 %v2448, 1.0
          %v2452 = vadd.f32 %v2450, 1.0
          %v2453 = vlog2.pop %v2451
          %v2454 = vmul.f32 %v2453, 0.6931472
          %v2455 = vlog2.pop %v2452
          %v2456 = vmul.f32 %v2455, 0.6931472
          %v2457 = vsel %vm2443, %v2441, %v2454
          %v2458 = vsel %vm2444, %v2442, %v2456
          %v2459 = vld [vmem:[%s482] sm:$0xff]
          %v2460 = vld [vmem:[%s482 + $0x8] sm:$0xff]
          %v2461 = vmul.f32 %v2459, 1.442695
          %v2462 = vpow.pop %v2461
          %v2463 = vmul.f32 %v2460, 1.442695
          %v2464 = vpow.pop %v2463
          %v2465 = vsub.f32 0.0, %v2462
          %v2466 = vsub.f32 0.0, %v2464
          %v2467 = vmul.f32 %v2457, %v2260
          %v2468 = vmul.f32 %v2458, %v2261
          %v2469 = vld [vmem:[%s485] sm:$0x1]
          %v2471 = vlaneseq
          %v2472 = vshrl.u32 %v2471, 7
          %v2473 = vsub.s32 0, %v2472
          %v2474 = vrot.slane %v2469, %v2473
          %v2476 = vmul.f32 %v2260, %v2474
          %v2477 = vmul.f32 %v2261, %v2474
          %v2479 = vcombine.high %v2458, %v2458
          %v2481 = vunpack.c.l.s4 1966171168
          %v2482 = vunpack.c.0.s8 %v2481
          %v2483 = vlaneseq
          %v2484 = vshrl.u32 %v2483, 7
          %v2485 = vsub.s32 %v2482, %v2484
          %v2486 = vrot.slane %v2458, %v2485
          %v2488 = vunpack.c.l.s4 1966171168
          %v2489 = vunpack.c.0.s8 %v2488
          %v2490 = vlaneseq
          %v2491 = vshrl.u32 %v2490, 7
          %v2492 = vsub.s32 %v2489, %v2491
          %v2493 = vrot.slane %v2479, %v2492
          %v2494 = vcombine.high %v2486, %v2486
          %v2495 = vcombine.high %v2493, %v2493
          %v2497 = vunpack.c.l.s4 1966171168
          %v2498 = vunpack.c.0.s8 %v2497
          %v2499 = vlaneseq
          %v2500 = vshrl.u32 %v2499, 7
          %v2501 = vsub.s32 %v2498, %v2500
          %v2502 = vrot.slane %v2486, %v2501
          %v2504 = vunpack.c.l.s4 1966171168
          %v2505 = vunpack.c.0.s8 %v2504
          %v2506 = vlaneseq
          %v2507 = vshrl.u32 %v2506, 7
          %v2508 = vsub.s32 %v2505, %v2507
          %v2509 = vrot.slane %v2493, %v2508
          %v2511 = vunpack.c.l.s4 1966171168
          %v2512 = vunpack.c.0.s8 %v2511
          %v2513 = vlaneseq
          %v2514 = vshrl.u32 %v2513, 7
          %v2515 = vsub.s32 %v2512, %v2514
          %v2516 = vrot.slane %v2494, %v2515
          %v2518 = vunpack.c.l.s4 1966171168
          %v2519 = vunpack.c.0.s8 %v2518
          %v2520 = vlaneseq
          %v2521 = vshrl.u32 %v2520, 7
          %v2522 = vsub.s32 %v2519, %v2521
          %v2523 = vrot.slane %v2495, %v2522
          %v2524 = vcombine.high %v2502, %v2502
          %v2525 = vcombine.high %v2509, %v2509
          %v2526 = vcombine.high %v2516, %v2516
          %v2527 = vcombine.high %v2523, %v2523
          %v2528 = vlaneseq
          %v2529 = vshrl.u32 %v2528, 7
          %v2530 = vsub.s32 0, %v2529
          %v2531 = vrot.slane %v2502, %v2530
          %v2532 = vlaneseq
          %v2533 = vshrl.u32 %v2532, 7
          %v2534 = vsub.s32 0, %v2533
          %v2535 = vrot.slane %v2516, %v2534
          %v2536 = vlaneseq
          %v2537 = vshrl.u32 %v2536, 7
          %v2538 = vsub.s32 0, %v2537
          %v2539 = vrot.slane %v2524, %v2538
          %v2540 = vlaneseq
          %v2541 = vshrl.u32 %v2540, 7
          %v2542 = vsub.s32 0, %v2541
          %v2543 = vrot.slane %v2526, %v2542
          %v2544 = vlaneseq
          %v2545 = vshrl.u32 %v2544, 7
          %v2546 = vsub.s32 0, %v2545
          %v2547 = vrot.slane %v2509, %v2546
          %v2548 = vlaneseq
          %v2549 = vshrl.u32 %v2548, 7
          %v2550 = vsub.s32 0, %v2549
          %v2551 = vrot.slane %v2523, %v2550
          %v2552 = vlaneseq
          %v2553 = vshrl.u32 %v2552, 7
          %v2554 = vsub.s32 0, %v2553
          %v2555 = vrot.slane %v2525, %v2554
          %v2556 = vlaneseq
          %v2557 = vshrl.u32 %v2556, 7
          %v2558 = vsub.s32 0, %v2557
          %v2559 = vrot.slane %v2527, %v2558
          %v2568 = vmul.f32 %v2531, %v2465
          %v2569 = vmul.f32 %v2531, %v2466
          %v2570 = vmul.f32 %v2535, %v2465
          %v2571 = vmul.f32 %v2535, %v2466
          %v2572 = vmul.f32 %v2539, %v2465
          %v2573 = vmul.f32 %v2539, %v2466
          %v2574 = vmul.f32 %v2543, %v2465
          %v2575 = vmul.f32 %v2543, %v2466
          %v2576 = vmul.f32 %v2547, %v2465
          %v2577 = vmul.f32 %v2547, %v2466
          %v2578 = vmul.f32 %v2551, %v2465
          %v2579 = vmul.f32 %v2551, %v2466
          %v2580 = vmul.f32 %v2555, %v2465
          %v2581 = vmul.f32 %v2555, %v2466
          %v2582 = vmul.f32 %v2559, %v2465
          %v2583 = vmul.f32 %v2559, %v2466
          %v2584 = vmul.f32 %v2568, 1.442695
          %v2585 = vpow.pop %v2584
          %v2586 = vmul.f32 %v2569, 1.442695
          %v2587 = vpow.pop %v2586
          %v2588 = vmul.f32 %v2570, 1.442695
          %v2589 = vpow.pop %v2588
          %v2590 = vmul.f32 %v2571, 1.442695
          %v2591 = vpow.pop %v2590
          %v2592 = vmul.f32 %v2572, 1.442695
          %v2593 = vpow.pop %v2592
          %v2594 = vmul.f32 %v2573, 1.442695
          %v2595 = vpow.pop %v2594
          %v2596 = vmul.f32 %v2574, 1.442695
          %v2597 = vpow.pop %v2596
          %v2598 = vmul.f32 %v2575, 1.442695
          %v2599 = vpow.pop %v2598
          %v2600 = vmul.f32 %v2576, 1.442695
          %v2601 = vpow.pop %v2600
          %v2602 = vmul.f32 %v2577, 1.442695
          %v2603 = vpow.pop %v2602
          %v2604 = vmul.f32 %v2578, 1.442695
          %v2605 = vpow.pop %v2604
          %v2606 = vmul.f32 %v2579, 1.442695
          %v2607 = vpow.pop %v2606
          %v2608 = vmul.f32 %v2580, 1.442695
          %v2609 = vpow.pop %v2608
          %v2610 = vmul.f32 %v2581, 1.442695
          %v2611 = vpow.pop %v2610
          %v2612 = vmul.f32 %v2582, 1.442695
          %v2613 = vpow.pop %v2612
          %v2614 = vmul.f32 %v2583, 1.442695
          %v2615 = vpow.pop %v2614
          %2616 = vst [vmem:[#allocation5] sm:$0xff] %v2585
          %2617 = vst [vmem:[#allocation5 + $0x8] sm:$0xff] %v2587
          %2618 = vst [vmem:[#allocation5 + $0x10] sm:$0xff] %v2589
          %2619 = vst [vmem:[#allocation5 + $0x18] sm:$0xff] %v2591
          %2620 = vst [vmem:[#allocation5 + $0x20] sm:$0xff] %v2593
          %2621 = vst [vmem:[#allocation5 + $0x28] sm:$0xff] %v2595
          %2622 = vst [vmem:[#allocation5 + $0x30] sm:$0xff] %v2597
          %2623 = vst [vmem:[#allocation5 + $0x38] sm:$0xff] %v2599
          %2624 = vst [vmem:[#allocation5 + $0x40] sm:$0xff] %v2601
          %2625 = vst [vmem:[#allocation5 + $0x48] sm:$0xff] %v2603
          %2626 = vst [vmem:[#allocation5 + $0x50] sm:$0xff] %v2605
          %2627 = vst [vmem:[#allocation5 + $0x58] sm:$0xff] %v2607
          %2628 = vst [vmem:[#allocation5 + $0x60] sm:$0xff] %v2609
          %2629 = vst [vmem:[#allocation5 + $0x68] sm:$0xff] %v2611
          %2630 = vst [vmem:[#allocation5 + $0x70] sm:$0xff] %v2613
          %2631 = vst [vmem:[#allocation5 + $0x78] sm:$0xff] %v2615
          %v2633 = vcombine.high %v2468, %v2468
          %v2635 = vunpack.c.l.s4 1966171168
          %v2636 = vunpack.c.0.s8 %v2635
          %v2637 = vlaneseq
          %v2638 = vshrl.u32 %v2637, 7
          %v2639 = vsub.s32 %v2636, %v2638
          %v2640 = vrot.slane %v2468, %v2639
          %v2642 = vunpack.c.l.s4 1966171168
          %v2643 = vunpack.c.0.s8 %v2642
          %v2644 = vlaneseq
          %v2645 = vshrl.u32 %v2644, 7
          %v2646 = vsub.s32 %v2643, %v2645
          %v2647 = vrot.slane %v2633, %v2646
          %v2648 = vcombine.high %v2640, %v2640
          %v2649 = vcombine.high %v2647, %v2647
          %v2651 = vunpack.c.l.s4 1966171168
          %v2652 = vunpack.c.0.s8 %v2651
          %v2653 = vlaneseq
          %v2654 = vshrl.u32 %v2653, 7
          %v2655 = vsub.s32 %v2652, %v2654
          %v2656 = vrot.slane %v2640, %v2655
          %v2658 = vunpack.c.l.s4 1966171168
          %v2659 = vunpack.c.0.s8 %v2658
          %v2660 = vlaneseq
          %v2661 = vshrl.u32 %v2660, 7
          %v2662 = vsub.s32 %v2659, %v2661
          %v2663 = vrot.slane %v2647, %v2662
          %v2665 = vunpack.c.l.s4 1966171168
          %v2666 = vunpack.c.0.s8 %v2665
          %v2667 = vlaneseq
          %v2668 = vshrl.u32 %v2667, 7
          %v2669 = vsub.s32 %v2666, %v2668
          %v2670 = vrot.slane %v2648, %v2669
          %v2672 = vunpack.c.l.s4 1966171168
          %v2673 = vunpack.c.0.s8 %v2672
          %v2674 = vlaneseq
          %v2675 = vshrl.u32 %v2674, 7
          %v2676 = vsub.s32 %v2673, %v2675
          %v2677 = vrot.slane %v2649, %v2676
          %v2678 = vcombine.high %v2656, %v2656
          %v2679 = vcombine.high %v2663, %v2663
          %v2680 = vcombine.high %v2670, %v2670
          %v2681 = vcombine.high %v2677, %v2677
          %v2682 = vlaneseq
          %v2683 = vshrl.u32 %v2682, 7
          %v2684 = vsub.s32 0, %v2683
          %v2685 = vrot.slane %v2365, %v2684
          %2687 = vbcast.lane.b32.xlu0 %v2685, 256
          %v2688 = vpop.permute.xlu0 %2687
          %s2690 = sor.u32 256, 8
          %2691 = vbcast.lane.b32.xlu0 %v2685, %s2690
          %v2692 = vpop.permute.xlu0 %2691
          %v2693 = vlaneseq
          %v2694 = vshrl.u32 %v2693, 7
          %v2695 = vsub.s32 1, %v2694
          %v2696 = vrot.slane %v2365, %v2695
          %2698 = vbcast.lane.b32.xlu0 %v2696, 256
          %v2699 = vpop.permute.xlu0 %2698
          %s2701 = sor.u32 256, 8
          %2702 = vbcast.lane.b32.xlu0 %v2696, %s2701
          %v2703 = vpop.permute.xlu0 %2702
          %v2704 = vlaneseq
          %v2705 = vshrl.u32 %v2704, 7
          %v2706 = vsub.s32 2, %v2705
          %v2707 = vrot.slane %v2365, %v2706
          %2709 = vbcast.lane.b32.xlu0 %v2707, 256
          %v2710 = vpop.permute.xlu0 %2709
          %s2712 = sor.u32 256, 8
          %2713 = vbcast.lane.b32.xlu0 %v2707, %s2712
          %v2714 = vpop.permute.xlu0 %2713
          %v2715 = vlaneseq
          %v2716 = vshrl.u32 %v2715, 7
          %v2717 = vsub.s32 3, %v2716
          %v2718 = vrot.slane %v2365, %v2717
          %2720 = vbcast.lane.b32.xlu0 %v2718, 256
          %v2721 = vpop.permute.xlu0 %2720
          %s2723 = sor.u32 256, 8
          %2724 = vbcast.lane.b32.xlu0 %v2718, %s2723
          %v2725 = vpop.permute.xlu0 %2724
          %v2726 = vlaneseq
          %v2727 = vshrl.u32 %v2726, 7
          %v2728 = vsub.s32 4, %v2727
          %v2729 = vrot.slane %v2365, %v2728
          %2731 = vbcast.lane.b32.xlu0 %v2729, 256
          %v2732 = vpop.permute.xlu0 %2731
          %s2734 = sor.u32 256, 8
          %2735 = vbcast.lane.b32.xlu0 %v2729, %s2734
          %v2736 = vpop.permute.xlu0 %2735
          %v2737 = vlaneseq
          %v2738 = vshrl.u32 %v2737, 7
          %v2739 = vsub.s32 5, %v2738
          %v2740 = vrot.slane %v2365, %v2739
          %2742 = vbcast.lane.b32.xlu0 %v2740, 256
          %v2743 = vpop.permute.xlu0 %2742
          %s2745 = sor.u32 256, 8
          %2746 = vbcast.lane.b32.xlu0 %v2740, %s2745
          %v2747 = vpop.permute.xlu0 %2746
          %v2748 = vlaneseq
          %v2749 = vshrl.u32 %v2748, 7
          %v2750 = vsub.s32 6, %v2749
          %v2751 = vrot.slane %v2365, %v2750
          %2753 = vbcast.lane.b32.xlu0 %v2751, 256
          %v2754 = vpop.permute.xlu0 %2753
          %s2756 = sor.u32 256, 8
          %2757 = vbcast.lane.b32.xlu0 %v2751, %s2756
          %v2758 = vpop.permute.xlu0 %2757
          %v2759 = vlaneseq
          %v2760 = vshrl.u32 %v2759, 7
          %v2761 = vsub.s32 7, %v2760
          %v2762 = vrot.slane %v2365, %v2761
          %2764 = vbcast.lane.b32.xlu0 %v2762, 256
          %v2765 = vpop.permute.xlu0 %2764
          %s2767 = sor.u32 256, 8
          %2768 = vbcast.lane.b32.xlu0 %v2762, %s2767
          %v2769 = vpop.permute.xlu0 %2768
          %v2770 = vlaneseq
          %v2771 = vshrl.u32 %v2770, 7
          %v2772 = vsub.s32 0, %v2771
          %v2773 = vrot.slane %v2656, %v2772
          %v2774 = vlaneseq
          %v2775 = vshrl.u32 %v2774, 7
          %v2776 = vsub.s32 0, %v2775
          %v2777 = vrot.slane %v2670, %v2776
          %v2778 = vlaneseq
          %v2779 = vshrl.u32 %v2778, 7
          %v2780 = vsub.s32 0, %v2779
          %v2781 = vrot.slane %v2678, %v2780
          %v2782 = vlaneseq
          %v2783 = vshrl.u32 %v2782, 7
          %v2784 = vsub.s32 0, %v2783
          %v2785 = vrot.slane %v2680, %v2784
          %v2786 = vlaneseq
          %v2787 = vshrl.u32 %v2786, 7
          %v2788 = vsub.s32 0, %v2787
          %v2789 = vrot.slane %v2663, %v2788
          %v2790 = vlaneseq
          %v2791 = vshrl.u32 %v2790, 7
          %v2792 = vsub.s32 0, %v2791
          %v2793 = vrot.slane %v2677, %v2792
          %v2794 = vlaneseq
          %v2795 = vshrl.u32 %v2794, 7
          %v2796 = vsub.s32 0, %v2795
          %v2797 = vrot.slane %v2679, %v2796
          %v2798 = vlaneseq
          %v2799 = vshrl.u32 %v2798, 7
          %v2800 = vsub.s32 0, %v2799
          %v2801 = vrot.slane %v2681, %v2800
          %v2810 = vmul.f32 %v2773, %v2688
          %v2811 = vmul.f32 %v2773, %v2692
          %v2812 = vmul.f32 %v2777, %v2699
          %v2813 = vmul.f32 %v2777, %v2703
          %v2814 = vmul.f32 %v2781, %v2710
          %v2815 = vmul.f32 %v2781, %v2714
          %v2816 = vmul.f32 %v2785, %v2721
          %v2817 = vmul.f32 %v2785, %v2725
          %v2818 = vmul.f32 %v2789, %v2732
          %v2819 = vmul.f32 %v2789, %v2736
          %v2820 = vmul.f32 %v2793, %v2743
          %v2821 = vmul.f32 %v2793, %v2747
          %v2822 = vmul.f32 %v2797, %v2754
          %v2823 = vmul.f32 %v2797, %v2758
          %v2824 = vmul.f32 %v2801, %v2765
          %v2825 = vmul.f32 %v2801, %v2769
          %2826 = vst [vmem:[#allocation6] sm:$0xff] %v2810
          %2827 = vst [vmem:[#allocation6 + $0x8] sm:$0xff] %v2811
          %2828 = vst [vmem:[#allocation6 + $0x10] sm:$0xff] %v2812
          %2829 = vst [vmem:[#allocation6 + $0x18] sm:$0xff] %v2813
          %2830 = vst [vmem:[#allocation6 + $0x20] sm:$0xff] %v2814
          %2831 = vst [vmem:[#allocation6 + $0x28] sm:$0xff] %v2815
          %2832 = vst [vmem:[#allocation6 + $0x30] sm:$0xff] %v2816
          %2833 = vst [vmem:[#allocation6 + $0x38] sm:$0xff] %v2817
          %2834 = vst [vmem:[#allocation6 + $0x40] sm:$0xff] %v2818
          %2835 = vst [vmem:[#allocation6 + $0x48] sm:$0xff] %v2819
          %2836 = vst [vmem:[#allocation6 + $0x50] sm:$0xff] %v2820
          %2837 = vst [vmem:[#allocation6 + $0x58] sm:$0xff] %v2821
          %2838 = vst [vmem:[#allocation6 + $0x60] sm:$0xff] %v2822
          %2839 = vst [vmem:[#allocation6 + $0x68] sm:$0xff] %v2823
          %2840 = vst [vmem:[#allocation6 + $0x70] sm:$0xff] %v2824
          %2841 = vst [vmem:[#allocation6 + $0x78] sm:$0xff] %v2825
          %s2842 = scalar_lea.vmem [#allocation5], 112
          %v2843 = vld [vmem:[%s2842] sm:$0xff]
          %v2844 = vld [vmem:[%s2842 + $0x8] sm:$0xff]
          %v2845 = vmul.f32 %v2843, 0.0
          %v2846 = vmul.f32 %v2844, 0.0
          %s2847 = scalar_lea.vmem [#allocation6], 112
          %v2848 = vld [vmem:[%s2847] sm:$0xff]
          %v2849 = vld [vmem:[%s2847 + $0x8] sm:$0xff]
          %v2850 = vadd.f32 %v2845, %v2848
          %v2851 = vadd.f32 %v2846, %v2849
          %2852 = vst [vmem:[%s2847] sm:$0xff] %v2850
          %2853 = vst [vmem:[%s2847 + $0x8] sm:$0xff] %v2851
          %s2854 = scalar_lea.vmem [#allocation5], 96
          %v2855 = vld [vmem:[%s2854] sm:$0xff]
          %v2856 = vld [vmem:[%s2854 + $0x8] sm:$0xff]
          %v2857 = vmul.f32 %v2855, %v2850
          %v2858 = vmul.f32 %v2856, %v2851
          %s2859 = scalar_lea.vmem [#allocation6], 96
          %v2860 = vld [vmem:[%s2859] sm:$0xff]
          %v2861 = vld [vmem:[%s2859 + $0x8] sm:$0xff]
          %v2862 = vadd.f32 %v2857, %v2860
          %v2863 = vadd.f32 %v2858, %v2861
          %2864 = vst [vmem:[%s2859] sm:$0xff] %v2862
          %2865 = vst [vmem:[%s2859 + $0x8] sm:$0xff] %v2863
          %s2866 = scalar_lea.vmem [#allocation5], 80
          %v2867 = vld [vmem:[%s2866] sm:$0xff]
          %v2868 = vld [vmem:[%s2866 + $0x8] sm:$0xff]
          %v2869 = vmul.f32 %v2867, %v2862
          %v2870 = vmul.f32 %v2868, %v2863
          %s2871 = scalar_lea.vmem [#allocation6], 80
          %v2872 = vld [vmem:[%s2871] sm:$0xff]
          %v2873 = vld [vmem:[%s2871 + $0x8] sm:$0xff]
          %v2874 = vadd.f32 %v2869, %v2872
          %v2875 = vadd.f32 %v2870, %v2873
          %2876 = vst [vmem:[%s2871] sm:$0xff] %v2874
          %2877 = vst [vmem:[%s2871 + $0x8] sm:$0xff] %v2875
          %s2878 = scalar_lea.vmem [#allocation5], 64
          %v2879 = vld [vmem:[%s2878] sm:$0xff]
          %v2880 = vld [vmem:[%s2878 + $0x8] sm:$0xff]
          %v2881 = vmul.f32 %v2879, %v2874
          %v2882 = vmul.f32 %v2880, %v2875
          %s2883 = scalar_lea.vmem [#allocation6], 64
          %v2884 = vld [vmem:[%s2883] sm:$0xff]
          %v2885 = vld [vmem:[%s2883 + $0x8] sm:$0xff]
          %v2886 = vadd.f32 %v2881, %v2884
          %v2887 = vadd.f32 %v2882, %v2885
          %2888 = vst [vmem:[%s2883] sm:$0xff] %v2886
          %2889 = vst [vmem:[%s2883 + $0x8] sm:$0xff] %v2887
          %s2890 = scalar_lea.vmem [#allocation5], 48
          %v2891 = vld [vmem:[%s2890] sm:$0xff]
          %v2892 = vld [vmem:[%s2890 + $0x8] sm:$0xff]
          %v2893 = vmul.f32 %v2891, %v2886
          %v2894 = vmul.f32 %v2892, %v2887
          %s2895 = scalar_lea.vmem [#allocation6], 48
          %v2896 = vld [vmem:[%s2895] sm:$0xff]
          %v2897 = vld [vmem:[%s2895 + $0x8] sm:$0xff]
          %v2898 = vadd.f32 %v2893, %v2896
          %v2899 = vadd.f32 %v2894, %v2897
          %2900 = vst [vmem:[%s2895] sm:$0xff] %v2898
          %2901 = vst [vmem:[%s2895 + $0x8] sm:$0xff] %v2899
          %s2902 = scalar_lea.vmem [#allocation5], 32
          %v2903 = vld [vmem:[%s2902] sm:$0xff]
          %v2904 = vld [vmem:[%s2902 + $0x8] sm:$0xff]
          %v2905 = vmul.f32 %v2903, %v2898
          %v2906 = vmul.f32 %v2904, %v2899
          %s2907 = scalar_lea.vmem [#allocation6], 32
          %v2908 = vld [vmem:[%s2907] sm:$0xff]
          %v2909 = vld [vmem:[%s2907 + $0x8] sm:$0xff]
          %v2910 = vadd.f32 %v2905, %v2908
          %v2911 = vadd.f32 %v2906, %v2909
          %2912 = vst [vmem:[%s2907] sm:$0xff] %v2910
          %2913 = vst [vmem:[%s2907 + $0x8] sm:$0xff] %v2911
          %s2914 = scalar_lea.vmem [#allocation5], 16
          %v2915 = vld [vmem:[%s2914] sm:$0xff]
          %v2916 = vld [vmem:[%s2914 + $0x8] sm:$0xff]
          %v2917 = vmul.f32 %v2915, %v2910
          %v2918 = vmul.f32 %v2916, %v2911
          %s2919 = scalar_lea.vmem [#allocation6], 16
          %v2920 = vld [vmem:[%s2919] sm:$0xff]
          %v2921 = vld [vmem:[%s2919 + $0x8] sm:$0xff]
          %v2922 = vadd.f32 %v2917, %v2920
          %v2923 = vadd.f32 %v2918, %v2921
          %2924 = vst [vmem:[%s2919] sm:$0xff] %v2922
          %2925 = vst [vmem:[%s2919 + $0x8] sm:$0xff] %v2923
          %v2926 = vld [vmem:[#allocation5] sm:$0xff]
          %v2927 = vld [vmem:[#allocation5 + $0x8] sm:$0xff]
          %v2928 = vmul.f32 %v2926, %v2922
          %v2929 = vmul.f32 %v2927, %v2923
          %v2930 = vld [vmem:[#allocation6] sm:$0xff]
          %v2931 = vld [vmem:[#allocation6 + $0x8] sm:$0xff]
          %v2932 = vadd.f32 %v2928, %v2930
          %v2933 = vadd.f32 %v2929, %v2931
          %2934 = vst [vmem:[#allocation6] sm:$0xff] %v2932
          %2935 = vst [vmem:[#allocation6 + $0x8] sm:$0xff] %v2933
          %v2936 = vld [vmem:[#allocation6] sm:$0xff]
          %v2937 = vld [vmem:[#allocation6 + $0x8] sm:$0xff]
          %v2938 = vld [vmem:[#allocation6 + $0x10] sm:$0xff]
          %v2939 = vld [vmem:[#allocation6 + $0x18] sm:$0xff]
          %v2940 = vld [vmem:[#allocation6 + $0x20] sm:$0xff]
          %v2941 = vld [vmem:[#allocation6 + $0x28] sm:$0xff]
          %v2942 = vld [vmem:[#allocation6 + $0x30] sm:$0xff]
          %v2943 = vld [vmem:[#allocation6 + $0x38] sm:$0xff]
          %v2944 = vld [vmem:[#allocation6 + $0x40] sm:$0xff]
          %v2945 = vld [vmem:[#allocation6 + $0x48] sm:$0xff]
          %v2946 = vld [vmem:[#allocation6 + $0x50] sm:$0xff]
          %v2947 = vld [vmem:[#allocation6 + $0x58] sm:$0xff]
          %v2948 = vld [vmem:[#allocation6 + $0x60] sm:$0xff]
          %v2949 = vld [vmem:[#allocation6 + $0x68] sm:$0xff]
          %v2950 = vld [vmem:[#allocation6 + $0x70] sm:$0xff]
          %v2951 = vld [vmem:[#allocation6 + $0x78] sm:$0xff]
          %s2953 = sor.u32 256, 16
          %2954 = vbcast.lane.b32.xlu0 %v2685, %s2953
          %v2955 = vpop.permute.xlu0 %2954
          %s2957 = sor.u32 256, 24
          %2958 = vbcast.lane.b32.xlu0 %v2685, %s2957
          %v2959 = vpop.permute.xlu0 %2958
          %s2961 = sor.u32 256, 16
          %2962 = vbcast.lane.b32.xlu0 %v2696, %s2961
          %v2963 = vpop.permute.xlu0 %2962
          %s2965 = sor.u32 256, 24
          %2966 = vbcast.lane.b32.xlu0 %v2696, %s2965
          %v2967 = vpop.permute.xlu0 %2966
          %s2969 = sor.u32 256, 16
          %2970 = vbcast.lane.b32.xlu0 %v2707, %s2969
          %v2971 = vpop.permute.xlu0 %2970
          %s2973 = sor.u32 256, 24
          %2974 = vbcast.lane.b32.xlu0 %v2707, %s2973
          %v2975 = vpop.permute.xlu0 %2974
          %s2977 = sor.u32 256, 16
          %2978 = vbcast.lane.b32.xlu0 %v2718, %s2977
          %v2979 = vpop.permute.xlu0 %2978
          %s2981 = sor.u32 256, 24
          %2982 = vbcast.lane.b32.xlu0 %v2718, %s2981
          %v2983 = vpop.permute.xlu0 %2982
          %s2985 = sor.u32 256, 16
          %2986 = vbcast.lane.b32.xlu0 %v2729, %s2985
          %v2987 = vpop.permute.xlu0 %2986
          %s2989 = sor.u32 256, 24
          %2990 = vbcast.lane.b32.xlu0 %v2729, %s2989
          %v2991 = vpop.permute.xlu0 %2990
          %s2993 = sor.u32 256, 16
          %2994 = vbcast.lane.b32.xlu0 %v2740, %s2993
          %v2995 = vpop.permute.xlu0 %2994
          %s2997 = sor.u32 256, 24
          %2998 = vbcast.lane.b32.xlu0 %v2740, %s2997
          %v2999 = vpop.permute.xlu0 %2998
          %s3001 = sor.u32 256, 16
          %3002 = vbcast.lane.b32.xlu0 %v2751, %s3001
          %v3003 = vpop.permute.xlu0 %3002
          %s3005 = sor.u32 256, 24
          %3006 = vbcast.lane.b32.xlu0 %v2751, %s3005
          %v3007 = vpop.permute.xlu0 %3006
          %s3009 = sor.u32 256, 16
          %3010 = vbcast.lane.b32.xlu0 %v2762, %s3009
          %v3011 = vpop.permute.xlu0 %3010
          %s3013 = sor.u32 256, 24
          %3014 = vbcast.lane.b32.xlu0 %v2762, %s3013
          %v3015 = vpop.permute.xlu0 %3014
          %v3016 = vmul.f32 %v2936, %v2955
          %v3017 = vmul.f32 %v2937, %v2959
          %v3018 = vmul.f32 %v2938, %v2963
          %v3019 = vmul.f32 %v2939, %v2967
          %v3020 = vmul.f32 %v2940, %v2971
          %v3021 = vmul.f32 %v2941, %v2975
          %v3022 = vmul.f32 %v2942, %v2979
          %v3023 = vmul.f32 %v2943, %v2983
          %v3024 = vmul.f32 %v2944, %v2987
          %v3025 = vmul.f32 %v2945, %v2991
          %v3026 = vmul.f32 %v2946, %v2995
          %v3027 = vmul.f32 %v2947, %v2999
          %v3028 = vmul.f32 %v2948, %v3003
          %v3029 = vmul.f32 %v2949, %v3007
          %v3030 = vmul.f32 %v2950, %v3011
          %v3031 = vmul.f32 %v2951, %v3015
          %v3032 = vadd.f32 %v3016, %v3017
          %v3033 = vrot.slane %v3032, 4
          %v3034 = vadd.f32 %v3032, %v3033
          %v3035 = vrot.slane %v3034, 2
          %v3036 = vadd.f32 %v3034, %v3035
          %v3037 = vrot.slane %v3036, 1
          %v3038 = vadd.f32 %v3036, %v3037
          %v3039 = vadd.f32 %v3018, %v3019
          %v3040 = vrot.slane %v3039, 4
          %v3041 = vadd.f32 %v3039, %v3040
          %v3042 = vrot.slane %v3041, 2
          %v3043 = vadd.f32 %v3041, %v3042
          %v3044 = vrot.slane %v3043, 1
          %v3045 = vadd.f32 %v3043, %v3044
          %v3046 = vadd.f32 %v3020, %v3021
          %v3047 = vrot.slane %v3046, 4
          %v3048 = vadd.f32 %v3046, %v3047
          %v3049 = vrot.slane %v3048, 2
          %v3050 = vadd.f32 %v3048, %v3049
          %v3051 = vrot.slane %v3050, 1
          %v3052 = vadd.f32 %v3050, %v3051
          %v3053 = vadd.f32 %v3022, %v3023
          %v3054 = vrot.slane %v3053, 4
          %v3055 = vadd.f32 %v3053, %v3054
          %v3056 = vrot.slane %v3055, 2
          %v3057 = vadd.f32 %v3055, %v3056
          %v3058 = vrot.slane %v3057, 1
          %v3059 = vadd.f32 %v3057, %v3058
          %v3060 = vadd.f32 %v3024, %v3025
          %v3061 = vrot.slane %v3060, 4
          %v3062 = vadd.f32 %v3060, %v3061
          %v3063 = vrot.slane %v3062, 2
          %v3064 = vadd.f32 %v3062, %v3063
          %v3065 = vrot.slane %v3064, 1
          %v3066 = vadd.f32 %v3064, %v3065
          %v3067 = vadd.f32 %v3026, %v3027
          %v3068 = vrot.slane %v3067, 4
          %v3069 = vadd.f32 %v3067, %v3068
          %v3070 = vrot.slane %v3069, 2
          %v3071 = vadd.f32 %v3069, %v3070
          %v3072 = vrot.slane %v3071, 1
          %v3073 = vadd.f32 %v3071, %v3072
          %v3074 = vadd.f32 %v3028, %v3029
          %v3075 = vrot.slane %v3074, 4
          %v3076 = vadd.f32 %v3074, %v3075
          %v3077 = vrot.slane %v3076, 2
          %v3078 = vadd.f32 %v3076, %v3077
          %v3079 = vrot.slane %v3078, 1
          %v3080 = vadd.f32 %v3078, %v3079
          %v3081 = vadd.f32 %v3030, %v3031
          %v3082 = vrot.slane %v3081, 4
          %v3083 = vadd.f32 %v3081, %v3082
          %v3084 = vrot.slane %v3083, 2
          %v3085 = vadd.f32 %v3083, %v3084
          %v3086 = vrot.slane %v3085, 1
          %v3087 = vadd.f32 %v3085, %v3086
          %v3089 = vrot.slane %v2477, 1
          %v3090 = vrot.slane %v2477, 2
          %v3091 = vrot.slane %v2477, 3
          %v3092 = vrot.slane %v2477, 4
          %v3093 = vrot.slane %v2477, 5
          %v3094 = vrot.slane %v2477, 6
          %v3095 = vrot.slane %v2477, 7
          %v3104 = vadd.f32 %v3038, %v2477
          %v3105 = vadd.f32 %v3045, %v3089
          %v3106 = vadd.f32 %v3052, %v3090
          %v3107 = vadd.f32 %v3059, %v3091
          %v3108 = vadd.f32 %v3066, %v3092
          %v3109 = vadd.f32 %v3073, %v3093
          %v3110 = vadd.f32 %v3080, %v3094
          %v3111 = vadd.f32 %v3087, %v3095
          %v3112 = vld [vmem:[#allocation4 + $0x8] sm:$0xff]
          %v3121 = vrot.slane %v3105, 7
          %vm3122 = vcmask 1041409
          %v3123 = vsel %vm3122, %v3121, %v3104
          %v3124 = vrot.slane %v3106, 6
          %vm3125 = vcmask 1042434
          %v3126 = vsel %vm3125, %v3124, %v3123
          %v3127 = vrot.slane %v3107, 5
          %vm3128 = vcmask 1043459
          %v3129 = vsel %vm3128, %v3127, %v3126
          %v3130 = vrot.slane %v3108, 4
          %vm3131 = vcmask 1044484
          %v3132 = vsel %vm3131, %v3130, %v3129
          %v3133 = vrot.slane %v3109, 3
          %vm3134 = vcmask 1045509
          %v3135 = vsel %vm3134, %v3133, %v3132
          %v3136 = vrot.slane %v3110, 2
          %vm3137 = vcmask 1046534
          %v3138 = vsel %vm3137, %v3136, %v3135
          %v3139 = vrot.slane %v3111, 1
          %vm3140 = vcmask 1047559
          %v3141 = vsel %vm3140, %v3139, %v3138
          %v3143 = vadd.f32 %v3112, %v3141
          %3144 = vst [vmem:[#allocation4 + $0x8] sm:$0xff] %v3143
          %v3146 = vcombine.high %v2457, %v2457
          %v3148 = vunpack.c.l.s4 1966171168
          %v3149 = vunpack.c.0.s8 %v3148
          %v3150 = vlaneseq
          %v3151 = vshrl.u32 %v3150, 7
          %v3152 = vsub.s32 %v3149, %v3151
          %v3153 = vrot.slane %v2457, %v3152
          %v3155 = vunpack.c.l.s4 1966171168
          %v3156 = vunpack.c.0.s8 %v3155
          %v3157 = vlaneseq
          %v3158 = vshrl.u32 %v3157, 7
          %v3159 = vsub.s32 %v3156, %v3158
          %v3160 = vrot.slane %v3146, %v3159
          %v3161 = vcombine.high %v3153, %v3153
          %v3162 = vcombine.high %v3160, %v3160
          %v3164 = vunpack.c.l.s4 1966171168
          %v3165 = vunpack.c.0.s8 %v3164
          %v3166 = vlaneseq
          %v3167 = vshrl.u32 %v3166, 7
          %v3168 = vsub.s32 %v3165, %v3167
          %v3169 = vrot.slane %v3153, %v3168
          %v3171 = vunpack.c.l.s4 1966171168
          %v3172 = vunpack.c.0.s8 %v3171
          %v3173 = vlaneseq
          %v3174 = vshrl.u32 %v3173, 7
          %v3175 = vsub.s32 %v3172, %v3174
          %v3176 = vrot.slane %v3160, %v3175
          %v3178 = vunpack.c.l.s4 1966171168
          %v3179 = vunpack.c.0.s8 %v3178
          %v3180 = vlaneseq
          %v3181 = vshrl.u32 %v3180, 7
          %v3182 = vsub.s32 %v3179, %v3181
          %v3183 = vrot.slane %v3161, %v3182
          %v3185 = vunpack.c.l.s4 1966171168
          %v3186 = vunpack.c.0.s8 %v3185
          %v3187 = vlaneseq
          %v3188 = vshrl.u32 %v3187, 7
          %v3189 = vsub.s32 %v3186, %v3188
          %v3190 = vrot.slane %v3162, %v3189
          %v3191 = vcombine.high %v3169, %v3169
          %v3192 = vcombine.high %v3176, %v3176
          %v3193 = vcombine.high %v3183, %v3183
          %v3194 = vcombine.high %v3190, %v3190
          %v3195 = vlaneseq
          %v3196 = vshrl.u32 %v3195, 7
          %v3197 = vsub.s32 0, %v3196
          %v3198 = vrot.slane %v3169, %v3197
          %v3199 = vlaneseq
          %v3200 = vshrl.u32 %v3199, 7
          %v3201 = vsub.s32 0, %v3200
          %v3202 = vrot.slane %v3183, %v3201
          %v3203 = vlaneseq
          %v3204 = vshrl.u32 %v3203, 7
          %v3205 = vsub.s32 0, %v3204
          %v3206 = vrot.slane %v3191, %v3205
          %v3207 = vlaneseq
          %v3208 = vshrl.u32 %v3207, 7
          %v3209 = vsub.s32 0, %v3208
          %v3210 = vrot.slane %v3193, %v3209
          %v3211 = vlaneseq
          %v3212 = vshrl.u32 %v3211, 7
          %v3213 = vsub.s32 0, %v3212
          %v3214 = vrot.slane %v3176, %v3213
          %v3215 = vlaneseq
          %v3216 = vshrl.u32 %v3215, 7
          %v3217 = vsub.s32 0, %v3216
          %v3218 = vrot.slane %v3190, %v3217
          %v3219 = vlaneseq
          %v3220 = vshrl.u32 %v3219, 7
          %v3221 = vsub.s32 0, %v3220
          %v3222 = vrot.slane %v3192, %v3221
          %v3223 = vlaneseq
          %v3224 = vshrl.u32 %v3223, 7
          %v3225 = vsub.s32 0, %v3224
          %v3226 = vrot.slane %v3194, %v3225
          %v3235 = vmul.f32 %v3198, %v2465
          %v3236 = vmul.f32 %v3198, %v2466
          %v3237 = vmul.f32 %v3202, %v2465
          %v3238 = vmul.f32 %v3202, %v2466
          %v3239 = vmul.f32 %v3206, %v2465
          %v3240 = vmul.f32 %v3206, %v2466
          %v3241 = vmul.f32 %v3210, %v2465
          %v3242 = vmul.f32 %v3210, %v2466
          %v3243 = vmul.f32 %v3214, %v2465
          %v3244 = vmul.f32 %v3214, %v2466
          %v3245 = vmul.f32 %v3218, %v2465
          %v3246 = vmul.f32 %v3218, %v2466
          %v3247 = vmul.f32 %v3222, %v2465
          %v3248 = vmul.f32 %v3222, %v2466
          %v3249 = vmul.f32 %v3226, %v2465
          %v3250 = vmul.f32 %v3226, %v2466
          %v3251 = vmul.f32 %v3235, 1.442695
          %v3252 = vpow.pop %v3251
          %v3253 = vmul.f32 %v3236, 1.442695
          %v3254 = vpow.pop %v3253
          %v3255 = vmul.f32 %v3237, 1.442695
          %v3256 = vpow.pop %v3255
          %v3257 = vmul.f32 %v3238, 1.442695
          %v3258 = vpow.pop %v3257
          %v3259 = vmul.f32 %v3239, 1.442695
          %v3260 = vpow.pop %v3259
          %v3261 = vmul.f32 %v3240, 1.442695
          %v3262 = vpow.pop %v3261
          %v3263 = vmul.f32 %v3241, 1.442695
          %v3264 = vpow.pop %v3263
          %v3265 = vmul.f32 %v3242, 1.442695
          %v3266 = vpow.pop %v3265
          %v3267 = vmul.f32 %v3243, 1.442695
          %v3268 = vpow.pop %v3267
          %v3269 = vmul.f32 %v3244, 1.442695
          %v3270 = vpow.pop %v3269
          %v3271 = vmul.f32 %v3245, 1.442695
          %v3272 = vpow.pop %v3271
          %v3273 = vmul.f32 %v3246, 1.442695
          %v3274 = vpow.pop %v3273
          %v3275 = vmul.f32 %v3247, 1.442695
          %v3276 = vpow.pop %v3275
          %v3277 = vmul.f32 %v3248, 1.442695
          %v3278 = vpow.pop %v3277
          %v3279 = vmul.f32 %v3249, 1.442695
          %v3280 = vpow.pop %v3279
          %v3281 = vmul.f32 %v3250, 1.442695
          %v3282 = vpow.pop %v3281
          %3283 = vst [vmem:[#allocation5] sm:$0xff] %v3252
          %3284 = vst [vmem:[#allocation5 + $0x8] sm:$0xff] %v3254
          %3285 = vst [vmem:[#allocation5 + $0x10] sm:$0xff] %v3256
          %3286 = vst [vmem:[#allocation5 + $0x18] sm:$0xff] %v3258
          %3287 = vst [vmem:[#allocation5 + $0x20] sm:$0xff] %v3260
          %3288 = vst [vmem:[#allocation5 + $0x28] sm:$0xff] %v3262
          %3289 = vst [vmem:[#allocation5 + $0x30] sm:$0xff] %v3264
          %3290 = vst [vmem:[#allocation5 + $0x38] sm:$0xff] %v3266
          %3291 = vst [vmem:[#allocation5 + $0x40] sm:$0xff] %v3268
          %3292 = vst [vmem:[#allocation5 + $0x48] sm:$0xff] %v3270
          %3293 = vst [vmem:[#allocation5 + $0x50] sm:$0xff] %v3272
          %3294 = vst [vmem:[#allocation5 + $0x58] sm:$0xff] %v3274
          %3295 = vst [vmem:[#allocation5 + $0x60] sm:$0xff] %v3276
          %3296 = vst [vmem:[#allocation5 + $0x68] sm:$0xff] %v3278
          %3297 = vst [vmem:[#allocation5 + $0x70] sm:$0xff] %v3280
          %3298 = vst [vmem:[#allocation5 + $0x78] sm:$0xff] %v3282
          %v3300 = vcombine.high %v2467, %v2467
          %v3302 = vunpack.c.l.s4 1966171168
          %v3303 = vunpack.c.0.s8 %v3302
          %v3304 = vlaneseq
          %v3305 = vshrl.u32 %v3304, 7
          %v3306 = vsub.s32 %v3303, %v3305
          %v3307 = vrot.slane %v2467, %v3306
          %v3309 = vunpack.c.l.s4 1966171168
          %v3310 = vunpack.c.0.s8 %v3309
          %v3311 = vlaneseq
          %v3312 = vshrl.u32 %v3311, 7
          %v3313 = vsub.s32 %v3310, %v3312
          %v3314 = vrot.slane %v3300, %v3313
          %v3315 = vcombine.high %v3307, %v3307
          %v3316 = vcombine.high %v3314, %v3314
          %v3318 = vunpack.c.l.s4 1966171168
          %v3319 = vunpack.c.0.s8 %v3318
          %v3320 = vlaneseq
          %v3321 = vshrl.u32 %v3320, 7
          %v3322 = vsub.s32 %v3319, %v3321
          %v3323 = vrot.slane %v3307, %v3322
          %v3325 = vunpack.c.l.s4 1966171168
          %v3326 = vunpack.c.0.s8 %v3325
          %v3327 = vlaneseq
          %v3328 = vshrl.u32 %v3327, 7
          %v3329 = vsub.s32 %v3326, %v3328
          %v3330 = vrot.slane %v3314, %v3329
          %v3332 = vunpack.c.l.s4 1966171168
          %v3333 = vunpack.c.0.s8 %v3332
          %v3334 = vlaneseq
          %v3335 = vshrl.u32 %v3334, 7
          %v3336 = vsub.s32 %v3333, %v3335
          %v3337 = vrot.slane %v3315, %v3336
          %v3339 = vunpack.c.l.s4 1966171168
          %v3340 = vunpack.c.0.s8 %v3339
          %v3341 = vlaneseq
          %v3342 = vshrl.u32 %v3341, 7
          %v3343 = vsub.s32 %v3340, %v3342
          %v3344 = vrot.slane %v3316, %v3343
          %v3345 = vcombine.high %v3323, %v3323
          %v3346 = vcombine.high %v3330, %v3330
          %v3347 = vcombine.high %v3337, %v3337
          %v3348 = vcombine.high %v3344, %v3344
          %v3349 = vlaneseq
          %v3350 = vshrl.u32 %v3349, 7
          %v3351 = vsub.s32 0, %v3350
          %v3352 = vrot.slane %v2362, %v3351
          %3354 = vbcast.lane.b32.xlu0 %v3352, 256
          %v3355 = vpop.permute.xlu0 %3354
          %s3357 = sor.u32 256, 8
          %3358 = vbcast.lane.b32.xlu0 %v3352, %s3357
          %v3359 = vpop.permute.xlu0 %3358
          %v3360 = vlaneseq
          %v3361 = vshrl.u32 %v3360, 7
          %v3362 = vsub.s32 1, %v3361
          %v3363 = vrot.slane %v2362, %v3362
          %3365 = vbcast.lane.b32.xlu0 %v3363, 256
          %v3366 = vpop.permute.xlu0 %3365
          %s3368 = sor.u32 256, 8
          %3369 = vbcast.lane.b32.xlu0 %v3363, %s3368
          %v3370 = vpop.permute.xlu0 %3369
          %v3371 = vlaneseq
          %v3372 = vshrl.u32 %v3371, 7
          %v3373 = vsub.s32 2, %v3372
          %v3374 = vrot.slane %v2362, %v3373
          %3376 = vbcast.lane.b32.xlu0 %v3374, 256
          %v3377 = vpop.permute.xlu0 %3376
          %s3379 = sor.u32 256, 8
          %3380 = vbcast.lane.b32.xlu0 %v3374, %s3379
          %v3381 = vpop.permute.xlu0 %3380
          %v3382 = vlaneseq
          %v3383 = vshrl.u32 %v3382, 7
          %v3384 = vsub.s32 3, %v3383
          %v3385 = vrot.slane %v2362, %v3384
          %3387 = vbcast.lane.b32.xlu0 %v3385, 256
          %v3388 = vpop.permute.xlu0 %3387
          %s3390 = sor.u32 256, 8
          %3391 = vbcast.lane.b32.xlu0 %v3385, %s3390
          %v3392 = vpop.permute.xlu0 %3391
          %v3393 = vlaneseq
          %v3394 = vshrl.u32 %v3393, 7
          %v3395 = vsub.s32 4, %v3394
          %v3396 = vrot.slane %v2362, %v3395
          %3398 = vbcast.lane.b32.xlu0 %v3396, 256
          %v3399 = vpop.permute.xlu0 %3398
          %s3401 = sor.u32 256, 8
          %3402 = vbcast.lane.b32.xlu0 %v3396, %s3401
          %v3403 = vpop.permute.xlu0 %3402
          %v3404 = vlaneseq
          %v3405 = vshrl.u32 %v3404, 7
          %v3406 = vsub.s32 5, %v3405
          %v3407 = vrot.slane %v2362, %v3406
          %3409 = vbcast.lane.b32.xlu0 %v3407, 256
          %v3410 = vpop.permute.xlu0 %3409
          %s3412 = sor.u32 256, 8
          %3413 = vbcast.lane.b32.xlu0 %v3407, %s3412
          %v3414 = vpop.permute.xlu0 %3413
          %v3415 = vlaneseq
          %v3416 = vshrl.u32 %v3415, 7
          %v3417 = vsub.s32 6, %v3416
          %v3418 = vrot.slane %v2362, %v3417
          %3420 = vbcast.lane.b32.xlu0 %v3418, 256
          %v3421 = vpop.permute.xlu0 %3420
          %s3423 = sor.u32 256, 8
          %3424 = vbcast.lane.b32.xlu0 %v3418, %s3423
          %v3425 = vpop.permute.xlu0 %3424
          %v3426 = vlaneseq
          %v3427 = vshrl.u32 %v3426, 7
          %v3428 = vsub.s32 7, %v3427
          %v3429 = vrot.slane %v2362, %v3428
          %3431 = vbcast.lane.b32.xlu0 %v3429, 256
          %v3432 = vpop.permute.xlu0 %3431
          %s3434 = sor.u32 256, 8
          %3435 = vbcast.lane.b32.xlu0 %v3429, %s3434
          %v3436 = vpop.permute.xlu0 %3435
          %v3437 = vlaneseq
          %v3438 = vshrl.u32 %v3437, 7
          %v3439 = vsub.s32 0, %v3438
          %v3440 = vrot.slane %v3323, %v3439
          %v3441 = vlaneseq
          %v3442 = vshrl.u32 %v3441, 7
          %v3443 = vsub.s32 0, %v3442
          %v3444 = vrot.slane %v3337, %v3443
          %v3445 = vlaneseq
          %v3446 = vshrl.u32 %v3445, 7
          %v3447 = vsub.s32 0, %v3446
          %v3448 = vrot.slane %v3345, %v3447
          %v3449 = vlaneseq
          %v3450 = vshrl.u32 %v3449, 7
          %v3451 = vsub.s32 0, %v3450
          %v3452 = vrot.slane %v3347, %v3451
          %v3453 = vlaneseq
          %v3454 = vshrl.u32 %v3453, 7
          %v3455 = vsub.s32 0, %v3454
          %v3456 = vrot.slane %v3330, %v3455
          %v3457 = vlaneseq
          %v3458 = vshrl.u32 %v3457, 7
          %v3459 = vsub.s32 0, %v3458
          %v3460 = vrot.slane %v3344, %v3459
          %v3461 = vlaneseq
          %v3462 = vshrl.u32 %v3461, 7
          %v3463 = vsub.s32 0, %v3462
          %v3464 = vrot.slane %v3346, %v3463
          %v3465 = vlaneseq
          %v3466 = vshrl.u32 %v3465, 7
          %v3467 = vsub.s32 0, %v3466
          %v3468 = vrot.slane %v3348, %v3467
          %v3477 = vmul.f32 %v3440, %v3355
          %v3478 = vmul.f32 %v3440, %v3359
          %v3479 = vmul.f32 %v3444, %v3366
          %v3480 = vmul.f32 %v3444, %v3370
          %v3481 = vmul.f32 %v3448, %v3377
          %v3482 = vmul.f32 %v3448, %v3381
          %v3483 = vmul.f32 %v3452, %v3388
          %v3484 = vmul.f32 %v3452, %v3392
          %v3485 = vmul.f32 %v3456, %v3399
          %v3486 = vmul.f32 %v3456, %v3403
          %v3487 = vmul.f32 %v3460, %v3410
          %v3488 = vmul.f32 %v3460, %v3414
          %v3489 = vmul.f32 %v3464, %v3421
          %v3490 = vmul.f32 %v3464, %v3425
          %v3491 = vmul.f32 %v3468, %v3432
          %v3492 = vmul.f32 %v3468, %v3436
          %3493 = vst [vmem:[#allocation6] sm:$0xff] %v3477
          %3494 = vst [vmem:[#allocation6 + $0x8] sm:$0xff] %v3478
          %3495 = vst [vmem:[#allocation6 + $0x10] sm:$0xff] %v3479
          %3496 = vst [vmem:[#allocation6 + $0x18] sm:$0xff] %v3480
          %3497 = vst [vmem:[#allocation6 + $0x20] sm:$0xff] %v3481
          %3498 = vst [vmem:[#allocation6 + $0x28] sm:$0xff] %v3482
          %3499 = vst [vmem:[#allocation6 + $0x30] sm:$0xff] %v3483
          %3500 = vst [vmem:[#allocation6 + $0x38] sm:$0xff] %v3484
          %3501 = vst [vmem:[#allocation6 + $0x40] sm:$0xff] %v3485
          %3502 = vst [vmem:[#allocation6 + $0x48] sm:$0xff] %v3486
          %3503 = vst [vmem:[#allocation6 + $0x50] sm:$0xff] %v3487
          %3504 = vst [vmem:[#allocation6 + $0x58] sm:$0xff] %v3488
          %3505 = vst [vmem:[#allocation6 + $0x60] sm:$0xff] %v3489
          %3506 = vst [vmem:[#allocation6 + $0x68] sm:$0xff] %v3490
          %3507 = vst [vmem:[#allocation6 + $0x70] sm:$0xff] %v3491
          %3508 = vst [vmem:[#allocation6 + $0x78] sm:$0xff] %v3492
          %v3509 = vld [vmem:[%s2842] sm:$0xff]
          %v3510 = vld [vmem:[%s2842 + $0x8] sm:$0xff]
          %v3511 = vmul.f32 %v3509, %v2932
          %v3512 = vmul.f32 %v3510, %v2933
          %v3513 = vld [vmem:[%s2847] sm:$0xff]
          %v3514 = vld [vmem:[%s2847 + $0x8] sm:$0xff]
          %v3515 = vadd.f32 %v3511, %v3513
          %v3516 = vadd.f32 %v3512, %v3514
          %3517 = vst [vmem:[%s2847] sm:$0xff] %v3515
          %3518 = vst [vmem:[%s2847 + $0x8] sm:$0xff] %v3516
          %v3519 = vld [vmem:[%s2854] sm:$0xff]
          %v3520 = vld [vmem:[%s2854 + $0x8] sm:$0xff]
          %v3521 = vmul.f32 %v3519, %v3515
          %v3522 = vmul.f32 %v3520, %v3516
          %v3523 = vld [vmem:[%s2859] sm:$0xff]
          %v3524 = vld [vmem:[%s2859 + $0x8] sm:$0xff]
          %v3525 = vadd.f32 %v3521, %v3523
          %v3526 = vadd.f32 %v3522, %v3524
          %3527 = vst [vmem:[%s2859] sm:$0xff] %v3525
          %3528 = vst [vmem:[%s2859 + $0x8] sm:$0xff] %v3526
          %v3529 = vld [vmem:[%s2866] sm:$0xff]
          %v3530 = vld [vmem:[%s2866 + $0x8] sm:$0xff]
          %v3531 = vmul.f32 %v3529, %v3525
          %v3532 = vmul.f32 %v3530, %v3526
          %v3533 = vld [vmem:[%s2871] sm:$0xff]
          %v3534 = vld [vmem:[%s2871 + $0x8] sm:$0xff]
          %v3535 = vadd.f32 %v3531, %v3533
          %v3536 = vadd.f32 %v3532, %v3534
          %3537 = vst [vmem:[%s2871] sm:$0xff] %v3535
          %3538 = vst [vmem:[%s2871 + $0x8] sm:$0xff] %v3536
          %v3539 = vld [vmem:[%s2878] sm:$0xff]
          %v3540 = vld [vmem:[%s2878 + $0x8] sm:$0xff]
          %v3541 = vmul.f32 %v3539, %v3535
          %v3542 = vmul.f32 %v3540, %v3536
          %v3543 = vld [vmem:[%s2883] sm:$0xff]
          %v3544 = vld [vmem:[%s2883 + $0x8] sm:$0xff]
          %v3545 = vadd.f32 %v3541, %v3543
          %v3546 = vadd.f32 %v3542, %v3544
          %3547 = vst [vmem:[%s2883] sm:$0xff] %v3545
          %3548 = vst [vmem:[%s2883 + $0x8] sm:$0xff] %v3546
          %v3549 = vld [vmem:[%s2890] sm:$0xff]
          %v3550 = vld [vmem:[%s2890 + $0x8] sm:$0xff]
          %v3551 = vmul.f32 %v3549, %v3545
          %v3552 = vmul.f32 %v3550, %v3546
          %v3553 = vld [vmem:[%s2895] sm:$0xff]
          %v3554 = vld [vmem:[%s2895 + $0x8] sm:$0xff]
          %v3555 = vadd.f32 %v3551, %v3553
          %v3556 = vadd.f32 %v3552, %v3554
          %3557 = vst [vmem:[%s2895] sm:$0xff] %v3555
          %3558 = vst [vmem:[%s2895 + $0x8] sm:$0xff] %v3556
          %v3559 = vld [vmem:[%s2902] sm:$0xff]
          %v3560 = vld [vmem:[%s2902 + $0x8] sm:$0xff]
          %v3561 = vmul.f32 %v3559, %v3555
          %v3562 = vmul.f32 %v3560, %v3556
          %v3563 = vld [vmem:[%s2907] sm:$0xff]
          %v3564 = vld [vmem:[%s2907 + $0x8] sm:$0xff]
          %v3565 = vadd.f32 %v3561, %v3563
          %v3566 = vadd.f32 %v3562, %v3564
          %3567 = vst [vmem:[%s2907] sm:$0xff] %v3565
          %3568 = vst [vmem:[%s2907 + $0x8] sm:$0xff] %v3566
          %v3569 = vld [vmem:[%s2914] sm:$0xff]
          %v3570 = vld [vmem:[%s2914 + $0x8] sm:$0xff]
          %v3571 = vmul.f32 %v3569, %v3565
          %v3572 = vmul.f32 %v3570, %v3566
          %v3573 = vld [vmem:[%s2919] sm:$0xff]
          %v3574 = vld [vmem:[%s2919 + $0x8] sm:$0xff]
          %v3575 = vadd.f32 %v3571, %v3573
          %v3576 = vadd.f32 %v3572, %v3574
          %3577 = vst [vmem:[%s2919] sm:$0xff] %v3575
          %3578 = vst [vmem:[%s2919 + $0x8] sm:$0xff] %v3576
          %v3579 = vld [vmem:[#allocation5] sm:$0xff]
          %v3580 = vld [vmem:[#allocation5 + $0x8] sm:$0xff]
          %v3581 = vmul.f32 %v3579, %v3575
          %v3582 = vmul.f32 %v3580, %v3576
          %v3583 = vld [vmem:[#allocation6] sm:$0xff]
          %v3584 = vld [vmem:[#allocation6 + $0x8] sm:$0xff]
          %v3585 = vadd.f32 %v3581, %v3583
          %v3586 = vadd.f32 %v3582, %v3584
          %3587 = vst [vmem:[#allocation6] sm:$0xff] %v3585
          %3588 = vst [vmem:[#allocation6 + $0x8] sm:$0xff] %v3586
          %v3589 = vld [vmem:[#allocation6] sm:$0xff]
          %v3590 = vld [vmem:[#allocation6 + $0x8] sm:$0xff]
          %v3591 = vld [vmem:[#allocation6 + $0x10] sm:$0xff]
          %v3592 = vld [vmem:[#allocation6 + $0x18] sm:$0xff]
          %v3593 = vld [vmem:[#allocation6 + $0x20] sm:$0xff]
          %v3594 = vld [vmem:[#allocation6 + $0x28] sm:$0xff]
          %v3595 = vld [vmem:[#allocation6 + $0x30] sm:$0xff]
          %v3596 = vld [vmem:[#allocation6 + $0x38] sm:$0xff]
          %v3597 = vld [vmem:[#allocation6 + $0x40] sm:$0xff]
          %v3598 = vld [vmem:[#allocation6 + $0x48] sm:$0xff]
          %v3599 = vld [vmem:[#allocation6 + $0x50] sm:$0xff]
          %v3600 = vld [vmem:[#allocation6 + $0x58] sm:$0xff]
          %v3601 = vld [vmem:[#allocation6 + $0x60] sm:$0xff]
          %v3602 = vld [vmem:[#allocation6 + $0x68] sm:$0xff]
          %v3603 = vld [vmem:[#allocation6 + $0x70] sm:$0xff]
          %v3604 = vld [vmem:[#allocation6 + $0x78] sm:$0xff]
          %s3606 = sor.u32 256, 16
          %3607 = vbcast.lane.b32.xlu0 %v3352, %s3606
          %v3608 = vpop.permute.xlu0 %3607
          %s3610 = sor.u32 256, 24
          %3611 = vbcast.lane.b32.xlu0 %v3352, %s3610
          %v3612 = vpop.permute.xlu0 %3611
          %s3614 = sor.u32 256, 16
          %3615 = vbcast.lane.b32.xlu0 %v3363, %s3614
          %v3616 = vpop.permute.xlu0 %3615
          %s3618 = sor.u32 256, 24
          %3619 = vbcast.lane.b32.xlu0 %v3363, %s3618
          %v3620 = vpop.permute.xlu0 %3619
          %s3622 = sor.u32 256, 16
          %3623 = vbcast.lane.b32.xlu0 %v3374, %s3622
          %v3624 = vpop.permute.xlu0 %3623
          %s3626 = sor.u32 256, 24
          %3627 = vbcast.lane.b32.xlu0 %v3374, %s3626
          %v3628 = vpop.permute.xlu0 %3627
          %s3630 = sor.u32 256, 16
          %3631 = vbcast.lane.b32.xlu0 %v3385, %s3630
          %v3632 = vpop.permute.xlu0 %3631
          %s3634 = sor.u32 256, 24
          %3635 = vbcast.lane.b32.xlu0 %v3385, %s3634
          %v3636 = vpop.permute.xlu0 %3635
          %s3638 = sor.u32 256, 16
          %3639 = vbcast.lane.b32.xlu0 %v3396, %s3638
          %v3640 = vpop.permute.xlu0 %3639
          %s3642 = sor.u32 256, 24
          %3643 = vbcast.lane.b32.xlu0 %v3396, %s3642
          %v3644 = vpop.permute.xlu0 %3643
          %s3646 = sor.u32 256, 16
          %3647 = vbcast.lane.b32.xlu0 %v3407, %s3646
          %v3648 = vpop.permute.xlu0 %3647
          %s3650 = sor.u32 256, 24
          %3651 = vbcast.lane.b32.xlu0 %v3407, %s3650
          %v3652 = vpop.permute.xlu0 %3651
          %s3654 = sor.u32 256, 16
          %3655 = vbcast.lane.b32.xlu0 %v3418, %s3654
          %v3656 = vpop.permute.xlu0 %3655
          %s3658 = sor.u32 256, 24
          %3659 = vbcast.lane.b32.xlu0 %v3418, %s3658
          %v3660 = vpop.permute.xlu0 %3659
          %s3662 = sor.u32 256, 16
          %3663 = vbcast.lane.b32.xlu0 %v3429, %s3662
          %v3664 = vpop.permute.xlu0 %3663
          %s3666 = sor.u32 256, 24
          %3667 = vbcast.lane.b32.xlu0 %v3429, %s3666
          %v3668 = vpop.permute.xlu0 %3667
          %v3669 = vmul.f32 %v3589, %v3608
          %v3670 = vmul.f32 %v3590, %v3612
          %v3671 = vmul.f32 %v3591, %v3616
          %v3672 = vmul.f32 %v3592, %v3620
          %v3673 = vmul.f32 %v3593, %v3624
          %v3674 = vmul.f32 %v3594, %v3628
          %v3675 = vmul.f32 %v3595, %v3632
          %v3676 = vmul.f32 %v3596, %v3636
          %v3677 = vmul.f32 %v3597, %v3640
          %v3678 = vmul.f32 %v3598, %v3644
          %v3679 = vmul.f32 %v3599, %v3648
          %v3680 = vmul.f32 %v3600, %v3652
          %v3681 = vmul.f32 %v3601, %v3656
          %v3682 = vmul.f32 %v3602, %v3660
          %v3683 = vmul.f32 %v3603, %v3664
          %v3684 = vmul.f32 %v3604, %v3668
          %v3685 = vadd.f32 %v3669, %v3670
          %v3686 = vrot.slane %v3685, 4
          %v3687 = vadd.f32 %v3685, %v3686
          %v3688 = vrot.slane %v3687, 2
          %v3689 = vadd.f32 %v3687, %v3688
          %v3690 = vrot.slane %v3689, 1
          %v3691 = vadd.f32 %v3689, %v3690
          %v3692 = vadd.f32 %v3671, %v3672
          %v3693 = vrot.slane %v3692, 4
          %v3694 = vadd.f32 %v3692, %v3693
          %v3695 = vrot.slane %v3694, 2
          %v3696 = vadd.f32 %v3694, %v3695
          %v3697 = vrot.slane %v3696, 1
          %v3698 = vadd.f32 %v3696, %v3697
          %v3699 = vadd.f32 %v3673, %v3674
          %v3700 = vrot.slane %v3699, 4
          %v3701 = vadd.f32 %v3699, %v3700
          %v3702 = vrot.slane %v3701, 2
          %v3703 = vadd.f32 %v3701, %v3702
          %v3704 = vrot.slane %v3703, 1
          %v3705 = vadd.f32 %v3703, %v3704
          %v3706 = vadd.f32 %v3675, %v3676
          %v3707 = vrot.slane %v3706, 4
          %v3708 = vadd.f32 %v3706, %v3707
          %v3709 = vrot.slane %v3708, 2
          %v3710 = vadd.f32 %v3708, %v3709
          %v3711 = vrot.slane %v3710, 1
          %v3712 = vadd.f32 %v3710, %v3711
          %v3713 = vadd.f32 %v3677, %v3678
          %v3714 = vrot.slane %v3713, 4
          %v3715 = vadd.f32 %v3713, %v3714
          %v3716 = vrot.slane %v3715, 2
          %v3717 = vadd.f32 %v3715, %v3716
          %v3718 = vrot.slane %v3717, 1
          %v3719 = vadd.f32 %v3717, %v3718
          %v3720 = vadd.f32 %v3679, %v3680
          %v3721 = vrot.slane %v3720, 4
          %v3722 = vadd.f32 %v3720, %v3721
          %v3723 = vrot.slane %v3722, 2
          %v3724 = vadd.f32 %v3722, %v3723
          %v3725 = vrot.slane %v3724, 1
          %v3726 = vadd.f32 %v3724, %v3725
          %v3727 = vadd.f32 %v3681, %v3682
          %v3728 = vrot.slane %v3727, 4
          %v3729 = vadd.f32 %v3727, %v3728
          %v3730 = vrot.slane %v3729, 2
          %v3731 = vadd.f32 %v3729, %v3730
          %v3732 = vrot.slane %v3731, 1
          %v3733 = vadd.f32 %v3731, %v3732
          %v3734 = vadd.f32 %v3683, %v3684
          %v3735 = vrot.slane %v3734, 4
          %v3736 = vadd.f32 %v3734, %v3735
          %v3737 = vrot.slane %v3736, 2
          %v3738 = vadd.f32 %v3736, %v3737
          %v3739 = vrot.slane %v3738, 1
          %v3740 = vadd.f32 %v3738, %v3739
          %v3742 = vrot.slane %v2476, 1
          %v3743 = vrot.slane %v2476, 2
          %v3744 = vrot.slane %v2476, 3
          %v3745 = vrot.slane %v2476, 4
          %v3746 = vrot.slane %v2476, 5
          %v3747 = vrot.slane %v2476, 6
          %v3748 = vrot.slane %v2476, 7
          %v3757 = vadd.f32 %v3691, %v2476
          %v3758 = vadd.f32 %v3698, %v3742
          %v3759 = vadd.f32 %v3705, %v3743
          %v3760 = vadd.f32 %v3712, %v3744
          %v3761 = vadd.f32 %v3719, %v3745
          %v3762 = vadd.f32 %v3726, %v3746
          %v3763 = vadd.f32 %v3733, %v3747
          %v3764 = vadd.f32 %v3740, %v3748
          %v3765 = vld [vmem:[#allocation4] sm:$0xff]
          %v3774 = vrot.slane %v3758, 7
          %v3775 = vsel %vm3122, %v3774, %v3757
          %v3776 = vrot.slane %v3759, 6
          %v3777 = vsel %vm3125, %v3776, %v3775
          %v3778 = vrot.slane %v3760, 5
          %v3779 = vsel %vm3128, %v3778, %v3777
          %v3780 = vrot.slane %v3761, 4
          %v3781 = vsel %vm3131, %v3780, %v3779
          %v3782 = vrot.slane %v3762, 3
          %v3783 = vsel %vm3134, %v3782, %v3781
          %v3784 = vrot.slane %v3763, 2
          %v3785 = vsel %vm3137, %v3784, %v3783
          %v3786 = vrot.slane %v3764, 1
          %v3787 = vsel %vm3140, %v3786, %v3785
          %v3789 = vadd.f32 %v3765, %v3787
          %3790 = vst [vmem:[#allocation4] sm:$0xff] %v3789
          %v3791 = vld [vmem:[#allocation4] sm:$0xff]
          %v3792 = vld [vmem:[#allocation4 + $0x8] sm:$0xff]
          %v3793 = vld [vmem:[#allocation3] sm:$0xff]
          %v3794 = vld [vmem:[#allocation3 + $0x8] sm:$0xff]
          %v3795 = vmul.f32 %v3791, %v3793
          %v3796 = vmul.f32 %v3792, %v3794
          %v3797 = vpack.c.bf16 %v3796, %v3795
          %v3798 = vld [vmem:[%s2] sm:$0xf]
          %v3799 = vld [vmem:[%s2 + $0x4] sm:$0xf]
          %v3800 = vld [vmem:[%s2 + $0x8] sm:$0xf]
          %v3801 = vld [vmem:[%s2 + $0xc] sm:$0xf]
          %v3802 = vld [vmem:[%s2 + $0x10] sm:$0xf]
          %v3803 = vld [vmem:[%s2 + $0x14] sm:$0xf]
          %v3804 = vld [vmem:[%s2 + $0x18] sm:$0xf]
          %v3805 = vld [vmem:[%s2 + $0x1c] sm:$0xf]
          %v3806 = vld [vmem:[%s2 + $0x20] sm:$0xf]
          %v3807 = vld [vmem:[%s2 + $0x24] sm:$0xf]
          %v3808 = vld [vmem:[%s2 + $0x28] sm:$0xf]
          %v3809 = vld [vmem:[%s2 + $0x2c] sm:$0xf]
          %v3810 = vld [vmem:[%s2 + $0x30] sm:$0xf]
          %v3811 = vld [vmem:[%s2 + $0x34] sm:$0xf]
          %v3812 = vld [vmem:[%s2 + $0x38] sm:$0xf]
          %v3813 = vld [vmem:[%s2 + $0x3c] sm:$0xf]
          %v3830 = vunpack.c.l.b16 %v3798
          %v3831 = vunpack.c.l.b16 %v3799
          %v3832 = vunpack.c.l.b16 %v3800
          %v3833 = vunpack.c.l.b16 %v3801
          %v3834 = vunpack.c.l.b16 %v3802
          %v3835 = vunpack.c.l.b16 %v3803
          %v3836 = vunpack.c.l.b16 %v3804
          %v3837 = vunpack.c.l.b16 %v3805
          %v3838 = vunpack.c.l.b16 %v3806
          %v3839 = vunpack.c.l.b16 %v3807
          %v3840 = vunpack.c.l.b16 %v3808
          %v3841 = vunpack.c.l.b16 %v3809
          %v3842 = vunpack.c.l.b16 %v3810
          %v3843 = vunpack.c.l.b16 %v3811
          %v3844 = vunpack.c.l.b16 %v3812
          %v3845 = vunpack.c.l.b16 %v3813
          %v3846 = vpack.c.b16 %v3831, %v3830
          %v3847 = vpack.c.b16 %v3833, %v3832
          %v3848 = vpack.c.b16 %v3835, %v3834
          %v3849 = vpack.c.b16 %v3837, %v3836
          %v3850 = vpack.c.b16 %v3839, %v3838
          %v3851 = vpack.c.b16 %v3841, %v3840
          %v3852 = vpack.c.b16 %v3843, %v3842
          %v3853 = vpack.c.b16 %v3845, %v3844
          %3862 = vmatprep.subr.bf16.mxu0 0
          %3863 = vmatpush1.bf16.msra.mxu0 %v3846
          %3864 = vmatprep.subr.bf16.mxu0 0
          %3865 = vmatpush1.bf16.msra.mxu0 %v3847
          %3866 = vmatprep.subr.bf16.mxu0 0
          %3867 = vmatpush1.bf16.msra.mxu0 %v3848
          %3868 = vmatprep.subr.bf16.mxu0 0
          %3869 = vmatpush1.bf16.msra.mxu0 %v3849
          %3870 = vmatprep.subr.bf16.mxu0 0
          %3871 = vmatpush1.bf16.msra.mxu0 %v3850
          %3872 = vmatprep.subr.bf16.mxu0 0
          %3873 = vmatpush1.bf16.msra.mxu0 %v3851
          %3874 = vmatprep.subr.bf16.mxu0 0
          %3875 = vmatpush1.bf16.msra.mxu0 %v3852
          %3876 = vmatprep.subr.bf16.mxu0 0
          %3877 = vmatpush1.bf16.msra.mxu0 %v3853
          %3878 = vmatprep.subr.bf16.mxu0 0
          %3879 = vmatpush1.bf16.msra.mxu0 0
          %3880 = vmatprep.subr.bf16.mxu0 0
          %3881 = vmatpush1.bf16.msra.mxu0 0
          %3882 = vmatprep.subr.bf16.mxu0 0
          %3883 = vmatpush1.bf16.msra.mxu0 0
          %3884 = vmatprep.subr.bf16.mxu0 0
          %3885 = vmatpush1.bf16.msra.mxu0 0
          %3886 = vmatprep.subr.bf16.mxu0 0
          %3887 = vmatpush1.bf16.msra.mxu0 0
          %3888 = vmatprep.subr.bf16.mxu0 0
          %3889 = vmatpush1.bf16.msra.mxu0 0
          %3890 = vmatprep.subr.bf16.mxu0 0
          %3891 = vmatpush1.bf16.msra.mxu0 0
          %3892 = vmatprep.subr.bf16.mxu0 0
          %3893 = vmatpush1.bf16.msra.mxu0 0
          %3894 = vmatprep.mubr.bf16.mxu0 0
          %3895 = vmatmul.mubr.bf16.gmra.mrb[0].mxu0 %v3797
          %v3896 = vpop.f32.mrb[0].mxu0
          %v3897 = vadd.f32 0.0, %v3896
          %v3898 = vpop.f32.mrb[0].mxu0
          %v3899 = vpop.f32.mrb[0].mxu0
          %v3900 = vadd.f32 0.0, %v3899
          %v3901 = vpop.f32.mrb[0].mxu0
          %3902 = vdwg.mxu0
          %vm3903 = vcmask 523264
          %3904 = vst.msk [vmem:[%s453] sm:$0xff] %vm3903, %v3897
          %3905 = vst.msk [vmem:[%s453 + $0x8] sm:$0xff] %vm3903, %v3900
        $region68: #{tpu_custom_call.1} parent=59 // pred_fallthru
          _
        %s3906 = sand.u32 %s294, 1
        %s3907 = scalar_lea.sflag [#allocation8], %s3906
        %s3908 = sand.u32 %s294, 1
        %s3909 = smul.addr %s3908, 16
        %s3910 = scalar_lea.vmem [#allocation7], %s3909
        // Predicated region
        $region69: #{tpu_custom_call.1} parent=59 // pred_check
          %p3911 = pneg %p304
        $region70: #{tpu_custom_call.1} parent=59 // pred_check_branch
          %3913 = sbr.rel (%p3911) target = $region72
        $region71: #{tpu_custom_call.1} parent=59 // pred_region
          %s3915 = ssub.s32 256, 256
          %3916 = vsyncadd %s3907, %s3915
          %s3917 = smul.addr %s28, 2
          %s3918 = smul.addr %s3917, 128
          %s3919 = scalar_lea.hbm %s10, %s3918
          %s3920 = sshll.u32 %s3910, 4
          %s3921 = int_to_ptr.vmem [resolvable:$true] %s3920
          %3926 = dma.vmem_to_hbm [thread:$0]  %s3921, 256, %s3919, %s3907, 128, 128, 8
        $region72: #{tpu_custom_call.1} parent=59 // pred_fallthru
          _
      $region60: #{tpu_custom_call.1} parent=5 // pred_fallthru
        _
      %p3927 = scmp.le.s32.totalorder 2, %s19
      // Predicated region
      $region73: #{tpu_custom_call.1} parent=5 // pred_check
        %p3928 = pneg %p3927
      $region74: #{tpu_custom_call.1} parent=5 // pred_check_branch
        %3930 = sbr.rel (%p3928) target = $region76
      $region75: #{tpu_custom_call.1} parent=5 // pred_region
        %s3931 = ssub.s32 %s19, 2
        // Predicated region
        $region77: #{tpu_custom_call.1} parent=75 // pred_check
          %p3932 = pneg %p310
        $region78: #{tpu_custom_call.1} parent=75 // pred_check_branch
          %3934 = sbr.rel (%p3932) target = $region80
        $region79: #{tpu_custom_call.1} parent=75 // pred_region
          %s3935 = sand.u32 %s295, 1
          %s3936 = scalar_lea.sflag [#allocation8], %s3935
          %s3937 = sand.u32 %s295, 1
          %s3938 = smul.addr %s3937, 16
          %s3939 = scalar_lea.vmem [#allocation7], %s3938
          %3940 = dma.done %s3936, 256
        $region80: #{tpu_custom_call.1} parent=75 // pred_fallthru
          _
      $region76: #{tpu_custom_call.1} parent=5 // pred_fallthru
        _
    $region6: #{tpu_custom_call.1} parent=1 // loop_footer
      %s23 = sadd.s32 1, %s19
    $region7: #{tpu_custom_call.1} parent=1 // loop_footer_branch
      %18 = sbr.rel target = $region3
    $region8: #{tpu_custom_call.1} parent=1 // loop_exit
      _
    %3941 = vsyncpa [#allocation8], 1
    %s3942 = scalar_lea.sflag [#allocation8], 1
    %3943 = vsyncpa %s3942, 1

</llo_original>
